<compile_context>
chip_gen: v7x
topology: tpu7x:2x2x1
jax: 0.10.0
libtpu: 0.0.40
codegen_flags: <defaults>
</compile_context>

<pallas_src>
import jax
import jax.numpy as jnp
from jax import lax
from jax.experimental import pallas as pl
from jax.experimental.pallas import tpu as pltpu

# ---------------- configuration (small, consistent with the module) ----------------
B = 2            # batch
N = 64           # sequence length (number of points)
C = 32           # hidden_dim
H = 4            # num_heads
DH = C // H      # dim_head
G = 16           # slice_num
HG = H * G
MLP_HID = C * 4  # mlp_ratio = 4
EPS_LN = 1e-5
EPS_SLICE = 1e-5

_SQRT_2_OVER_PI = 0.7978845608028654


# ---------------------------------- kernel helpers ---------------------------------
def _gelu_tanh(z):
    # tanh-approximation GELU (EUP tanh); |err| vs exact erf-GELU ~1e-3, well inside tolerance.
    return 0.5 * z * (1.0 + jnp.tanh(_SQRT_2_OVER_PI * (z + 0.044715 * z * z * z)))


def _layer_norm(v, g, b):
    mu = jnp.mean(v, axis=-1, keepdims=True)
    var = jnp.mean((v - mu) ** 2, axis=-1, keepdims=True)
    return (v - mu) * lax.rsqrt(var + EPS_LN) * g + b


# ---------------------------------- kernel ----------------------------------------
def transolver_block_kernel(
    x_ref,                         # (B*N, C)
    g1_ref, bln1_ref,              # LN1 gamma/beta (1, C)
    wfx_ref, bfx_ref,              # in_project_fx (C, C), (1, C)
    wx_ref, bx_ref,                # in_project_x  (C, C), (1, C)
    wsl_ref, bsl_ref, invt_ref,    # block-diag slice proj (C, H*G), bias (1, H*G), 1/temp (1, H*G)
    wq_ref, wk_ref, wv_ref,        # block-diag (C, C) each, no bias
    wo_ref, bo_ref,                # to_out (C, C), (1, C)
    g2_ref, bln2_ref,              # LN2 gamma/beta (1, C)
    w1_ref, bm1_ref,               # MLP linear_pre (C, MLP_HID), (1, MLP_HID)
    w2_ref, bm2_ref,               # MLP linear_post (MLP_HID, C), (1, C)
    onesblk_ref,                   # (H*G, H*G) block-diag ones (group-sum matmul)
    negmask_ref,                   # (H*G, H*G) additive mask: 0 on head blocks, -1e30 off
    headmask_ref,                  # (H*G, C)   block-diag 0/1 mask (G x DH blocks)
    out_ref,                       # (B*N, C)
):
    x = x_ref[...]                                               # (B*N, C)

    # ---- LN1 ----
    xn = _layer_norm(x, g1_ref[...], bln1_ref[...])

    # ---- Physics_Attention_1D: projections for all heads in one matmul each ----
    fx_mid = jnp.dot(xn, wfx_ref[...], preferred_element_type=jnp.float32) + bfx_ref[...]
    x_mid = jnp.dot(xn, wx_ref[...], preferred_element_type=jnp.float32) + bx_ref[...]

    # slice-weight logits for all heads: (B*N, H*G), block-diagonal Wsl + tiled bias,
    # multiplied by the precomputed 1/temperature (per-head, tiled over G columns).
    logits = (jnp.dot(x_mid, wsl_ref[...], preferred_element_type=jnp.float32)
              + bsl_ref[...]) * invt_ref[...]

    # grouped softmax over each head's G columns:
    # subtracting the full-row max is identical per group; group sums via block-ones matmul.
    m = jnp.max(logits, axis=-1, keepdims=True)
    e = jnp.exp(logits - m)
    denom = jnp.dot(e, onesblk_ref[...], preferred_element_type=jnp.float32)
    sw = e * pl.reciprocal(denom, approx=True)                   # (B*N, H*G)

    scale = DH ** -0.5
    head_mask = headmask_ref[...]
    neg_mask = negmask_ref[...]
    wq = wq_ref[...]
    wk = wk_ref[...]
    wv = wv_ref[...]

    cn_rows = (((0,), (0,)), ((), ()))   # contract over rows (N)  == lhs.T @ rhs
    cn_cols = (((1,), (1,)), ((), ()))   # contract over cols (C)  == lhs @ rhs.T

    # per-batch slice aggregation (tiny static loop, B=2); all heads stay packed on lanes.
    outs = []
    for b in range(B):
        sw_b = sw[b * N:(b + 1) * N]                             # (N, H*G)
        fx_b = fx_mid[b * N:(b + 1) * N]                         # (N, C)

        # slice_norm per (head, slice): column sums; fold 1/(norm+eps) into sw before the
        # contraction so no (H*G,1)-shaped relayout is needed.
        snorm = jnp.sum(sw_b, axis=0, keepdims=True)             # (1, H*G)
        sw_n = sw_b * pl.reciprocal(snorm + EPS_SLICE, approx=True)

        # slice tokens for all heads: (H*G, C); only the diagonal (G x DH) blocks are "real",
        # off-diagonal blocks are harmless cross-head terms masked out downstream.
        st = lax.dot_general(sw_n, fx_b, cn_rows, preferred_element_type=jnp.float32)

        q = jnp.dot(st, wq, preferred_element_type=jnp.float32)
        k = jnp.dot(st, wk, preferred_element_type=jnp.float32) * head_mask
        v = jnp.dot(st, wv, preferred_element_type=jnp.float32)

        dots = (lax.dot_general(q, k, cn_cols, preferred_element_type=jnp.float32) * scale
                + neg_mask)                                      # (H*G, H*G)
        mm = jnp.max(dots, axis=-1, keepdims=True)
        ee = jnp.exp(dots - mm)
        attn = ee * pl.reciprocal(jnp.sum(ee, axis=-1, keepdims=True), approx=True)

        o_tok = jnp.dot(attn, v, preferred_element_type=jnp.float32) * head_mask   # (H*G, C)
        outs.append(jnp.dot(sw_b, o_tok, preferred_element_type=jnp.float32))      # (N, C)

    out_x = jnp.concatenate(outs, axis=0)                        # (B*N, C)
    attn_out = jnp.dot(out_x, wo_ref[...], preferred_element_type=jnp.float32) + bo_ref[...]

    fx1 = x + attn_out                                           # residual 1

    # ---- LN2 + MLP (n_layers=0, res=False) ----
    y = _layer_norm(fx1, g2_ref[...], bln2_ref[...])
    h1 = _gelu_tanh(jnp.dot(y, w1_ref[...], preferred_element_type=jnp.float32) + bm1_ref[...])
    mlp_out = jnp.dot(h1, w2_ref[...], preferred_element_type=jnp.float32) + bm2_ref[...]

    out_ref[...] = fx1 + mlp_out                                 # residual 2


# --------------------------------- wrapper -----------------------------------------
def transolver_block(x, params):
    b, n, c = x.shape
    bn = b * n
    x2 = x.reshape(bn, c)

    eye_h = jnp.eye(H, dtype=jnp.float32)
    # block-diagonal / tiled parameter packing so each head lives on its own lane block
    wsl_bd = jnp.kron(eye_h, params["Wsl"])                       # (C, H*G)
    bsl_t = jnp.tile(params["bsl"], (1, H))                       # (1, H*G)
    inv_t = jnp.repeat(1.0 / params["temp"], G, axis=1)           # (1, H*G)
    wq_bd = jnp.kron(eye_h, params["Wq"])                         # (C, C)
    wk_bd = jnp.kron(eye_h, params["Wk"])
    wv_bd = jnp.kron(eye_h, params["Wv"])
    ones_blk = jnp.kron(eye_h, jnp.ones((G, G), jnp.float32))     # (H*G, H*G)
    neg_mask = (1.0 - ones_blk) * (-1e30)                         # additive attention mask
    head_mask = jnp.kron(eye_h, jnp.ones((G, DH), jnp.float32))   # (H*G, C)

    ordered = [
        params["g1"], params["bln1"],
        params["Wfx"], params["bfx"],
        params["Wx"], params["bx"],
        wsl_bd, bsl_t, inv_t,
        wq_bd, wk_bd, wv_bd,
        params["Wo"], params["bo"],
        params["g2"], params["bln2"],
        params["W1"], params["bm1"],
        params["W2"], params["bm2"],
        ones_blk, neg_mask, head_mask,
    ]

    def full2d(shape):
        return pl.BlockSpec(shape, lambda i: (0, 0))

    in_specs = [full2d((bn, c))] + [full2d(p.shape) for p in ordered]

    out = pl.pallas_call(
        transolver_block_kernel,
        grid=(1,),                       # single grid step: whole problem fits VMEM easily
        in_specs=in_specs,
        out_specs=full2d((bn, c)),
        out_shape=jax.ShapeDtypeStruct((bn, c), jnp.float32),
        compiler_params=pltpu.CompilerParams(dimension_semantics=("arbitrary",)),
    )(x2, *ordered)
    return out.reshape(b, n, c)


# ---------------------------- parameter construction -------------------------------
def init_params(key):
    ks = jax.random.split(key, 12)

    def linear(k, fan_in, fan_out, bias=True):
        bound = 1.0 / (fan_in ** 0.5)
        kw, kb = jax.random.split(k)
        w = jax.random.uniform(kw, (fan_in, fan_out), jnp.float32, -bound, bound)
        b = (jax.random.uniform(kb, (1, fan_out), jnp.float32, -bound, bound)
             if bias else None)
        return w, b

    Wfx, bfx = linear(ks[0], C, C)
    Wx, bx = linear(ks[1], C, C)
    Wsl, bsl = linear(ks[2], DH, G)   # TODO(synk): torch uses orthogonal init here; uniform is used for this synthetic kernel
    Wq, _ = linear(ks[3], DH, DH, bias=False)
    Wk, _ = linear(ks[4], DH, DH, bias=False)
    Wv, _ = linear(ks[5], DH, DH, bias=False)
    Wo, bo = linear(ks[6], C, C)
    W1, bm1 = linear(ks[7], C, MLP_HID)
    W2, bm2 = linear(ks[8], MLP_HID, C)

    return dict(
        g1=jnp.ones((1, C), jnp.float32), bln1=jnp.zeros((1, C), jnp.float32),
        Wfx=Wfx, bfx=bfx, Wx=Wx, bx=bx,
        Wsl=Wsl, bsl=bsl,
        temp=0.5 * jnp.ones((1, H), jnp.float32),
        Wq=Wq, Wk=Wk, Wv=Wv,
        Wo=Wo, bo=bo,
        g2=jnp.ones((1, C), jnp.float32), bln2=jnp.zeros((1, C), jnp.float32),
        W1=W1, bm1=bm1, W2=W2, bm2=bm2,
    )


# -------------------------------- pure-JAX reference --------------------------------
def reference(x, p):
    def ln(v, g, b):
        mu = v.mean(-1, keepdims=True)
        var = ((v - mu) ** 2).mean(-1, keepdims=True)
        return (v - mu) / jnp.sqrt(var + EPS_LN) * g + b

    b, n, c = x.shape
    xn = ln(x, p["g1"], p["bln1"])
    fx_mid = (xn @ p["Wfx"] + p["bfx"]).reshape(b, n, H, DH).transpose(0, 2, 1, 3)
    x_mid = (xn @ p["Wx"] + p["bx"]).reshape(b, n, H, DH).transpose(0, 2, 1, 3)

    logits = (x_mid @ p["Wsl"] + p["bsl"]) / p["temp"].reshape(1, H, 1, 1)
    sw = jax.nn.softmax(logits, axis=-1)                      # (B,H,N,G)
    snorm = sw.sum(2)                                         # (B,H,G)
    st = jnp.einsum("bhnc,bhng->bhgc", fx_mid, sw)
    st = st / (snorm + EPS_SLICE)[..., None]

    q = st @ p["Wq"]; k = st @ p["Wk"]; v = st @ p["Wv"]
    dots = jnp.einsum("bhgc,bhkc->bhgk", q, k) * (DH ** -0.5)
    attn = jax.nn.softmax(dots, axis=-1)
    ot = attn @ v
    out_x = jnp.einsum("bhgc,bhng->bhnc", ot, sw)
    out_x = out_x.transpose(0, 2, 1, 3).reshape(b, n, c)

    fx1 = x + out_x @ p["Wo"] + p["bo"]
    y = ln(fx1, p["g2"], p["bln2"])
    h1 = jax.nn.gelu(y @ p["W1"] + p["bm1"], approximate=False)
    return fx1 + h1 @ p["W2"] + p["bm2"]


# ------------------------------------- main -----------------------------------------
if __name__ == "__main__":
    key = jax.random.PRNGKey(0)
    k_x, k_p = jax.random.split(key)
    x = jax.random.normal(k_x, (B, N, C), jnp.float32)
    params = init_params(k_p)

    out = jax.block_until_ready(transolver_block(x, params))

    ref = reference(x, params)
    max_diff = float(jnp.max(jnp.abs(out - ref)))
    assert out.shape == (B, N, C)
    assert max_diff < 5e-2, f"mismatch vs reference: {max_diff}"

    print("KERNEL_OK")
</pallas_src>

<mosaic_0001>
module attributes {stable_mosaic.version = 11 : i64} {
  func.func @transolver_block_kernel(%arg0: i32, %arg1: memref<128x32xf32, #tpu.memory_space<vmem>>, %arg2: memref<1x32xf32, #tpu.memory_space<vmem>>, %arg3: memref<1x32xf32, #tpu.memory_space<vmem>>, %arg4: memref<32x32xf32, #tpu.memory_space<vmem>>, %arg5: memref<1x32xf32, #tpu.memory_space<vmem>>, %arg6: memref<32x32xf32, #tpu.memory_space<vmem>>, %arg7: memref<1x32xf32, #tpu.memory_space<vmem>>, %arg8: memref<32x64xf32, #tpu.memory_space<vmem>>, %arg9: memref<1x64xf32, #tpu.memory_space<vmem>>, %arg10: memref<1x64xf32, #tpu.memory_space<vmem>>, %arg11: memref<32x32xf32, #tpu.memory_space<vmem>>, %arg12: memref<32x32xf32, #tpu.memory_space<vmem>>, %arg13: memref<32x32xf32, #tpu.memory_space<vmem>>, %arg14: memref<32x32xf32, #tpu.memory_space<vmem>>, %arg15: memref<1x32xf32, #tpu.memory_space<vmem>>, %arg16: memref<1x32xf32, #tpu.memory_space<vmem>>, %arg17: memref<1x32xf32, #tpu.memory_space<vmem>>, %arg18: memref<32x128xf32, #tpu.memory_space<vmem>>, %arg19: memref<1x128xf32, #tpu.memory_space<vmem>>, %arg20: memref<128x32xf32, #tpu.memory_space<vmem>>, %arg21: memref<1x32xf32, #tpu.memory_space<vmem>>, %arg22: memref<64x64xf32, #tpu.memory_space<vmem>>, %arg23: memref<64x64xf32, #tpu.memory_space<vmem>>, %arg24: memref<64x32xf32, #tpu.memory_space<vmem>>, %arg25: memref<128x32xf32, #tpu.memory_space<vmem>>) attributes {dimension_semantics = [#tpu.dimension_semantics<arbitrary>], iteration_bounds = array<i64: 1>, scalar_prefetch = 0 : i64, scratch_operands = 0 : i64, tpu.core_type = #tpu.core_type<tc>, window_params = [{pipeline_mode = #tpu.pipeline_mode<synchronous>, transform_indices = @transform_0, window_bounds = array<i64: 128, 32>}, {pipeline_mode = #tpu.pipeline_mode<synchronous>, transform_indices = @transform_1, window_bounds = array<i64: 1, 32>}, {pipeline_mode = #tpu.pipeline_mode<synchronous>, transform_indices = @transform_2, window_bounds = array<i64: 1, 32>}, {pipeline_mode = #tpu.pipeline_mode<synchronous>, transform_indices = @transform_3, window_bounds = array<i64: 32, 32>}, {pipeline_mode = #tpu.pipeline_mode<synchronous>, transform_indices = @transform_4, window_bounds = array<i64: 1, 32>}, {pipeline_mode = #tpu.pipeline_mode<synchronous>, transform_indices = @transform_5, window_bounds = array<i64: 32, 32>}, {pipeline_mode = #tpu.pipeline_mode<synchronous>, transform_indices = @transform_6, window_bounds = array<i64: 1, 32>}, {pipeline_mode = #tpu.pipeline_mode<synchronous>, transform_indices = @transform_7, window_bounds = array<i64: 32, 64>}, {pipeline_mode = #tpu.pipeline_mode<synchronous>, transform_indices = @transform_8, window_bounds = array<i64: 1, 64>}, {pipeline_mode = #tpu.pipeline_mode<synchronous>, transform_indices = @transform_9, window_bounds = array<i64: 1, 64>}, {pipeline_mode = #tpu.pipeline_mode<synchronous>, transform_indices = @transform_10, window_bounds = array<i64: 32, 32>}, {pipeline_mode = #tpu.pipeline_mode<synchronous>, transform_indices = @transform_11, window_bounds = array<i64: 32, 32>}, {pipeline_mode = #tpu.pipeline_mode<synchronous>, transform_indices = @transform_12, window_bounds = array<i64: 32, 32>}, {pipeline_mode = #tpu.pipeline_mode<synchronous>, transform_indices = @transform_13, window_bounds = array<i64: 32, 32>}, {pipeline_mode = #tpu.pipeline_mode<synchronous>, transform_indices = @transform_14, window_bounds = array<i64: 1, 32>}, {pipeline_mode = #tpu.pipeline_mode<synchronous>, transform_indices = @transform_15, window_bounds = array<i64: 1, 32>}, {pipeline_mode = #tpu.pipeline_mode<synchronous>, transform_indices = @transform_16, window_bounds = array<i64: 1, 32>}, {pipeline_mode = #tpu.pipeline_mode<synchronous>, transform_indices = @transform_17, window_bounds = array<i64: 32, 128>}, {pipeline_mode = #tpu.pipeline_mode<synchronous>, transform_indices = @transform_18, window_bounds = array<i64: 1, 128>}, {pipeline_mode = #tpu.pipeline_mode<synchronous>, transform_indices = @transform_19, window_bounds = array<i64: 128, 32>}, {pipeline_mode = #tpu.pipeline_mode<synchronous>, transform_indices = @transform_20, window_bounds = array<i64: 1, 32>}, {pipeline_mode = #tpu.pipeline_mode<synchronous>, transform_indices = @transform_21, window_bounds = array<i64: 64, 64>}, {pipeline_mode = #tpu.pipeline_mode<synchronous>, transform_indices = @transform_22, window_bounds = array<i64: 64, 64>}, {pipeline_mode = #tpu.pipeline_mode<synchronous>, transform_indices = @transform_23, window_bounds = array<i64: 64, 32>}, {pipeline_mode = #tpu.pipeline_mode<synchronous>, transform_indices = @transform_24, window_bounds = array<i64: 128, 32>}]} {
    %c0 = arith.constant 0 : index
    %c0_0 = arith.constant 0 : index
    %0 = vector.load %arg1[%c0, %c0_0] : memref<128x32xf32, #tpu.memory_space<vmem>>, vector<128x32xf32>
    %c0_1 = arith.constant 0 : index
    %c0_2 = arith.constant 0 : index
    %1 = vector.load %arg2[%c0_1, %c0_2] : memref<1x32xf32, #tpu.memory_space<vmem>>, vector<1x32xf32>
    %c0_3 = arith.constant 0 : index
    %c0_4 = arith.constant 0 : index
    %2 = vector.load %arg3[%c0_3, %c0_4] : memref<1x32xf32, #tpu.memory_space<vmem>>, vector<1x32xf32>
    %cst = arith.constant dense<0.000000e+00> : vector<128xf32>
    %3 = vector.multi_reduction <add>, %0, %cst [1] : vector<128x32xf32> to vector<128xf32>
    %4 = vector.shape_cast %3 : vector<128xf32> to vector<128x1xf32>
    %cst_5 = arith.constant 3.200000e+01 : f32
    %5 = vector.broadcast %cst_5 : f32 to vector<128x1xf32>
    %6 = arith.divf %4, %5 : vector<128x1xf32>
    %7 = vector.broadcast %6 : vector<128x1xf32> to vector<128x32xf32>
    %8 = arith.subf %0, %7 : vector<128x32xf32>
    %9 = arith.mulf %8, %8 : vector<128x32xf32>
    %cst_6 = arith.constant dense<0.000000e+00> : vector<128xf32>
    %10 = vector.multi_reduction <add>, %9, %cst_6 [1] : vector<128x32xf32> to vector<128xf32>
    %11 = vector.shape_cast %10 : vector<128xf32> to vector<128x1xf32>
    %cst_7 = arith.constant 3.200000e+01 : f32
    %12 = vector.broadcast %cst_7 : f32 to vector<128x1xf32>
    %13 = arith.divf %11, %12 : vector<128x1xf32>
    %14 = vector.broadcast %6 : vector<128x1xf32> to vector<128x32xf32>
    %15 = arith.subf %0, %14 : vector<128x32xf32>
    %cst_8 = arith.constant 9.99999974E-6 : f32
    %16 = vector.broadcast %cst_8 : f32 to vector<128x1xf32>
    %17 = arith.addf %13, %16 : vector<128x1xf32>
    %18 = math.rsqrt %17 : vector<128x1xf32>
    %19 = vector.broadcast %18 : vector<128x1xf32> to vector<128x32xf32>
    %20 = arith.mulf %15, %19 : vector<128x32xf32>
    %21 = vector.broadcast %1 : vector<1x32xf32> to vector<128x32xf32>
    %22 = arith.mulf %20, %21 : vector<128x32xf32>
    %23 = vector.broadcast %2 : vector<1x32xf32> to vector<128x32xf32>
    %24 = arith.addf %22, %23 : vector<128x32xf32>
    %c0_9 = arith.constant 0 : index
    %c0_10 = arith.constant 0 : index
    %25 = vector.load %arg4[%c0_9, %c0_10] : memref<32x32xf32, #tpu.memory_space<vmem>>, vector<32x32xf32>
    %cst_11 = arith.constant dense<0.000000e+00> : vector<128x32xf32>
    %26 = tpu.matmul %24, %25, %cst_11 {dimension_numbers = #tpu.dot_dimension_numbers<[1], [0], [0], [1], [0, 0, 1, 1], [], []>} : vector<128x32xf32>, vector<32x32xf32>, vector<128x32xf32> -> vector<128x32xf32>
    %c0_12 = arith.constant 0 : index
    %c0_13 = arith.constant 0 : index
    %27 = vector.load %arg5[%c0_12, %c0_13] : memref<1x32xf32, #tpu.memory_space<vmem>>, vector<1x32xf32>
    %28 = vector.broadcast %27 : vector<1x32xf32> to vector<128x32xf32>
    %29 = arith.addf %26, %28 : vector<128x32xf32>
    %c0_14 = arith.constant 0 : index
    %c0_15 = arith.constant 0 : index
    %30 = vector.load %arg6[%c0_14, %c0_15] : memref<32x32xf32, #tpu.memory_space<vmem>>, vector<32x32xf32>
    %cst_16 = arith.constant dense<0.000000e+00> : vector<128x32xf32>
    %31 = tpu.matmul %24, %30, %cst_16 {dimension_numbers = #tpu.dot_dimension_numbers<[1], [0], [0], [1], [0, 0, 1, 1], [], []>} : vector<128x32xf32>, vector<32x32xf32>, vector<128x32xf32> -> vector<128x32xf32>
    %c0_17 = arith.constant 0 : index
    %c0_18 = arith.constant 0 : index
    %32 = vector.load %arg7[%c0_17, %c0_18] : memref<1x32xf32, #tpu.memory_space<vmem>>, vector<1x32xf32>
    %33 = vector.broadcast %32 : vector<1x32xf32> to vector<128x32xf32>
    %34 = arith.addf %31, %33 : vector<128x32xf32>
    %c0_19 = arith.constant 0 : index
    %c0_20 = arith.constant 0 : index
    %35 = vector.load %arg8[%c0_19, %c0_20] : memref<32x64xf32, #tpu.memory_space<vmem>>, vector<32x64xf32>
    %cst_21 = arith.constant dense<0.000000e+00> : vector<128x64xf32>
    %36 = tpu.matmul %34, %35, %cst_21 {dimension_numbers = #tpu.dot_dimension_numbers<[1], [0], [0], [1], [0, 0, 1, 1], [], []>} : vector<128x32xf32>, vector<32x64xf32>, vector<128x64xf32> -> vector<128x64xf32>
    %c0_22 = arith.constant 0 : index
    %c0_23 = arith.constant 0 : index
    %37 = vector.load %arg9[%c0_22, %c0_23] : memref<1x64xf32, #tpu.memory_space<vmem>>, vector<1x64xf32>
    %38 = vector.broadcast %37 : vector<1x64xf32> to vector<128x64xf32>
    %39 = arith.addf %36, %38 : vector<128x64xf32>
    %c0_24 = arith.constant 0 : index
    %c0_25 = arith.constant 0 : index
    %40 = vector.load %arg10[%c0_24, %c0_25] : memref<1x64xf32, #tpu.memory_space<vmem>>, vector<1x64xf32>
    %41 = vector.broadcast %40 : vector<1x64xf32> to vector<128x64xf32>
    %42 = arith.mulf %39, %41 : vector<128x64xf32>
    %cst_26 = arith.constant dense<0xFF800000> : vector<128xf32>
    %43 = vector.multi_reduction <maximumf>, %42, %cst_26 [1] : vector<128x64xf32> to vector<128xf32>
    %44 = vector.shape_cast %43 : vector<128xf32> to vector<128x1xf32>
    %45 = vector.broadcast %44 : vector<128x1xf32> to vector<128x64xf32>
    %46 = arith.subf %42, %45 : vector<128x64xf32>
    %47 = math.exp %46 : vector<128x64xf32>
    %c0_27 = arith.constant 0 : index
    %c0_28 = arith.constant 0 : index
    %48 = vector.load %arg22[%c0_27, %c0_28] : memref<64x64xf32, #tpu.memory_space<vmem>>, vector<64x64xf32>
    %cst_29 = arith.constant dense<0.000000e+00> : vector<128x64xf32>
    %49 = tpu.matmul %47, %48, %cst_29 {dimension_numbers = #tpu.dot_dimension_numbers<[1], [0], [0], [1], [0, 0, 1, 1], [], []>} : vector<128x64xf32>, vector<64x64xf32>, vector<128x64xf32> -> vector<128x64xf32>
    %50 = tpu.reciprocal %49 {approx = true} : vector<128x64xf32> -> vector<128x64xf32>
    %51 = arith.mulf %47, %50 : vector<128x64xf32>
    %c0_30 = arith.constant 0 : index
    %c0_31 = arith.constant 0 : index
    %52 = vector.load %arg24[%c0_30, %c0_31] : memref<64x32xf32, #tpu.memory_space<vmem>>, vector<64x32xf32>
    %c0_32 = arith.constant 0 : index
    %c0_33 = arith.constant 0 : index
    %53 = vector.load %arg23[%c0_32, %c0_33] : memref<64x64xf32, #tpu.memory_space<vmem>>, vector<64x64xf32>
    %c0_34 = arith.constant 0 : index
    %c0_35 = arith.constant 0 : index
    %54 = vector.load %arg11[%c0_34, %c0_35] : memref<32x32xf32, #tpu.memory_space<vmem>>, vector<32x32xf32>
    %c0_36 = arith.constant 0 : index
    %c0_37 = arith.constant 0 : index
    %55 = vector.load %arg12[%c0_36, %c0_37] : memref<32x32xf32, #tpu.memory_space<vmem>>, vector<32x32xf32>
    %c0_38 = arith.constant 0 : index
    %c0_39 = arith.constant 0 : index
    %56 = vector.load %arg13[%c0_38, %c0_39] : memref<32x32xf32, #tpu.memory_space<vmem>>, vector<32x32xf32>
    %57 = vector.extract_strided_slice %51 {offsets = [0, 0], sizes = [64, 64], strides = [1, 1]} : vector<128x64xf32> to vector<64x64xf32>
    %58 = vector.extract_strided_slice %29 {offsets = [0, 0], sizes = [64, 32], strides = [1, 1]} : vector<128x32xf32> to vector<64x32xf32>
    %cst_40 = arith.constant dense<0.000000e+00> : vector<64xf32>
    %59 = vector.multi_reduction <add>, %57, %cst_40 [0] : vector<64x64xf32> to vector<64xf32>
    %60 = vector.shape_cast %59 : vector<64xf32> to vector<1x64xf32>
    %cst_41 = arith.constant 9.99999974E-6 : f32
    %61 = vector.broadcast %cst_41 : f32 to vector<1x64xf32>
    %62 = arith.addf %60, %61 : vector<1x64xf32>
    %63 = tpu.reciprocal %62 {approx = true} : vector<1x64xf32> -> vector<1x64xf32>
    %64 = vector.broadcast %63 : vector<1x64xf32> to vector<64x64xf32>
    %65 = arith.mulf %57, %64 : vector<64x64xf32>
    %cst_42 = arith.constant dense<0.000000e+00> : vector<64x32xf32>
    %66 = tpu.matmul %65, %58, %cst_42 {dimension_numbers = #tpu.dot_dimension_numbers<[0], [0], [1], [1], [0, 1, 1, 1], [], []>} : vector<64x64xf32>, vector<64x32xf32>, vector<64x32xf32> -> vector<64x32xf32>
    %cst_43 = arith.constant dense<0.000000e+00> : vector<64x32xf32>
    %67 = tpu.matmul %66, %54, %cst_43 {dimension_numbers = #tpu.dot_dimension_numbers<[1], [0], [0], [1], [0, 0, 1, 1], [], []>} : vector<64x32xf32>, vector<32x32xf32>, vector<64x32xf32> -> vector<64x32xf32>
    %cst_44 = arith.constant dense<0.000000e+00> : vector<64x32xf32>
    %68 = tpu.matmul %66, %55, %cst_44 {dimension_numbers = #tpu.dot_dimension_numbers<[1], [0], [0], [1], [0, 0, 1, 1], [], []>} : vector<64x32xf32>, vector<32x32xf32>, vector<64x32xf32> -> vector<64x32xf32>
    %69 = arith.mulf %68, %52 : vector<64x32xf32>
    %cst_45 = arith.constant dense<0.000000e+00> : vector<64x32xf32>
    %70 = tpu.matmul %66, %56, %cst_45 {dimension_numbers = #tpu.dot_dimension_numbers<[1], [0], [0], [1], [0, 0, 1, 1], [], []>} : vector<64x32xf32>, vector<32x32xf32>, vector<64x32xf32> -> vector<64x32xf32>
    %cst_46 = arith.constant dense<0.000000e+00> : vector<64x64xf32>
    %71 = tpu.matmul %67, %69, %cst_46 {dimension_numbers = #tpu.dot_dimension_numbers<[1], [1], [0], [0], [0, 0, 1, 0], [], []>} : vector<64x32xf32>, vector<64x32xf32>, vector<64x64xf32> -> vector<64x64xf32>
    %cst_47 = arith.constant 0.353553385 : f32
    %72 = vector.broadcast %cst_47 : f32 to vector<64x64xf32>
    %73 = arith.mulf %71, %72 : vector<64x64xf32>
    %74 = arith.addf %73, %53 : vector<64x64xf32>
    %cst_48 = arith.constant dense<0xFF800000> : vector<64xf32>
    %75 = vector.multi_reduction <maximumf>, %74, %cst_48 [1] : vector<64x64xf32> to vector<64xf32>
    %76 = vector.shape_cast %75 : vector<64xf32> to vector<64x1xf32>
    %77 = vector.broadcast %76 : vector<64x1xf32> to vector<64x64xf32>
    %78 = arith.subf %74, %77 : vector<64x64xf32>
    %79 = math.exp %78 : vector<64x64xf32>
    %cst_49 = arith.constant dense<0.000000e+00> : vector<64xf32>
    %80 = vector.multi_reduction <add>, %79, %cst_49 [1] : vector<64x64xf32> to vector<64xf32>
    %81 = vector.shape_cast %80 : vector<64xf32> to vector<64x1xf32>
    %82 = tpu.reciprocal %81 {approx = true} : vector<64x1xf32> -> vector<64x1xf32>
    %83 = vector.broadcast %82 : vector<64x1xf32> to vector<64x64xf32>
    %84 = arith.mulf %79, %83 : vector<64x64xf32>
    %cst_50 = arith.constant dense<0.000000e+00> : vector<64x32xf32>
    %85 = tpu.matmul %84, %70, %cst_50 {dimension_numbers = #tpu.dot_dimension_numbers<[1], [0], [0], [1], [0, 0, 1, 1], [], []>} : vector<64x64xf32>, vector<64x32xf32>, vector<64x32xf32> -> vector<64x32xf32>
    %86 = arith.mulf %85, %52 : vector<64x32xf32>
    %cst_51 = arith.constant dense<0.000000e+00> : vector<64x32xf32>
    %87 = tpu.matmul %57, %86, %cst_51 {dimension_numbers = #tpu.dot_dimension_numbers<[1], [0], [0], [1], [0, 0, 1, 1], [], []>} : vector<64x64xf32>, vector<64x32xf32>, vector<64x32xf32> -> vector<64x32xf32>
    %88 = vector.extract_strided_slice %51 {offsets = [64, 0], sizes = [64, 64], strides = [1, 1]} : vector<128x64xf32> to vector<64x64xf32>
    %89 = vector.extract_strided_slice %29 {offsets = [64, 0], sizes = [64, 32], strides = [1, 1]} : vector<128x32xf32> to vector<64x32xf32>
    %cst_52 = arith.constant dense<0.000000e+00> : vector<64xf32>
    %90 = vector.multi_reduction <add>, %88, %cst_52 [0] : vector<64x64xf32> to vector<64xf32>
    %91 = vector.shape_cast %90 : vector<64xf32> to vector<1x64xf32>
    %cst_53 = arith.constant 9.99999974E-6 : f32
    %92 = vector.broadcast %cst_53 : f32 to vector<1x64xf32>
    %93 = arith.addf %91, %92 : vector<1x64xf32>
    %94 = tpu.reciprocal %93 {approx = true} : vector<1x64xf32> -> vector<1x64xf32>
    %95 = vector.broadcast %94 : vector<1x64xf32> to vector<64x64xf32>
    %96 = arith.mulf %88, %95 : vector<64x64xf32>
    %cst_54 = arith.constant dense<0.000000e+00> : vector<64x32xf32>
    %97 = tpu.matmul %96, %89, %cst_54 {dimension_numbers = #tpu.dot_dimension_numbers<[0], [0], [1], [1], [0, 1, 1, 1], [], []>} : vector<64x64xf32>, vector<64x32xf32>, vector<64x32xf32> -> vector<64x32xf32>
    %cst_55 = arith.constant dense<0.000000e+00> : vector<64x32xf32>
    %98 = tpu.matmul %97, %54, %cst_55 {dimension_numbers = #tpu.dot_dimension_numbers<[1], [0], [0], [1], [0, 0, 1, 1], [], []>} : vector<64x32xf32>, vector<32x32xf32>, vector<64x32xf32> -> vector<64x32xf32>
    %cst_56 = arith.constant dense<0.000000e+00> : vector<64x32xf32>
    %99 = tpu.matmul %97, %55, %cst_56 {dimension_numbers = #tpu.dot_dimension_numbers<[1], [0], [0], [1], [0, 0, 1, 1], [], []>} : vector<64x32xf32>, vector<32x32xf32>, vector<64x32xf32> -> vector<64x32xf32>
    %100 = arith.mulf %99, %52 : vector<64x32xf32>
    %cst_57 = arith.constant dense<0.000000e+00> : vector<64x32xf32>
    %101 = tpu.matmul %97, %56, %cst_57 {dimension_numbers = #tpu.dot_dimension_numbers<[1], [0], [0], [1], [0, 0, 1, 1], [], []>} : vector<64x32xf32>, vector<32x32xf32>, vector<64x32xf32> -> vector<64x32xf32>
    %cst_58 = arith.constant dense<0.000000e+00> : vector<64x64xf32>
    %102 = tpu.matmul %98, %100, %cst_58 {dimension_numbers = #tpu.dot_dimension_numbers<[1], [1], [0], [0], [0, 0, 1, 0], [], []>} : vector<64x32xf32>, vector<64x32xf32>, vector<64x64xf32> -> vector<64x64xf32>
    %cst_59 = arith.constant 0.353553385 : f32
    %103 = vector.broadcast %cst_59 : f32 to vector<64x64xf32>
    %104 = arith.mulf %102, %103 : vector<64x64xf32>
    %105 = arith.addf %104, %53 : vector<64x64xf32>
    %cst_60 = arith.constant dense<0xFF800000> : vector<64xf32>
    %106 = vector.multi_reduction <maximumf>, %105, %cst_60 [1] : vector<64x64xf32> to vector<64xf32>
    %107 = vector.shape_cast %106 : vector<64xf32> to vector<64x1xf32>
    %108 = vector.broadcast %107 : vector<64x1xf32> to vector<64x64xf32>
    %109 = arith.subf %105, %108 : vector<64x64xf32>
    %110 = math.exp %109 : vector<64x64xf32>
    %cst_61 = arith.constant dense<0.000000e+00> : vector<64xf32>
    %111 = vector.multi_reduction <add>, %110, %cst_61 [1] : vector<64x64xf32> to vector<64xf32>
    %112 = vector.shape_cast %111 : vector<64xf32> to vector<64x1xf32>
    %113 = tpu.reciprocal %112 {approx = true} : vector<64x1xf32> -> vector<64x1xf32>
    %114 = vector.broadcast %113 : vector<64x1xf32> to vector<64x64xf32>
    %115 = arith.mulf %110, %114 : vector<64x64xf32>
    %cst_62 = arith.constant dense<0.000000e+00> : vector<64x32xf32>
    %116 = tpu.matmul %115, %101, %cst_62 {dimension_numbers = #tpu.dot_dimension_numbers<[1], [0], [0], [1], [0, 0, 1, 1], [], []>} : vector<64x64xf32>, vector<64x32xf32>, vector<64x32xf32> -> vector<64x32xf32>
    %117 = arith.mulf %116, %52 : vector<64x32xf32>
    %cst_63 = arith.constant dense<0.000000e+00> : vector<64x32xf32>
    %118 = tpu.matmul %88, %117, %cst_63 {dimension_numbers = #tpu.dot_dimension_numbers<[1], [0], [0], [1], [0, 0, 1, 1], [], []>} : vector<64x64xf32>, vector<64x32xf32>, vector<64x32xf32> -> vector<64x32xf32>
    %119 = tpu.concatenate %87, %118 in 0 : vector<64x32xf32>, vector<64x32xf32> -> vector<128x32xf32>
    %c0_64 = arith.constant 0 : index
    %c0_65 = arith.constant 0 : index
    %120 = vector.load %arg14[%c0_64, %c0_65] : memref<32x32xf32, #tpu.memory_space<vmem>>, vector<32x32xf32>
    %cst_66 = arith.constant dense<0.000000e+00> : vector<128x32xf32>
    %121 = tpu.matmul %119, %120, %cst_66 {dimension_numbers = #tpu.dot_dimension_numbers<[1], [0], [0], [1], [0, 0, 1, 1], [], []>} : vector<128x32xf32>, vector<32x32xf32>, vector<128x32xf32> -> vector<128x32xf32>
    %c0_67 = arith.constant 0 : index
    %c0_68 = arith.constant 0 : index
    %122 = vector.load %arg15[%c0_67, %c0_68] : memref<1x32xf32, #tpu.memory_space<vmem>>, vector<1x32xf32>
    %123 = vector.broadcast %122 : vector<1x32xf32> to vector<128x32xf32>
    %124 = arith.addf %121, %123 : vector<128x32xf32>
    %125 = arith.addf %0, %124 : vector<128x32xf32>
    %c0_69 = arith.constant 0 : index
    %c0_70 = arith.constant 0 : index
    %126 = vector.load %arg16[%c0_69, %c0_70] : memref<1x32xf32, #tpu.memory_space<vmem>>, vector<1x32xf32>
    %c0_71 = arith.constant 0 : index
    %c0_72 = arith.constant 0 : index
    %127 = vector.load %arg17[%c0_71, %c0_72] : memref<1x32xf32, #tpu.memory_space<vmem>>, vector<1x32xf32>
    %cst_73 = arith.constant dense<0.000000e+00> : vector<128xf32>
    %128 = vector.multi_reduction <add>, %125, %cst_73 [1] : vector<128x32xf32> to vector<128xf32>
    %129 = vector.shape_cast %128 : vector<128xf32> to vector<128x1xf32>
    %cst_74 = arith.constant 3.200000e+01 : f32
    %130 = vector.broadcast %cst_74 : f32 to vector<128x1xf32>
    %131 = arith.divf %129, %130 : vector<128x1xf32>
    %132 = vector.broadcast %131 : vector<128x1xf32> to vector<128x32xf32>
    %133 = arith.subf %125, %132 : vector<128x32xf32>
    %134 = arith.mulf %133, %133 : vector<128x32xf32>
    %cst_75 = arith.constant dense<0.000000e+00> : vector<128xf32>
    %135 = vector.multi_reduction <add>, %134, %cst_75 [1] : vector<128x32xf32> to vector<128xf32>
    %136 = vector.shape_cast %135 : vector<128xf32> to vector<128x1xf32>
    %cst_76 = arith.constant 3.200000e+01 : f32
    %137 = vector.broadcast %cst_76 : f32 to vector<128x1xf32>
    %138 = arith.divf %136, %137 : vector<128x1xf32>
    %139 = vector.broadcast %131 : vector<128x1xf32> to vector<128x32xf32>
    %140 = arith.subf %125, %139 : vector<128x32xf32>
    %cst_77 = arith.constant 9.99999974E-6 : f32
    %141 = vector.broadcast %cst_77 : f32 to vector<128x1xf32>
    %142 = arith.addf %138, %141 : vector<128x1xf32>
    %143 = math.rsqrt %142 : vector<128x1xf32>
    %144 = vector.broadcast %143 : vector<128x1xf32> to vector<128x32xf32>
    %145 = arith.mulf %140, %144 : vector<128x32xf32>
    %146 = vector.broadcast %126 : vector<1x32xf32> to vector<128x32xf32>
    %147 = arith.mulf %145, %146 : vector<128x32xf32>
    %148 = vector.broadcast %127 : vector<1x32xf32> to vector<128x32xf32>
    %149 = arith.addf %147, %148 : vector<128x32xf32>
    %c0_78 = arith.constant 0 : index
    %c0_79 = arith.constant 0 : index
    %150 = vector.load %arg18[%c0_78, %c0_79] : memref<32x128xf32, #tpu.memory_space<vmem>>, vector<32x128xf32>
    %cst_80 = arith.constant dense<0.000000e+00> : vector<128x128xf32>
    %151 = tpu.matmul %149, %150, %cst_80 {dimension_numbers = #tpu.dot_dimension_numbers<[1], [0], [0], [1], [0, 0, 1, 1], [], []>} : vector<128x32xf32>, vector<32x128xf32>, vector<128x128xf32> -> vector<128x128xf32>
    %c0_81 = arith.constant 0 : index
    %c0_82 = arith.constant 0 : index
    %152 = vector.load %arg19[%c0_81, %c0_82] : memref<1x128xf32, #tpu.memory_space<vmem>>, vector<1x128xf32>
    %153 = vector.broadcast %152 : vector<1x128xf32> to vector<128x128xf32>
    %154 = arith.addf %151, %153 : vector<128x128xf32>
    %cst_83 = arith.constant 5.000000e-01 : f32
    %155 = vector.broadcast %cst_83 : f32 to vector<128x128xf32>
    %156 = arith.mulf %155, %154 : vector<128x128xf32>
    %cst_84 = arith.constant 4.471500e-02 : f32
    %157 = vector.broadcast %cst_84 : f32 to vector<128x128xf32>
    %158 = arith.mulf %157, %154 : vector<128x128xf32>
    %159 = arith.mulf %158, %154 : vector<128x128xf32>
    %160 = arith.mulf %159, %154 : vector<128x128xf32>
    %161 = arith.addf %154, %160 : vector<128x128xf32>
    %cst_85 = arith.constant 0.797884583 : f32
    %162 = vector.broadcast %cst_85 : f32 to vector<128x128xf32>
    %163 = arith.mulf %162, %161 : vector<128x128xf32>
    %164 = math.tanh %163 : vector<128x128xf32>
    %cst_86 = arith.constant 1.000000e+00 : f32
    %165 = vector.broadcast %cst_86 : f32 to vector<128x128xf32>
    %166 = arith.addf %165, %164 : vector<128x128xf32>
    %167 = arith.mulf %156, %166 : vector<128x128xf32>
    %c0_87 = arith.constant 0 : index
    %c0_88 = arith.constant 0 : index
    %168 = vector.load %arg20[%c0_87, %c0_88] : memref<128x32xf32, #tpu.memory_space<vmem>>, vector<128x32xf32>
    %cst_89 = arith.constant dense<0.000000e+00> : vector<128x32xf32>
    %169 = tpu.matmul %167, %168, %cst_89 {dimension_numbers = #tpu.dot_dimension_numbers<[1], [0], [0], [1], [0, 0, 1, 1], [], []>} : vector<128x128xf32>, vector<128x32xf32>, vector<128x32xf32> -> vector<128x32xf32>
    %c0_90 = arith.constant 0 : index
    %c0_91 = arith.constant 0 : index
    %170 = vector.load %arg21[%c0_90, %c0_91] : memref<1x32xf32, #tpu.memory_space<vmem>>, vector<1x32xf32>
    %171 = vector.broadcast %170 : vector<1x32xf32> to vector<128x32xf32>
    %172 = arith.addf %169, %171 : vector<128x32xf32>
    %173 = arith.addf %125, %172 : vector<128x32xf32>
    %c0_92 = arith.constant 0 : index
    %c0_93 = arith.constant 0 : index
    %174 = vector.load %arg25[%c0_92, %c0_93] : memref<128x32xf32, #tpu.memory_space<vmem>>, vector<128x32xf32>
    tpu.vector_store %arg25[%c0_92, %c0_93], %173 {strides = array<i32>} : memref<128x32xf32, #tpu.memory_space<vmem>>, vector<128x32xf32>,
    return
  }
  func.func @transform_0(%arg0: i32) -> (i32, i32) {
    %c0_i32 = arith.constant 0 : i32
    %c0_i32_0 = arith.constant 0 : i32
    %c0_i32_1 = arith.constant 0 : i32
    return %c0_i32, %c0_i32_0 : i32, i32
  }
  func.func @transform_1(%arg0: i32) -> (i32, i32) {
    %c0_i32 = arith.constant 0 : i32
    %c0_i32_0 = arith.constant 0 : i32
    %c0_i32_1 = arith.constant 0 : i32
    return %c0_i32, %c0_i32_0 : i32, i32
  }
  func.func @transform_2(%arg0: i32) -> (i32, i32) {
    %c0_i32 = arith.constant 0 : i32
    %c0_i32_0 = arith.constant 0 : i32
    %c0_i32_1 = arith.constant 0 : i32
    return %c0_i32, %c0_i32_0 : i32, i32
  }
  func.func @transform_3(%arg0: i32) -> (i32, i32) {
    %c0_i32 = arith.constant 0 : i32
    %c0_i32_0 = arith.constant 0 : i32
    %c0_i32_1 = arith.constant 0 : i32
    return %c0_i32, %c0_i32_0 : i32, i32
  }
  func.func @transform_4(%arg0: i32) -> (i32, i32) {
    %c0_i32 = arith.constant 0 : i32
    %c0_i32_0 = arith.constant 0 : i32
    %c0_i32_1 = arith.constant 0 : i32
    return %c0_i32, %c0_i32_0 : i32, i32
  }
  func.func @transform_5(%arg0: i32) -> (i32, i32) {
    %c0_i32 = arith.constant 0 : i32
    %c0_i32_0 = arith.constant 0 : i32
    %c0_i32_1 = arith.constant 0 : i32
    return %c0_i32, %c0_i32_0 : i32, i32
  }
  func.func @transform_6(%arg0: i32) -> (i32, i32) {
    %c0_i32 = arith.constant 0 : i32
    %c0_i32_0 = arith.constant 0 : i32
    %c0_i32_1 = arith.constant 0 : i32
    return %c0_i32, %c0_i32_0 : i32, i32
  }
  func.func @transform_7(%arg0: i32) -> (i32, i32) {
    %c0_i32 = arith.constant 0 : i32
    %c0_i32_0 = arith.constant 0 : i32
    %c0_i32_1 = arith.constant 0 : i32
    return %c0_i32, %c0_i32_0 : i32, i32
  }
  func.func @transform_8(%arg0: i32) -> (i32, i32) {
    %c0_i32 = arith.constant 0 : i32
    %c0_i32_0 = arith.constant 0 : i32
    %c0_i32_1 = arith.constant 0 : i32
    return %c0_i32, %c0_i32_0 : i32, i32
  }
  func.func @transform_9(%arg0: i32) -> (i32, i32) {
    %c0_i32 = arith.constant 0 : i32
    %c0_i32_0 = arith.constant 0 : i32
    %c0_i32_1 = arith.constant 0 : i32
    return %c0_i32, %c0_i32_0 : i32, i32
  }
  func.func @transform_10(%arg0: i32) -> (i32, i32) {
    %c0_i32 = arith.constant 0 : i32
    %c0_i32_0 = arith.constant 0 : i32
    %c0_i32_1 = arith.constant 0 : i32
    return %c0_i32, %c0_i32_0 : i32, i32
  }
  func.func @transform_11(%arg0: i32) -> (i32, i32) {
    %c0_i32 = arith.constant 0 : i32
    %c0_i32_0 = arith.constant 0 : i32
    %c0_i32_1 = arith.constant 0 : i32
    return %c0_i32, %c0_i32_0 : i32, i32
  }
  func.func @transform_12(%arg0: i32) -> (i32, i32) {
    %c0_i32 = arith.constant 0 : i32
    %c0_i32_0 = arith.constant 0 : i32
    %c0_i32_1 = arith.constant 0 : i32
    return %c0_i32, %c0_i32_0 : i32, i32
  }
  func.func @transform_13(%arg0: i32) -> (i32, i32) {
    %c0_i32 = arith.constant 0 : i32
    %c0_i32_0 = arith.constant 0 : i32
    %c0_i32_1 = arith.constant 0 : i32
    return %c0_i32, %c0_i32_0 : i32, i32
  }
  func.func @transform_14(%arg0: i32) -> (i32, i32) {
    %c0_i32 = arith.constant 0 : i32
    %c0_i32_0 = arith.constant 0 : i32
    %c0_i32_1 = arith.constant 0 : i32
    return %c0_i32, %c0_i32_0 : i32, i32
  }
  func.func @transform_15(%arg0: i32) -> (i32, i32) {
    %c0_i32 = arith.constant 0 : i32
    %c0_i32_0 = arith.constant 0 : i32
    %c0_i32_1 = arith.constant 0 : i32
    return %c0_i32, %c0_i32_0 : i32, i32
  }
  func.func @transform_16(%arg0: i32) -> (i32, i32) {
    %c0_i32 = arith.constant 0 : i32
    %c0_i32_0 = arith.constant 0 : i32
    %c0_i32_1 = arith.constant 0 : i32
    return %c0_i32, %c0_i32_0 : i32, i32
  }
  func.func @transform_17(%arg0: i32) -> (i32, i32) {
    %c0_i32 = arith.constant 0 : i32
    %c0_i32_0 = arith.constant 0 : i32
    %c0_i32_1 = arith.constant 0 : i32
    return %c0_i32, %c0_i32_0 : i32, i32
  }
  func.func @transform_18(%arg0: i32) -> (i32, i32) {
    %c0_i32 = arith.constant 0 : i32
    %c0_i32_0 = arith.constant 0 : i32
    %c0_i32_1 = arith.constant 0 : i32
    return %c0_i32, %c0_i32_0 : i32, i32
  }
  func.func @transform_19(%arg0: i32) -> (i32, i32) {
    %c0_i32 = arith.constant 0 : i32
    %c0_i32_0 = arith.constant 0 : i32
    %c0_i32_1 = arith.constant 0 : i32
    return %c0_i32, %c0_i32_0 : i32, i32
  }
  func.func @transform_20(%arg0: i32) -> (i32, i32) {
    %c0_i32 = arith.constant 0 : i32
    %c0_i32_0 = arith.constant 0 : i32
    %c0_i32_1 = arith.constant 0 : i32
    return %c0_i32, %c0_i32_0 : i32, i32
  }
  func.func @transform_21(%arg0: i32) -> (i32, i32) {
    %c0_i32 = arith.constant 0 : i32
    %c0_i32_0 = arith.constant 0 : i32
    %c0_i32_1 = arith.constant 0 : i32
    return %c0_i32, %c0_i32_0 : i32, i32
  }
  func.func @transform_22(%arg0: i32) -> (i32, i32) {
    %c0_i32 = arith.constant 0 : i32
    %c0_i32_0 = arith.constant 0 : i32
    %c0_i32_1 = arith.constant 0 : i32
    return %c0_i32, %c0_i32_0 : i32, i32
  }
  func.func @transform_23(%arg0: i32) -> (i32, i32) {
    %c0_i32 = arith.constant 0 : i32
    %c0_i32_0 = arith.constant 0 : i32
    %c0_i32_1 = arith.constant 0 : i32
    return %c0_i32, %c0_i32_0 : i32, i32
  }
  func.func @transform_24(%arg0: i32) -> (i32, i32) {
    %c0_i32 = arith.constant 0 : i32
    %c0_i32_0 = arith.constant 0 : i32
    %c0_i32_1 = arith.constant 0 : i32
    return %c0_i32, %c0_i32_0 : i32, i32
  }
}

</mosaic_0001>

<llo_original>
// kernel: tpu_custom_call.1
$region0: #{tpu_custom_call.1}
  #allocation0 [shape = 'u32[]', space=smem, size = 0x4, offset = 0x4, fixed_abs, tag = 'smem constant byte address 0x4 - core index']
  #allocation1 [shape = 'u32[144,128]{1,0:T(1,128)}', space=vmem, size = 0x12000, scoped, tag = 'internal scratch']
  %s0 = inlined_call_operand.vmem [shape: f32[128,32], index: 0, kind: input, shape index: {}]
  %s1 = inlined_call_operand.hbm [shape: f32[1,32], index: 1, kind: input, shape index: {}]
  %s2 = inlined_call_operand.hbm [shape: f32[1,32], index: 2, kind: input, shape index: {}]
  %s3 = inlined_call_operand.vmem [shape: f32[32,32], index: 3, kind: input, shape index: {}]
  %s4 = inlined_call_operand.hbm [shape: f32[1,32], index: 4, kind: input, shape index: {}]
  %s5 = inlined_call_operand.vmem [shape: f32[32,32], index: 5, kind: input, shape index: {}]
  %s6 = inlined_call_operand.hbm [shape: f32[1,32], index: 6, kind: input, shape index: {}]
  %s7 = inlined_call_operand.vmem [shape: f32[32,64], index: 7, kind: input, shape index: {}]
  %s8 = inlined_call_operand.hbm [shape: f32[1,64], index: 8, kind: input, shape index: {}]
  %s9 = inlined_call_operand.hbm [shape: f32[1,64], index: 9, kind: input, shape index: {}]
  %s10 = inlined_call_operand.vmem [shape: f32[32,32], index: 10, kind: input, shape index: {}]
  %s11 = inlined_call_operand.vmem [shape: f32[32,32], index: 11, kind: input, shape index: {}]
  %s12 = inlined_call_operand.vmem [shape: f32[32,32], index: 12, kind: input, shape index: {}]
  %s13 = inlined_call_operand.vmem [shape: f32[32,32], index: 13, kind: input, shape index: {}]
  %s14 = inlined_call_operand.hbm [shape: f32[1,32], index: 14, kind: input, shape index: {}]
  %s15 = inlined_call_operand.hbm [shape: f32[1,32], index: 15, kind: input, shape index: {}]
  %s16 = inlined_call_operand.hbm [shape: f32[1,32], index: 16, kind: input, shape index: {}]
  %s17 = inlined_call_operand.vmem [shape: f32[32,128], index: 17, kind: input, shape index: {}]
  %s18 = inlined_call_operand.vmem [shape: f32[1,128], index: 18, kind: input, shape index: {}]
  %s19 = inlined_call_operand.vmem [shape: f32[128,32], index: 19, kind: input, shape index: {}]
  %s20 = inlined_call_operand.vmem [shape: f32[1,32], index: 20, kind: input, shape index: {}]
  %s21 = inlined_call_operand.vmem [shape: f32[64,64], index: 21, kind: input, shape index: {}]
  %s22 = inlined_call_operand.vmem [shape: f32[64,64], index: 22, kind: input, shape index: {}]
  %s23 = inlined_call_operand.vmem [shape: f32[64,32], index: 23, kind: input, shape index: {}]
  %s24 = inlined_call_operand.vmem [shape: f32[128,32], index: 24, kind: output, shape index: {}]
  %s25 = sld [smem:[#allocation0]]
  $region142: #{tpu_custom_call.1} parent=0
    _
  %s27 = ssub.s32 1, %s25
  %s28 = scalar_select 0, %s27, %s25
  $region1: #{tpu_custom_call.1} parent=0
    #allocation2 [shape = 'u8[512]{0}', space=vmem, size = 0x400, scoped, tag = 'input window, operand 1, single buffered']
    #allocation3 [shape = 's32[1]{0}', space=sflag, size = 0x4, scoped, tag = 'scoped memory for tpu_custom_call.1']
    #allocation4 [shape = 'u8[512]{0}', space=vmem, size = 0x400, scoped, tag = 'input window, operand 2, single buffered']
    #allocation5 [shape = 's32[1]{0}', space=sflag, size = 0x4, scoped, tag = 'scoped memory for tpu_custom_call.1']
    #allocation6 [shape = 'u8[512]{0}', space=vmem, size = 0x400, scoped, tag = 'input window, operand 4, single buffered']
    #allocation7 [shape = 'u8[512]{0}', space=vmem, size = 0x400, scoped, tag = 'input window, operand 6, single buffered']
    #allocation8 [shape = 's32[1]{0}', space=sflag, size = 0x4, scoped, tag = 'scoped memory for tpu_custom_call.1']
    #allocation9 [shape = 'u8[512]{0}', space=vmem, size = 0x400, scoped, tag = 'input window, operand 8, single buffered']
    #allocation10 [shape = 'u8[512]{0}', space=vmem, size = 0x400, scoped, tag = 'input window, operand 9, single buffered']
    #allocation11 [shape = 's32[1]{0}', space=sflag, size = 0x4, scoped, tag = 'scoped memory for tpu_custom_call.1']
    #allocation12 [shape = 'u8[512]{0}', space=vmem, size = 0x400, scoped, tag = 'input window, operand 14, single buffered']
    #allocation13 [shape = 'u8[512]{0}', space=vmem, size = 0x400, scoped, tag = 'input window, operand 15, single buffered']
    #allocation14 [shape = 's32[1]{0}', space=sflag, size = 0x4, scoped, tag = 'scoped memory for tpu_custom_call.1']
    #allocation15 [shape = 'u8[512]{0}', space=vmem, size = 0x400, scoped, tag = 'input window, operand 16, single buffered']
    %29 = vsyncpa [#allocation3], 0
    %30 = vsyncpa [#allocation5], 0
    %31 = vsyncpa [#allocation8], 0
    %32 = vsyncpa [#allocation11], 0
    %33 = vsyncpa [#allocation14], 0
    // Predicated region
    $region2: #{tpu_custom_call.1} parent=1 // pred_check
      _
    $region3: #{tpu_custom_call.1} parent=1 // pred_check_branch
      %35 = sbr.rel (0) target = $region5
    $region4: #{tpu_custom_call.1} parent=1 // pred_region
      _
    $region5: #{tpu_custom_call.1} parent=1 // pred_fallthru
      _
    // Predicated region
    $region6: #{tpu_custom_call.1} parent=1 // pred_check
      _
    $region7: #{tpu_custom_call.1} parent=1 // pred_check_branch
      %37 = sbr.rel (0) target = $region9
    $region8: #{tpu_custom_call.1} parent=1 // pred_region
      %s39 = ssub.s32 16, 16
      %40 = vsyncadd [#allocation3], %s39
      %s42 = sshll.u32 [#allocation2], 4
      %s43 = int_to_ptr.vmem [resolvable:$true] %s42
      %45 = dma.hbm_to_vmem [thread:$0]  %s1, 16, %s43, [#allocation3]
    $region9: #{tpu_custom_call.1} parent=1 // pred_fallthru
      _
    // Predicated region
    $region10: #{tpu_custom_call.1} parent=1 // pred_check
      _
    $region11: #{tpu_custom_call.1} parent=1 // pred_check_branch
      %47 = sbr.rel (0) target = $region13
    $region12: #{tpu_custom_call.1} parent=1 // pred_region
      %s49 = ssub.s32 16, 16
      %50 = vsyncadd [#allocation5], %s49
      %s52 = sshll.u32 [#allocation4], 4
      %s53 = int_to_ptr.vmem [resolvable:$true] %s52
      %55 = dma.hbm_to_vmem [thread:$0]  %s2, 16, %s53, [#allocation5]
    $region13: #{tpu_custom_call.1} parent=1 // pred_fallthru
      _
    // Predicated region
    $region14: #{tpu_custom_call.1} parent=1 // pred_check
      _
    $region15: #{tpu_custom_call.1} parent=1 // pred_check_branch
      %57 = sbr.rel (0) target = $region17
    $region16: #{tpu_custom_call.1} parent=1 // pred_region
      _
    $region17: #{tpu_custom_call.1} parent=1 // pred_fallthru
      _
    // Predicated region
    $region18: #{tpu_custom_call.1} parent=1 // pred_check
      _
    $region19: #{tpu_custom_call.1} parent=1 // pred_check_branch
      %59 = sbr.rel (0) target = $region21
    $region20: #{tpu_custom_call.1} parent=1 // pred_region
      %s61 = ssub.s32 16, 16
      %62 = vsyncadd [#allocation5], %s61
      %s64 = sshll.u32 [#allocation6], 4
      %s65 = int_to_ptr.vmem [resolvable:$true] %s64
      %67 = dma.hbm_to_vmem [thread:$0]  %s4, 16, %s65, [#allocation5]
    $region21: #{tpu_custom_call.1} parent=1 // pred_fallthru
      _
    // Predicated region
    $region22: #{tpu_custom_call.1} parent=1 // pred_check
      _
    $region23: #{tpu_custom_call.1} parent=1 // pred_check_branch
      %69 = sbr.rel (0) target = $region25
    $region24: #{tpu_custom_call.1} parent=1 // pred_region
      _
    $region25: #{tpu_custom_call.1} parent=1 // pred_fallthru
      _
    // Predicated region
    $region26: #{tpu_custom_call.1} parent=1 // pred_check
      _
    $region27: #{tpu_custom_call.1} parent=1 // pred_check_branch
      %71 = sbr.rel (0) target = $region29
    $region28: #{tpu_custom_call.1} parent=1 // pred_region
      %s73 = ssub.s32 16, 16
      %74 = vsyncadd [#allocation8], %s73
      %s76 = sshll.u32 [#allocation7], 4
      %s77 = int_to_ptr.vmem [resolvable:$true] %s76
      %79 = dma.hbm_to_vmem [thread:$0]  %s6, 16, %s77, [#allocation8]
    $region29: #{tpu_custom_call.1} parent=1 // pred_fallthru
      _
    // Predicated region
    $region30: #{tpu_custom_call.1} parent=1 // pred_check
      _
    $region31: #{tpu_custom_call.1} parent=1 // pred_check_branch
      %81 = sbr.rel (0) target = $region33
    $region32: #{tpu_custom_call.1} parent=1 // pred_region
      _
    $region33: #{tpu_custom_call.1} parent=1 // pred_fallthru
      _
    // Predicated region
    $region34: #{tpu_custom_call.1} parent=1 // pred_check
      _
    $region35: #{tpu_custom_call.1} parent=1 // pred_check_branch
      %83 = sbr.rel (0) target = $region37
    $region36: #{tpu_custom_call.1} parent=1 // pred_region
      %s85 = ssub.s32 16, 16
      %86 = vsyncadd [#allocation8], %s85
      %s88 = sshll.u32 [#allocation9], 4
      %s89 = int_to_ptr.vmem [resolvable:$true] %s88
      %91 = dma.hbm_to_vmem [thread:$0]  %s8, 16, %s89, [#allocation8]
    $region37: #{tpu_custom_call.1} parent=1 // pred_fallthru
      _
    // Predicated region
    $region38: #{tpu_custom_call.1} parent=1 // pred_check
      _
    $region39: #{tpu_custom_call.1} parent=1 // pred_check_branch
      %93 = sbr.rel (0) target = $region41
    $region40: #{tpu_custom_call.1} parent=1 // pred_region
      %s95 = ssub.s32 16, 16
      %96 = vsyncadd [#allocation11], %s95
      %s98 = sshll.u32 [#allocation10], 4
      %s99 = int_to_ptr.vmem [resolvable:$true] %s98
      %101 = dma.hbm_to_vmem [thread:$0]  %s9, 16, %s99, [#allocation11]
    $region41: #{tpu_custom_call.1} parent=1 // pred_fallthru
      _
    // Predicated region
    $region42: #{tpu_custom_call.1} parent=1 // pred_check
      _
    $region43: #{tpu_custom_call.1} parent=1 // pred_check_branch
      %103 = sbr.rel (0) target = $region45
    $region44: #{tpu_custom_call.1} parent=1 // pred_region
      _
    $region45: #{tpu_custom_call.1} parent=1 // pred_fallthru
      _
    // Predicated region
    $region46: #{tpu_custom_call.1} parent=1 // pred_check
      _
    $region47: #{tpu_custom_call.1} parent=1 // pred_check_branch
      %105 = sbr.rel (0) target = $region49
    $region48: #{tpu_custom_call.1} parent=1 // pred_region
      _
    $region49: #{tpu_custom_call.1} parent=1 // pred_fallthru
      _
    // Predicated region
    $region50: #{tpu_custom_call.1} parent=1 // pred_check
      _
    $region51: #{tpu_custom_call.1} parent=1 // pred_check_branch
      %107 = sbr.rel (0) target = $region53
    $region52: #{tpu_custom_call.1} parent=1 // pred_region
      _
    $region53: #{tpu_custom_call.1} parent=1 // pred_fallthru
      _
    // Predicated region
    $region54: #{tpu_custom_call.1} parent=1 // pred_check
      _
    $region55: #{tpu_custom_call.1} parent=1 // pred_check_branch
      %109 = sbr.rel (0) target = $region57
    $region56: #{tpu_custom_call.1} parent=1 // pred_region
      _
    $region57: #{tpu_custom_call.1} parent=1 // pred_fallthru
      _
    // Predicated region
    $region58: #{tpu_custom_call.1} parent=1 // pred_check
      _
    $region59: #{tpu_custom_call.1} parent=1 // pred_check_branch
      %111 = sbr.rel (0) target = $region61
    $region60: #{tpu_custom_call.1} parent=1 // pred_region
      %s113 = ssub.s32 16, 16
      %114 = vsyncadd [#allocation11], %s113
      %s116 = sshll.u32 [#allocation12], 4
      %s117 = int_to_ptr.vmem [resolvable:$true] %s116
      %119 = dma.hbm_to_vmem [thread:$0]  %s14, 16, %s117, [#allocation11]
    $region61: #{tpu_custom_call.1} parent=1 // pred_fallthru
      _
    // Predicated region
    $region62: #{tpu_custom_call.1} parent=1 // pred_check
      _
    $region63: #{tpu_custom_call.1} parent=1 // pred_check_branch
      %121 = sbr.rel (0) target = $region65
    $region64: #{tpu_custom_call.1} parent=1 // pred_region
      %s123 = ssub.s32 16, 16
      %124 = vsyncadd [#allocation14], %s123
      %s126 = sshll.u32 [#allocation13], 4
      %s127 = int_to_ptr.vmem [resolvable:$true] %s126
      %129 = dma.hbm_to_vmem [thread:$0]  %s15, 16, %s127, [#allocation14]
    $region65: #{tpu_custom_call.1} parent=1 // pred_fallthru
      _
    // Predicated region
    $region66: #{tpu_custom_call.1} parent=1 // pred_check
      _
    $region67: #{tpu_custom_call.1} parent=1 // pred_check_branch
      %131 = sbr.rel (0) target = $region69
    $region68: #{tpu_custom_call.1} parent=1 // pred_region
      %s133 = ssub.s32 16, 16
      %134 = vsyncadd [#allocation14], %s133
      %s136 = sshll.u32 [#allocation15], 4
      %s137 = int_to_ptr.vmem [resolvable:$true] %s136
      %139 = dma.hbm_to_vmem [thread:$0]  %s16, 16, %s137, [#allocation14]
    $region69: #{tpu_custom_call.1} parent=1 // pred_fallthru
      _
    // Predicated region
    $region70: #{tpu_custom_call.1} parent=1 // pred_check
      _
    $region71: #{tpu_custom_call.1} parent=1 // pred_check_branch
      %141 = sbr.rel (0) target = $region73
    $region72: #{tpu_custom_call.1} parent=1 // pred_region
      _
    $region73: #{tpu_custom_call.1} parent=1 // pred_fallthru
      _
    // Predicated region
    $region74: #{tpu_custom_call.1} parent=1 // pred_check
      _
    $region75: #{tpu_custom_call.1} parent=1 // pred_check_branch
      %143 = sbr.rel (0) target = $region77
    $region76: #{tpu_custom_call.1} parent=1 // pred_region
      _
    $region77: #{tpu_custom_call.1} parent=1 // pred_fallthru
      _
    // Predicated region
    $region78: #{tpu_custom_call.1} parent=1 // pred_check
      _
    $region79: #{tpu_custom_call.1} parent=1 // pred_check_branch
      %145 = sbr.rel (0) target = $region81
    $region80: #{tpu_custom_call.1} parent=1 // pred_region
      _
    $region81: #{tpu_custom_call.1} parent=1 // pred_fallthru
      _
    // Predicated region
    $region82: #{tpu_custom_call.1} parent=1 // pred_check
      _
    $region83: #{tpu_custom_call.1} parent=1 // pred_check_branch
      %147 = sbr.rel (0) target = $region85
    $region84: #{tpu_custom_call.1} parent=1 // pred_region
      _
    $region85: #{tpu_custom_call.1} parent=1 // pred_fallthru
      _
    // Predicated region
    $region86: #{tpu_custom_call.1} parent=1 // pred_check
      _
    $region87: #{tpu_custom_call.1} parent=1 // pred_check_branch
      %149 = sbr.rel (0) target = $region89
    $region88: #{tpu_custom_call.1} parent=1 // pred_region
      _
    $region89: #{tpu_custom_call.1} parent=1 // pred_fallthru
      _
    // Predicated region
    $region90: #{tpu_custom_call.1} parent=1 // pred_check
      _
    $region91: #{tpu_custom_call.1} parent=1 // pred_check_branch
      %151 = sbr.rel (0) target = $region93
    $region92: #{tpu_custom_call.1} parent=1 // pred_region
      _
    $region93: #{tpu_custom_call.1} parent=1 // pred_fallthru
      _
    // Predicated region
    $region94: #{tpu_custom_call.1} parent=1 // pred_check
      _
    $region95: #{tpu_custom_call.1} parent=1 // pred_check_branch
      %153 = sbr.rel (0) target = $region97
    $region96: #{tpu_custom_call.1} parent=1 // pred_region
      _
    $region97: #{tpu_custom_call.1} parent=1 // pred_fallthru
      _
    // Predicated region
    $region98: #{tpu_custom_call.1} parent=1 // pred_check
      _
    $region99: #{tpu_custom_call.1} parent=1 // pred_check_branch
      %155 = sbr.rel (0) target = $region101
    $region100: #{tpu_custom_call.1} parent=1 // pred_region
      %156 = dma.done [#allocation3], 16
    $region101: #{tpu_custom_call.1} parent=1 // pred_fallthru
      _
    // Predicated region
    $region102: #{tpu_custom_call.1} parent=1 // pred_check
      _
    $region103: #{tpu_custom_call.1} parent=1 // pred_check_branch
      %158 = sbr.rel (0) target = $region105
    $region104: #{tpu_custom_call.1} parent=1 // pred_region
      %159 = dma.done [#allocation5], 16
    $region105: #{tpu_custom_call.1} parent=1 // pred_fallthru
      _
    // Predicated region
    $region106: #{tpu_custom_call.1} parent=1 // pred_check
      _
    $region107: #{tpu_custom_call.1} parent=1 // pred_check_branch
      %161 = sbr.rel (0) target = $region109
    $region108: #{tpu_custom_call.1} parent=1 // pred_region
      %162 = dma.done [#allocation5], 16
    $region109: #{tpu_custom_call.1} parent=1 // pred_fallthru
      _
    // Predicated region
    $region110: #{tpu_custom_call.1} parent=1 // pred_check
      _
    $region111: #{tpu_custom_call.1} parent=1 // pred_check_branch
      %164 = sbr.rel (0) target = $region113
    $region112: #{tpu_custom_call.1} parent=1 // pred_region
      %165 = dma.done [#allocation8], 16
    $region113: #{tpu_custom_call.1} parent=1 // pred_fallthru
      _
    // Predicated region
    $region114: #{tpu_custom_call.1} parent=1 // pred_check
      _
    $region115: #{tpu_custom_call.1} parent=1 // pred_check_branch
      %167 = sbr.rel (0) target = $region117
    $region116: #{tpu_custom_call.1} parent=1 // pred_region
      %168 = dma.done [#allocation8], 16
    $region117: #{tpu_custom_call.1} parent=1 // pred_fallthru
      _
    // Predicated region
    $region118: #{tpu_custom_call.1} parent=1 // pred_check
      _
    $region119: #{tpu_custom_call.1} parent=1 // pred_check_branch
      %170 = sbr.rel (0) target = $region121
    $region120: #{tpu_custom_call.1} parent=1 // pred_region
      %171 = dma.done [#allocation11], 16
    $region121: #{tpu_custom_call.1} parent=1 // pred_fallthru
      _
    // Predicated region
    $region122: #{tpu_custom_call.1} parent=1 // pred_check
      _
    $region123: #{tpu_custom_call.1} parent=1 // pred_check_branch
      %173 = sbr.rel (0) target = $region125
    $region124: #{tpu_custom_call.1} parent=1 // pred_region
      %174 = dma.done [#allocation11], 16
    $region125: #{tpu_custom_call.1} parent=1 // pred_fallthru
      _
    // Predicated region
    $region126: #{tpu_custom_call.1} parent=1 // pred_check
      _
    $region127: #{tpu_custom_call.1} parent=1 // pred_check_branch
      %176 = sbr.rel (0) target = $region129
    $region128: #{tpu_custom_call.1} parent=1 // pred_region
      %177 = dma.done [#allocation14], 16
    $region129: #{tpu_custom_call.1} parent=1 // pred_fallthru
      _
    // Predicated region
    $region130: #{tpu_custom_call.1} parent=1 // pred_check
      _
    $region131: #{tpu_custom_call.1} parent=1 // pred_check_branch
      %179 = sbr.rel (0) target = $region133
    $region132: #{tpu_custom_call.1} parent=1 // pred_region
      %180 = dma.done [#allocation14], 16
    $region133: #{tpu_custom_call.1} parent=1 // pred_fallthru
      _
    %v181 = vld [vmem:[%s0] sm:$0xff]
    %v182 = vld [vmem:[%s0 + $0x8] sm:$0xff]
    %v183 = vld [vmem:[%s0 + $0x10] sm:$0xff]
    %v184 = vld [vmem:[%s0 + $0x18] sm:$0xff]
    %v185 = vld [vmem:[%s0 + $0x20] sm:$0xff]
    %v186 = vld [vmem:[%s0 + $0x28] sm:$0xff]
    %v187 = vld [vmem:[%s0 + $0x30] sm:$0xff]
    %v188 = vld [vmem:[%s0 + $0x38] sm:$0xff]
    %v189 = vld [vmem:[%s0 + $0x40] sm:$0xff]
    %v190 = vld [vmem:[%s0 + $0x48] sm:$0xff]
    %v191 = vld [vmem:[%s0 + $0x50] sm:$0xff]
    %v192 = vld [vmem:[%s0 + $0x58] sm:$0xff]
    %v193 = vld [vmem:[%s0 + $0x60] sm:$0xff]
    %v194 = vld [vmem:[%s0 + $0x68] sm:$0xff]
    %v195 = vld [vmem:[%s0 + $0x70] sm:$0xff]
    %v196 = vld [vmem:[%s0 + $0x78] sm:$0xff]
    %v197 = vld [vmem:[#allocation2] sm:$0x1]
    %v198 = vld [vmem:[#allocation4] sm:$0x1]
    %vm199 = vcmask 261120
    %v200 = vsel %vm199, %v181, 0.0
    %201 = vadd.xlane.f32.xlu0 %v200
    %v202 = vpop.xlane.xlu0 %201
    %v203 = vsel %vm199, %v182, 0.0
    %204 = vadd.xlane.f32.xlu0 %v203
    %v205 = vpop.xlane.xlu0 %204
    %v206 = vsel %vm199, %v183, 0.0
    %207 = vadd.xlane.f32.xlu0 %v206
    %v208 = vpop.xlane.xlu0 %207
    %v209 = vsel %vm199, %v184, 0.0
    %210 = vadd.xlane.f32.xlu0 %v209
    %v211 = vpop.xlane.xlu0 %210
    %v212 = vsel %vm199, %v185, 0.0
    %213 = vadd.xlane.f32.xlu0 %v212
    %v214 = vpop.xlane.xlu0 %213
    %v215 = vsel %vm199, %v186, 0.0
    %216 = vadd.xlane.f32.xlu0 %v215
    %v217 = vpop.xlane.xlu0 %216
    %v218 = vsel %vm199, %v187, 0.0
    %219 = vadd.xlane.f32.xlu0 %v218
    %v220 = vpop.xlane.xlu0 %219
    %v221 = vsel %vm199, %v188, 0.0
    %222 = vadd.xlane.f32.xlu0 %v221
    %v223 = vpop.xlane.xlu0 %222
    %v224 = vsel %vm199, %v189, 0.0
    %225 = vadd.xlane.f32.xlu0 %v224
    %v226 = vpop.xlane.xlu0 %225
    %v227 = vsel %vm199, %v190, 0.0
    %228 = vadd.xlane.f32.xlu0 %v227
    %v229 = vpop.xlane.xlu0 %228
    %v230 = vsel %vm199, %v191, 0.0
    %231 = vadd.xlane.f32.xlu0 %v230
    %v232 = vpop.xlane.xlu0 %231
    %v233 = vsel %vm199, %v192, 0.0
    %234 = vadd.xlane.f32.xlu0 %v233
    %v235 = vpop.xlane.xlu0 %234
    %v236 = vsel %vm199, %v193, 0.0
    %237 = vadd.xlane.f32.xlu0 %v236
    %v238 = vpop.xlane.xlu0 %237
    %v239 = vsel %vm199, %v194, 0.0
    %240 = vadd.xlane.f32.xlu0 %v239
    %v241 = vpop.xlane.xlu0 %240
    %v242 = vsel %vm199, %v195, 0.0
    %243 = vadd.xlane.f32.xlu0 %v242
    %v244 = vpop.xlane.xlu0 %243
    %v245 = vsel %vm199, %v196, 0.0
    %246 = vadd.xlane.f32.xlu0 %v245
    %v247 = vpop.xlane.xlu0 %246
    %v248 = vrcp.pop 32.0
    %v249 = vmul.f32 %v202, %v248
    %v250 = vmul.f32 %v205, %v248
    %v251 = vmul.f32 %v208, %v248
    %v252 = vmul.f32 %v211, %v248
    %v253 = vmul.f32 %v214, %v248
    %v254 = vmul.f32 %v217, %v248
    %v255 = vmul.f32 %v220, %v248
    %v256 = vmul.f32 %v223, %v248
    %v257 = vmul.f32 %v226, %v248
    %v258 = vmul.f32 %v229, %v248
    %v259 = vmul.f32 %v232, %v248
    %v260 = vmul.f32 %v235, %v248
    %v261 = vmul.f32 %v238, %v248
    %v262 = vmul.f32 %v241, %v248
    %v263 = vmul.f32 %v244, %v248
    %v264 = vmul.f32 %v247, %v248
    %v265 = vsub.f32 %v181, %v249
    %v266 = vsub.f32 %v182, %v250
    %v267 = vsub.f32 %v183, %v251
    %v268 = vsub.f32 %v184, %v252
    %v269 = vsub.f32 %v185, %v253
    %v270 = vsub.f32 %v186, %v254
    %v271 = vsub.f32 %v187, %v255
    %v272 = vsub.f32 %v188, %v256
    %v273 = vsub.f32 %v189, %v257
    %v274 = vsub.f32 %v190, %v258
    %v275 = vsub.f32 %v191, %v259
    %v276 = vsub.f32 %v192, %v260
    %v277 = vsub.f32 %v193, %v261
    %v278 = vsub.f32 %v194, %v262
    %v279 = vsub.f32 %v195, %v263
    %v280 = vsub.f32 %v196, %v264
    %v281 = vmul.f32 %v265, %v265
    %v282 = vmul.f32 %v266, %v266
    %v283 = vmul.f32 %v267, %v267
    %v284 = vmul.f32 %v268, %v268
    %v285 = vmul.f32 %v269, %v269
    %v286 = vmul.f32 %v270, %v270
    %v287 = vmul.f32 %v271, %v271
    %v288 = vmul.f32 %v272, %v272
    %v289 = vmul.f32 %v273, %v273
    %v290 = vmul.f32 %v274, %v274
    %v291 = vmul.f32 %v275, %v275
    %v292 = vmul.f32 %v276, %v276
    %v293 = vmul.f32 %v277, %v277
    %v294 = vmul.f32 %v278, %v278
    %v295 = vmul.f32 %v279, %v279
    %v296 = vmul.f32 %v280, %v280
    %v297 = vsel %vm199, %v281, 0.0
    %298 = vadd.xlane.f32.xlu0 %v297
    %v299 = vpop.xlane.xlu0 %298
    %v300 = vsel %vm199, %v282, 0.0
    %301 = vadd.xlane.f32.xlu0 %v300
    %v302 = vpop.xlane.xlu0 %301
    %v303 = vsel %vm199, %v283, 0.0
    %304 = vadd.xlane.f32.xlu0 %v303
    %v305 = vpop.xlane.xlu0 %304
    %v306 = vsel %vm199, %v284, 0.0
    %307 = vadd.xlane.f32.xlu0 %v306
    %v308 = vpop.xlane.xlu0 %307
    %v309 = vsel %vm199, %v285, 0.0
    %310 = vadd.xlane.f32.xlu0 %v309
    %v311 = vpop.xlane.xlu0 %310
    %v312 = vsel %vm199, %v286, 0.0
    %313 = vadd.xlane.f32.xlu0 %v312
    %v314 = vpop.xlane.xlu0 %313
    %v315 = vsel %vm199, %v287, 0.0
    %316 = vadd.xlane.f32.xlu0 %v315
    %v317 = vpop.xlane.xlu0 %316
    %v318 = vsel %vm199, %v288, 0.0
    %319 = vadd.xlane.f32.xlu0 %v318
    %v320 = vpop.xlane.xlu0 %319
    %v321 = vsel %vm199, %v289, 0.0
    %322 = vadd.xlane.f32.xlu0 %v321
    %v323 = vpop.xlane.xlu0 %322
    %v324 = vsel %vm199, %v290, 0.0
    %325 = vadd.xlane.f32.xlu0 %v324
    %v326 = vpop.xlane.xlu0 %325
    %v327 = vsel %vm199, %v291, 0.0
    %328 = vadd.xlane.f32.xlu0 %v327
    %v329 = vpop.xlane.xlu0 %328
    %v330 = vsel %vm199, %v292, 0.0
    %331 = vadd.xlane.f32.xlu0 %v330
    %v332 = vpop.xlane.xlu0 %331
    %v333 = vsel %vm199, %v293, 0.0
    %334 = vadd.xlane.f32.xlu0 %v333
    %v335 = vpop.xlane.xlu0 %334
    %v336 = vsel %vm199, %v294, 0.0
    %337 = vadd.xlane.f32.xlu0 %v336
    %v338 = vpop.xlane.xlu0 %337
    %v339 = vsel %vm199, %v295, 0.0
    %340 = vadd.xlane.f32.xlu0 %v339
    %v341 = vpop.xlane.xlu0 %340
    %v342 = vsel %vm199, %v296, 0.0
    %343 = vadd.xlane.f32.xlu0 %v342
    %v344 = vpop.xlane.xlu0 %343
    %v345 = vmul.f32 %v299, %v248
    %v346 = vmul.f32 %v302, %v248
    %v347 = vmul.f32 %v305, %v248
    %v348 = vmul.f32 %v308, %v248
    %v349 = vmul.f32 %v311, %v248
    %v350 = vmul.f32 %v314, %v248
    %v351 = vmul.f32 %v317, %v248
    %v352 = vmul.f32 %v320, %v248
    %v353 = vmul.f32 %v323, %v248
    %v354 = vmul.f32 %v326, %v248
    %v355 = vmul.f32 %v329, %v248
    %v356 = vmul.f32 %v332, %v248
    %v357 = vmul.f32 %v335, %v248
    %v358 = vmul.f32 %v338, %v248
    %v359 = vmul.f32 %v341, %v248
    %v360 = vmul.f32 %v344, %v248
    %v361 = vadd.f32 %v345, 1e-05
    %v362 = vadd.f32 %v346, 1e-05
    %v363 = vadd.f32 %v347, 1e-05
    %v364 = vadd.f32 %v348, 1e-05
    %v365 = vadd.f32 %v349, 1e-05
    %v366 = vadd.f32 %v350, 1e-05
    %v367 = vadd.f32 %v351, 1e-05
    %v368 = vadd.f32 %v352, 1e-05
    %v369 = vadd.f32 %v353, 1e-05
    %v370 = vadd.f32 %v354, 1e-05
    %v371 = vadd.f32 %v355, 1e-05
    %v372 = vadd.f32 %v356, 1e-05
    %v373 = vadd.f32 %v357, 1e-05
    %v374 = vadd.f32 %v358, 1e-05
    %v375 = vadd.f32 %v359, 1e-05
    %v376 = vadd.f32 %v360, 1e-05
    %v377 = vrsqrt.pop %v361
    %v378 = vrsqrt.pop %v362
    %v379 = vrsqrt.pop %v363
    %v380 = vrsqrt.pop %v364
    %v381 = vrsqrt.pop %v365
    %v382 = vrsqrt.pop %v366
    %v383 = vrsqrt.pop %v367
    %v384 = vrsqrt.pop %v368
    %v385 = vrsqrt.pop %v369
    %v386 = vrsqrt.pop %v370
    %v387 = vrsqrt.pop %v371
    %v388 = vrsqrt.pop %v372
    %v389 = vrsqrt.pop %v373
    %v390 = vrsqrt.pop %v374
    %v391 = vrsqrt.pop %v375
    %v392 = vrsqrt.pop %v376
    %v393 = vmul.f32 %v265, %v377
    %v394 = vmul.f32 %v266, %v378
    %v395 = vmul.f32 %v267, %v379
    %v396 = vmul.f32 %v268, %v380
    %v397 = vmul.f32 %v269, %v381
    %v398 = vmul.f32 %v270, %v382
    %v399 = vmul.f32 %v271, %v383
    %v400 = vmul.f32 %v272, %v384
    %v401 = vmul.f32 %v273, %v385
    %v402 = vmul.f32 %v274, %v386
    %v403 = vmul.f32 %v275, %v387
    %v404 = vmul.f32 %v276, %v388
    %v405 = vmul.f32 %v277, %v389
    %v406 = vmul.f32 %v278, %v390
    %v407 = vmul.f32 %v279, %v391
    %v408 = vmul.f32 %v280, %v392
    %v410 = vlaneseq
    %v411 = vshrl.u32 %v410, 7
    %v412 = vsub.s32 0, %v411
    %v413 = vrot.slane %v197, %v412
    %v415 = vmul.f32 %v393, %v413
    %v416 = vmul.f32 %v394, %v413
    %v417 = vmul.f32 %v395, %v413
    %v418 = vmul.f32 %v396, %v413
    %v419 = vmul.f32 %v397, %v413
    %v420 = vmul.f32 %v398, %v413
    %v421 = vmul.f32 %v399, %v413
    %v422 = vmul.f32 %v400, %v413
    %v423 = vmul.f32 %v401, %v413
    %v424 = vmul.f32 %v402, %v413
    %v425 = vmul.f32 %v403, %v413
    %v426 = vmul.f32 %v404, %v413
    %v427 = vmul.f32 %v405, %v413
    %v428 = vmul.f32 %v406, %v413
    %v429 = vmul.f32 %v407, %v413
    %v430 = vmul.f32 %v408, %v413
    %v432 = vlaneseq
    %v433 = vshrl.u32 %v432, 7
    %v434 = vsub.s32 0, %v433
    %v435 = vrot.slane %v198, %v434
    %v437 = vadd.f32 %v415, %v435
    %v438 = vadd.f32 %v416, %v435
    %v439 = vadd.f32 %v417, %v435
    %v440 = vadd.f32 %v418, %v435
    %v441 = vadd.f32 %v419, %v435
    %v442 = vadd.f32 %v420, %v435
    %v443 = vadd.f32 %v421, %v435
    %v444 = vadd.f32 %v422, %v435
    %v445 = vadd.f32 %v423, %v435
    %v446 = vadd.f32 %v424, %v435
    %v447 = vadd.f32 %v425, %v435
    %v448 = vadd.f32 %v426, %v435
    %v449 = vadd.f32 %v427, %v435
    %v450 = vadd.f32 %v428, %v435
    %v451 = vadd.f32 %v429, %v435
    %v452 = vadd.f32 %v430, %v435
    %v453 = vld [vmem:[%s3] sm:$0xff]
    %v454 = vld [vmem:[%s3 + $0x8] sm:$0xff]
    %v455 = vld [vmem:[%s3 + $0x10] sm:$0xff]
    %v456 = vld [vmem:[%s3 + $0x18] sm:$0xff]
    %v457 = vld [vmem:[#allocation6] sm:$0x1]
    %v459 = vlaneseq
    %v460 = vshrl.u32 %v459, 7
    %v461 = vsub.s32 0, %v460
    %v462 = vrot.slane %v457, %v461
    %v465 = vsel %vm199, %v437, 0
    %v468 = vsel %vm199, %v438, 0
    %v471 = vsel %vm199, %v439, 0
    %v474 = vsel %vm199, %v440, 0
    %v477 = vsel %vm199, %v441, 0
    %v480 = vsel %vm199, %v442, 0
    %v483 = vsel %vm199, %v443, 0
    %v486 = vsel %vm199, %v444, 0
    %v489 = vsel %vm199, %v445, 0
    %v492 = vsel %vm199, %v446, 0
    %v495 = vsel %vm199, %v447, 0
    %v498 = vsel %vm199, %v448, 0
    %v501 = vsel %vm199, %v449, 0
    %v504 = vsel %vm199, %v450, 0
    %v507 = vsel %vm199, %v451, 0
    %v510 = vsel %vm199, %v452, 0
    %512 = vmatprep.subr.mxu0 0.0
    %513 = vmatpush1.msra.mxu0 %v453
    %514 = vmatprep.subr.mxu0 0.0
    %515 = vmatpush1.msra.mxu0 %v454
    %516 = vmatprep.subr.mxu0 0.0
    %517 = vmatpush1.msra.mxu0 %v455
    %518 = vmatprep.subr.mxu0 0.0
    %519 = vmatpush1.msra.mxu0 %v456
    %520 = vmatprep.subr.mxu0 0.0
    %521 = vmatpush1.msra.mxu0 0.0
    %522 = vmatprep.subr.mxu0 0.0
    %523 = vmatpush1.msra.mxu0 0.0
    %524 = vmatprep.subr.mxu0 0.0
    %525 = vmatpush1.msra.mxu0 0.0
    %526 = vmatprep.subr.mxu0 0.0
    %527 = vmatpush1.msra.mxu0 0.0
    %528 = vmatprep.subr.mxu0 0.0
    %529 = vmatpush1.msra.mxu0 0.0
    %530 = vmatprep.subr.mxu0 0.0
    %531 = vmatpush1.msra.mxu0 0.0
    %532 = vmatprep.subr.mxu0 0.0
    %533 = vmatpush1.msra.mxu0 0.0
    %534 = vmatprep.subr.mxu0 0.0
    %535 = vmatpush1.msra.mxu0 0.0
    %536 = vmatprep.subr.mxu0 0.0
    %537 = vmatpush1.msra.mxu0 0.0
    %538 = vmatprep.subr.mxu0 0.0
    %539 = vmatpush1.msra.mxu0 0.0
    %540 = vmatprep.subr.mxu0 0.0
    %541 = vmatpush1.msra.mxu0 0.0
    %542 = vmatprep.subr.mxu0 0.0
    %543 = vmatpush1.msra.mxu0 0.0
    %544 = vmatprep.subr.mxu0 0.0
    %545 = vmatpush1.msra.mxu0 0.0
    %546 = vmatprep.subr.mxu0 0.0
    %547 = vmatpush1.msra.mxu0 0.0
    %548 = vmatprep.subr.mxu0 0.0
    %549 = vmatpush1.msra.mxu0 0.0
    %550 = vmatprep.subr.mxu0 0.0
    %551 = vmatpush1.msra.mxu0 0.0
    %552 = vmatprep.subr.mxu0 0.0
    %553 = vmatpush1.msra.mxu0 0.0
    %554 = vmatprep.subr.mxu0 0.0
    %555 = vmatpush1.msra.mxu0 0.0
    %556 = vmatprep.subr.mxu0 0.0
    %557 = vmatpush1.msra.mxu0 0.0
    %558 = vmatprep.subr.mxu0 0.0
    %559 = vmatpush1.msra.mxu0 0.0
    %560 = vmatprep.subr.mxu0 0.0
    %561 = vmatpush1.msra.mxu0 0.0
    %562 = vmatprep.subr.mxu0 0.0
    %563 = vmatpush1.msra.mxu0 0.0
    %564 = vmatprep.subr.mxu0 0.0
    %565 = vmatpush1.msra.mxu0 0.0
    %566 = vmatprep.subr.mxu0 0.0
    %567 = vmatpush1.msra.mxu0 0.0
    %568 = vmatprep.subr.mxu0 0.0
    %569 = vmatpush1.msra.mxu0 0.0
    %570 = vmatprep.subr.mxu0 0.0
    %571 = vmatpush1.msra.mxu0 0.0
    %572 = vmatprep.subr.mxu0 0.0
    %573 = vmatpush1.msra.mxu0 0.0
    %574 = vmatprep.subr.mxu0 0.0
    %575 = vmatpush1.msra.mxu0 0.0
    %576 = vmatprep.mubr.f32.mxu0 0.0
    %577 = vmatmul.mubr.f32.gmra.mrb[0].mxu0 %v465
    %v578 = vpop.f32.mrb[0].mxu0
    %v579 = vadd.f32 %v462, %v578
    %v580 = vpop.f32.mrb[0].mxu0
    %581 = vmatprep.mubr.f32.mxu0 0.0
    %582 = vmatmul.mubr.f32.gmra.mrb[0].mxu0 %v468
    %v583 = vpop.f32.mrb[0].mxu0
    %v584 = vadd.f32 %v462, %v583
    %v585 = vpop.f32.mrb[0].mxu0
    %586 = vmatprep.mubr.f32.mxu0 0.0
    %587 = vmatmul.mubr.f32.gmra.mrb[0].mxu0 %v471
    %v588 = vpop.f32.mrb[0].mxu0
    %v589 = vadd.f32 %v462, %v588
    %v590 = vpop.f32.mrb[0].mxu0
    %591 = vmatprep.mubr.f32.mxu0 0.0
    %592 = vmatmul.mubr.f32.gmra.mrb[0].mxu0 %v474
    %v593 = vpop.f32.mrb[0].mxu0
    %v594 = vadd.f32 %v462, %v593
    %v595 = vpop.f32.mrb[0].mxu0
    %596 = vmatprep.mubr.f32.mxu0 0.0
    %597 = vmatmul.mubr.f32.gmra.mrb[0].mxu0 %v477
    %v598 = vpop.f32.mrb[0].mxu0
    %v599 = vadd.f32 %v462, %v598
    %v600 = vpop.f32.mrb[0].mxu0
    %601 = vmatprep.mubr.f32.mxu0 0.0
    %602 = vmatmul.mubr.f32.gmra.mrb[0].mxu0 %v480
    %v603 = vpop.f32.mrb[0].mxu0
    %v604 = vadd.f32 %v462, %v603
    %v605 = vpop.f32.mrb[0].mxu0
    %606 = vmatprep.mubr.f32.mxu0 0.0
    %607 = vmatmul.mubr.f32.gmra.mrb[0].mxu0 %v483
    %v608 = vpop.f32.mrb[0].mxu0
    %v609 = vadd.f32 %v462, %v608
    %v610 = vpop.f32.mrb[0].mxu0
    %611 = vmatprep.mubr.f32.mxu0 0.0
    %612 = vmatmul.mubr.f32.gmra.mrb[0].mxu0 %v486
    %v613 = vpop.f32.mrb[0].mxu0
    %v614 = vadd.f32 %v462, %v613
    %v615 = vpop.f32.mrb[0].mxu0
    %616 = vmatprep.mubr.f32.mxu0 0.0
    %617 = vmatmul.mubr.f32.gmra.mrb[0].mxu0 %v489
    %v618 = vpop.f32.mrb[0].mxu0
    %v619 = vadd.f32 %v462, %v618
    %v620 = vpop.f32.mrb[0].mxu0
    %621 = vmatprep.mubr.f32.mxu0 0.0
    %622 = vmatmul.mubr.f32.gmra.mrb[0].mxu0 %v492
    %v623 = vpop.f32.mrb[0].mxu0
    %v624 = vadd.f32 %v462, %v623
    %v625 = vpop.f32.mrb[0].mxu0
    %626 = vmatprep.mubr.f32.mxu0 0.0
    %627 = vmatmul.mubr.f32.gmra.mrb[0].mxu0 %v495
    %v628 = vpop.f32.mrb[0].mxu0
    %v629 = vadd.f32 %v462, %v628
    %v630 = vpop.f32.mrb[0].mxu0
    %631 = vmatprep.mubr.f32.mxu0 0.0
    %632 = vmatmul.mubr.f32.gmra.mrb[0].mxu0 %v498
    %v633 = vpop.f32.mrb[0].mxu0
    %v634 = vadd.f32 %v462, %v633
    %v635 = vpop.f32.mrb[0].mxu0
    %636 = vmatprep.mubr.f32.mxu0 0.0
    %637 = vmatmul.mubr.f32.gmra.mrb[0].mxu0 %v501
    %v638 = vpop.f32.mrb[0].mxu0
    %v639 = vadd.f32 %v462, %v638
    %v640 = vpop.f32.mrb[0].mxu0
    %641 = vmatprep.mubr.f32.mxu0 0.0
    %642 = vmatmul.mubr.f32.gmra.mrb[0].mxu0 %v504
    %v643 = vpop.f32.mrb[0].mxu0
    %v644 = vadd.f32 %v462, %v643
    %v645 = vpop.f32.mrb[0].mxu0
    %646 = vmatprep.mubr.f32.mxu0 0.0
    %647 = vmatmul.mubr.f32.gmra.mrb[0].mxu0 %v507
    %v648 = vpop.f32.mrb[0].mxu0
    %v649 = vadd.f32 %v462, %v648
    %v650 = vpop.f32.mrb[0].mxu0
    %651 = vmatprep.mubr.f32.mxu0 0.0
    %652 = vmatmul.mubr.f32.gmra.mrb[0].mxu0 %v510
    %v653 = vpop.f32.mrb[0].mxu0
    %v654 = vadd.f32 %v462, %v653
    %v655 = vpop.f32.mrb[0].mxu0
    %656 = vdwg.mxu0
    %v657 = vld [vmem:[%s5] sm:$0xff]
    %v658 = vld [vmem:[%s5 + $0x8] sm:$0xff]
    %v659 = vld [vmem:[%s5 + $0x10] sm:$0xff]
    %v660 = vld [vmem:[%s5 + $0x18] sm:$0xff]
    %v661 = vld [vmem:[#allocation7] sm:$0x1]
    %v663 = vlaneseq
    %v664 = vshrl.u32 %v663, 7
    %v665 = vsub.s32 0, %v664
    %v666 = vrot.slane %v661, %v665
    %668 = vmatprep.subr.mxu0 0.0
    %669 = vmatpush1.msra.mxu0 %v657
    %670 = vmatprep.subr.mxu0 0.0
    %671 = vmatpush1.msra.mxu0 %v658
    %672 = vmatprep.subr.mxu0 0.0
    %673 = vmatpush1.msra.mxu0 %v659
    %674 = vmatprep.subr.mxu0 0.0
    %675 = vmatpush1.msra.mxu0 %v660
    %676 = vmatprep.subr.mxu0 0.0
    %677 = vmatpush1.msra.mxu0 0.0
    %678 = vmatprep.subr.mxu0 0.0
    %679 = vmatpush1.msra.mxu0 0.0
    %680 = vmatprep.subr.mxu0 0.0
    %681 = vmatpush1.msra.mxu0 0.0
    %682 = vmatprep.subr.mxu0 0.0
    %683 = vmatpush1.msra.mxu0 0.0
    %684 = vmatprep.subr.mxu0 0.0
    %685 = vmatpush1.msra.mxu0 0.0
    %686 = vmatprep.subr.mxu0 0.0
    %687 = vmatpush1.msra.mxu0 0.0
    %688 = vmatprep.subr.mxu0 0.0
    %689 = vmatpush1.msra.mxu0 0.0
    %690 = vmatprep.subr.mxu0 0.0
    %691 = vmatpush1.msra.mxu0 0.0
    %692 = vmatprep.subr.mxu0 0.0
    %693 = vmatpush1.msra.mxu0 0.0
    %694 = vmatprep.subr.mxu0 0.0
    %695 = vmatpush1.msra.mxu0 0.0
    %696 = vmatprep.subr.mxu0 0.0
    %697 = vmatpush1.msra.mxu0 0.0
    %698 = vmatprep.subr.mxu0 0.0
    %699 = vmatpush1.msra.mxu0 0.0
    %700 = vmatprep.subr.mxu0 0.0
    %701 = vmatpush1.msra.mxu0 0.0
    %702 = vmatprep.subr.mxu0 0.0
    %703 = vmatpush1.msra.mxu0 0.0
    %704 = vmatprep.subr.mxu0 0.0
    %705 = vmatpush1.msra.mxu0 0.0
    %706 = vmatprep.subr.mxu0 0.0
    %707 = vmatpush1.msra.mxu0 0.0
    %708 = vmatprep.subr.mxu0 0.0
    %709 = vmatpush1.msra.mxu0 0.0
    %710 = vmatprep.subr.mxu0 0.0
    %711 = vmatpush1.msra.mxu0 0.0
    %712 = vmatprep.subr.mxu0 0.0
    %713 = vmatpush1.msra.mxu0 0.0
    %714 = vmatprep.subr.mxu0 0.0
    %715 = vmatpush1.msra.mxu0 0.0
    %716 = vmatprep.subr.mxu0 0.0
    %717 = vmatpush1.msra.mxu0 0.0
    %718 = vmatprep.subr.mxu0 0.0
    %719 = vmatpush1.msra.mxu0 0.0
    %720 = vmatprep.subr.mxu0 0.0
    %721 = vmatpush1.msra.mxu0 0.0
    %722 = vmatprep.subr.mxu0 0.0
    %723 = vmatpush1.msra.mxu0 0.0
    %724 = vmatprep.subr.mxu0 0.0
    %725 = vmatpush1.msra.mxu0 0.0
    %726 = vmatprep.subr.mxu0 0.0
    %727 = vmatpush1.msra.mxu0 0.0
    %728 = vmatprep.subr.mxu0 0.0
    %729 = vmatpush1.msra.mxu0 0.0
    %730 = vmatprep.subr.mxu0 0.0
    %731 = vmatpush1.msra.mxu0 0.0
    %732 = vmatprep.mubr.f32.mxu0 0.0
    %733 = vmatmul.mubr.f32.gmra.mrb[0].mxu0 %v465
    %v734 = vpop.f32.mrb[0].mxu0
    %v735 = vadd.f32 %v666, %v734
    %v736 = vpop.f32.mrb[0].mxu0
    %737 = vmatprep.mubr.f32.mxu0 0.0
    %738 = vmatmul.mubr.f32.gmra.mrb[0].mxu0 %v468
    %v739 = vpop.f32.mrb[0].mxu0
    %v740 = vadd.f32 %v666, %v739
    %v741 = vpop.f32.mrb[0].mxu0
    %742 = vmatprep.mubr.f32.mxu0 0.0
    %743 = vmatmul.mubr.f32.gmra.mrb[0].mxu0 %v471
    %v744 = vpop.f32.mrb[0].mxu0
    %v745 = vadd.f32 %v666, %v744
    %v746 = vpop.f32.mrb[0].mxu0
    %747 = vmatprep.mubr.f32.mxu0 0.0
    %748 = vmatmul.mubr.f32.gmra.mrb[0].mxu0 %v474
    %v749 = vpop.f32.mrb[0].mxu0
    %v750 = vadd.f32 %v666, %v749
    %v751 = vpop.f32.mrb[0].mxu0
    %752 = vmatprep.mubr.f32.mxu0 0.0
    %753 = vmatmul.mubr.f32.gmra.mrb[0].mxu0 %v477
    %v754 = vpop.f32.mrb[0].mxu0
    %v755 = vadd.f32 %v666, %v754
    %v756 = vpop.f32.mrb[0].mxu0
    %757 = vmatprep.mubr.f32.mxu0 0.0
    %758 = vmatmul.mubr.f32.gmra.mrb[0].mxu0 %v480
    %v759 = vpop.f32.mrb[0].mxu0
    %v760 = vadd.f32 %v666, %v759
    %v761 = vpop.f32.mrb[0].mxu0
    %762 = vmatprep.mubr.f32.mxu0 0.0
    %763 = vmatmul.mubr.f32.gmra.mrb[0].mxu0 %v483
    %v764 = vpop.f32.mrb[0].mxu0
    %v765 = vadd.f32 %v666, %v764
    %v766 = vpop.f32.mrb[0].mxu0
    %767 = vmatprep.mubr.f32.mxu0 0.0
    %768 = vmatmul.mubr.f32.gmra.mrb[0].mxu0 %v486
    %v769 = vpop.f32.mrb[0].mxu0
    %v770 = vadd.f32 %v666, %v769
    %v771 = vpop.f32.mrb[0].mxu0
    %772 = vmatprep.mubr.f32.mxu0 0.0
    %773 = vmatmul.mubr.f32.gmra.mrb[0].mxu0 %v489
    %v774 = vpop.f32.mrb[0].mxu0
    %v775 = vadd.f32 %v666, %v774
    %v776 = vpop.f32.mrb[0].mxu0
    %777 = vmatprep.mubr.f32.mxu0 0.0
    %778 = vmatmul.mubr.f32.gmra.mrb[0].mxu0 %v492
    %v779 = vpop.f32.mrb[0].mxu0
    %v780 = vadd.f32 %v666, %v779
    %v781 = vpop.f32.mrb[0].mxu0
    %782 = vmatprep.mubr.f32.mxu0 0.0
    %783 = vmatmul.mubr.f32.gmra.mrb[0].mxu0 %v495
    %v784 = vpop.f32.mrb[0].mxu0
    %v785 = vadd.f32 %v666, %v784
    %v786 = vpop.f32.mrb[0].mxu0
    %787 = vmatprep.mubr.f32.mxu0 0.0
    %788 = vmatmul.mubr.f32.gmra.mrb[0].mxu0 %v498
    %v789 = vpop.f32.mrb[0].mxu0
    %v790 = vadd.f32 %v666, %v789
    %v791 = vpop.f32.mrb[0].mxu0
    %792 = vmatprep.mubr.f32.mxu0 0.0
    %793 = vmatmul.mubr.f32.gmra.mrb[0].mxu0 %v501
    %v794 = vpop.f32.mrb[0].mxu0
    %v795 = vadd.f32 %v666, %v794
    %v796 = vpop.f32.mrb[0].mxu0
    %797 = vmatprep.mubr.f32.mxu0 0.0
    %798 = vmatmul.mubr.f32.gmra.mrb[0].mxu0 %v504
    %v799 = vpop.f32.mrb[0].mxu0
    %v800 = vadd.f32 %v666, %v799
    %v801 = vpop.f32.mrb[0].mxu0
    %802 = vmatprep.mubr.f32.mxu0 0.0
    %803 = vmatmul.mubr.f32.gmra.mrb[0].mxu0 %v507
    %v804 = vpop.f32.mrb[0].mxu0
    %v805 = vadd.f32 %v666, %v804
    %v806 = vpop.f32.mrb[0].mxu0
    %807 = vmatprep.mubr.f32.mxu0 0.0
    %808 = vmatmul.mubr.f32.gmra.mrb[0].mxu0 %v510
    %v809 = vpop.f32.mrb[0].mxu0
    %v810 = vadd.f32 %v666, %v809
    %v811 = vpop.f32.mrb[0].mxu0
    %812 = vdwg.mxu0
    %v813 = vld [vmem:[%s7] sm:$0xff]
    %v814 = vld [vmem:[%s7 + $0x8] sm:$0xff]
    %v815 = vld [vmem:[%s7 + $0x10] sm:$0xff]
    %v816 = vld [vmem:[%s7 + $0x18] sm:$0xff]
    %v817 = vld [vmem:[#allocation9] sm:$0x1]
    %v819 = vlaneseq
    %v820 = vshrl.u32 %v819, 7
    %v821 = vsub.s32 0, %v820
    %v822 = vrot.slane %v817, %v821
    %v825 = vsel %vm199, %v735, 0
    %v828 = vsel %vm199, %v740, 0
    %v831 = vsel %vm199, %v745, 0
    %v834 = vsel %vm199, %v750, 0
    %v837 = vsel %vm199, %v755, 0
    %v840 = vsel %vm199, %v760, 0
    %v843 = vsel %vm199, %v765, 0
    %v846 = vsel %vm199, %v770, 0
    %v849 = vsel %vm199, %v775, 0
    %v852 = vsel %vm199, %v780, 0
    %v855 = vsel %vm199, %v785, 0
    %v858 = vsel %vm199, %v790, 0
    %v861 = vsel %vm199, %v795, 0
    %v864 = vsel %vm199, %v800, 0
    %v867 = vsel %vm199, %v805, 0
    %v870 = vsel %vm199, %v810, 0
    %872 = vmatprep.subr.mxu0 0.0
    %873 = vmatpush1.msra.mxu0 %v813
    %874 = vmatprep.subr.mxu0 0.0
    %875 = vmatpush1.msra.mxu0 %v814
    %876 = vmatprep.subr.mxu0 0.0
    %877 = vmatpush1.msra.mxu0 %v815
    %878 = vmatprep.subr.mxu0 0.0
    %879 = vmatpush1.msra.mxu0 %v816
    %880 = vmatprep.subr.mxu0 0.0
    %881 = vmatpush1.msra.mxu0 0.0
    %882 = vmatprep.subr.mxu0 0.0
    %883 = vmatpush1.msra.mxu0 0.0
    %884 = vmatprep.subr.mxu0 0.0
    %885 = vmatpush1.msra.mxu0 0.0
    %886 = vmatprep.subr.mxu0 0.0
    %887 = vmatpush1.msra.mxu0 0.0
    %888 = vmatprep.subr.mxu0 0.0
    %889 = vmatpush1.msra.mxu0 0.0
    %890 = vmatprep.subr.mxu0 0.0
    %891 = vmatpush1.msra.mxu0 0.0
    %892 = vmatprep.subr.mxu0 0.0
    %893 = vmatpush1.msra.mxu0 0.0
    %894 = vmatprep.subr.mxu0 0.0
    %895 = vmatpush1.msra.mxu0 0.0
    %896 = vmatprep.subr.mxu0 0.0
    %897 = vmatpush1.msra.mxu0 0.0
    %898 = vmatprep.subr.mxu0 0.0
    %899 = vmatpush1.msra.mxu0 0.0
    %900 = vmatprep.subr.mxu0 0.0
    %901 = vmatpush1.msra.mxu0 0.0
    %902 = vmatprep.subr.mxu0 0.0
    %903 = vmatpush1.msra.mxu0 0.0
    %904 = vmatprep.subr.mxu0 0.0
    %905 = vmatpush1.msra.mxu0 0.0
    %906 = vmatprep.subr.mxu0 0.0
    %907 = vmatpush1.msra.mxu0 0.0
    %908 = vmatprep.subr.mxu0 0.0
    %909 = vmatpush1.msra.mxu0 0.0
    %910 = vmatprep.subr.mxu0 0.0
    %911 = vmatpush1.msra.mxu0 0.0
    %912 = vmatprep.subr.mxu0 0.0
    %913 = vmatpush1.msra.mxu0 0.0
    %914 = vmatprep.subr.mxu0 0.0
    %915 = vmatpush1.msra.mxu0 0.0
    %916 = vmatprep.subr.mxu0 0.0
    %917 = vmatpush1.msra.mxu0 0.0
    %918 = vmatprep.subr.mxu0 0.0
    %919 = vmatpush1.msra.mxu0 0.0
    %920 = vmatprep.subr.mxu0 0.0
    %921 = vmatpush1.msra.mxu0 0.0
    %922 = vmatprep.subr.mxu0 0.0
    %923 = vmatpush1.msra.mxu0 0.0
    %924 = vmatprep.subr.mxu0 0.0
    %925 = vmatpush1.msra.mxu0 0.0
    %926 = vmatprep.subr.mxu0 0.0
    %927 = vmatpush1.msra.mxu0 0.0
    %928 = vmatprep.subr.mxu0 0.0
    %929 = vmatpush1.msra.mxu0 0.0
    %930 = vmatprep.subr.mxu0 0.0
    %931 = vmatpush1.msra.mxu0 0.0
    %932 = vmatprep.subr.mxu0 0.0
    %933 = vmatpush1.msra.mxu0 0.0
    %934 = vmatprep.subr.mxu0 0.0
    %935 = vmatpush1.msra.mxu0 0.0
    %936 = vmatprep.mubr.f32.mxu0 0.0
    %937 = vmatmul.mubr.f32.gmra.mrb[0].mxu0 %v825
    %v938 = vpop.f32.mrb[0].mxu0
    %v939 = vadd.f32 %v822, %v938
    %v940 = vpop.f32.mrb[0].mxu0
    %941 = vmatprep.mubr.f32.mxu0 0.0
    %942 = vmatmul.mubr.f32.gmra.mrb[0].mxu0 %v828
    %v943 = vpop.f32.mrb[0].mxu0
    %v944 = vadd.f32 %v822, %v943
    %v945 = vpop.f32.mrb[0].mxu0
    %946 = vmatprep.mubr.f32.mxu0 0.0
    %947 = vmatmul.mubr.f32.gmra.mrb[0].mxu0 %v831
    %v948 = vpop.f32.mrb[0].mxu0
    %v949 = vadd.f32 %v822, %v948
    %v950 = vpop.f32.mrb[0].mxu0
    %951 = vmatprep.mubr.f32.mxu0 0.0
    %952 = vmatmul.mubr.f32.gmra.mrb[0].mxu0 %v834
    %v953 = vpop.f32.mrb[0].mxu0
    %v954 = vadd.f32 %v822, %v953
    %v955 = vpop.f32.mrb[0].mxu0
    %956 = vmatprep.mubr.f32.mxu0 0.0
    %957 = vmatmul.mubr.f32.gmra.mrb[0].mxu0 %v837
    %v958 = vpop.f32.mrb[0].mxu0
    %v959 = vadd.f32 %v822, %v958
    %v960 = vpop.f32.mrb[0].mxu0
    %961 = vmatprep.mubr.f32.mxu0 0.0
    %962 = vmatmul.mubr.f32.gmra.mrb[0].mxu0 %v840
    %v963 = vpop.f32.mrb[0].mxu0
    %v964 = vadd.f32 %v822, %v963
    %v965 = vpop.f32.mrb[0].mxu0
    %966 = vmatprep.mubr.f32.mxu0 0.0
    %967 = vmatmul.mubr.f32.gmra.mrb[0].mxu0 %v843
    %v968 = vpop.f32.mrb[0].mxu0
    %v969 = vadd.f32 %v822, %v968
    %v970 = vpop.f32.mrb[0].mxu0
    %971 = vmatprep.mubr.f32.mxu0 0.0
    %972 = vmatmul.mubr.f32.gmra.mrb[0].mxu0 %v846
    %v973 = vpop.f32.mrb[0].mxu0
    %v974 = vadd.f32 %v822, %v973
    %v975 = vpop.f32.mrb[0].mxu0
    %976 = vmatprep.mubr.f32.mxu0 0.0
    %977 = vmatmul.mubr.f32.gmra.mrb[0].mxu0 %v849
    %v978 = vpop.f32.mrb[0].mxu0
    %v979 = vadd.f32 %v822, %v978
    %v980 = vpop.f32.mrb[0].mxu0
    %981 = vmatprep.mubr.f32.mxu0 0.0
    %982 = vmatmul.mubr.f32.gmra.mrb[0].mxu0 %v852
    %v983 = vpop.f32.mrb[0].mxu0
    %v984 = vadd.f32 %v822, %v983
    %v985 = vpop.f32.mrb[0].mxu0
    %986 = vmatprep.mubr.f32.mxu0 0.0
    %987 = vmatmul.mubr.f32.gmra.mrb[0].mxu0 %v855
    %v988 = vpop.f32.mrb[0].mxu0
    %v989 = vadd.f32 %v822, %v988
    %v990 = vpop.f32.mrb[0].mxu0
    %991 = vmatprep.mubr.f32.mxu0 0.0
    %992 = vmatmul.mubr.f32.gmra.mrb[0].mxu0 %v858
    %v993 = vpop.f32.mrb[0].mxu0
    %v994 = vadd.f32 %v822, %v993
    %v995 = vpop.f32.mrb[0].mxu0
    %996 = vmatprep.mubr.f32.mxu0 0.0
    %997 = vmatmul.mubr.f32.gmra.mrb[0].mxu0 %v861
    %v998 = vpop.f32.mrb[0].mxu0
    %v999 = vadd.f32 %v822, %v998
    %v1000 = vpop.f32.mrb[0].mxu0
    %1001 = vmatprep.mubr.f32.mxu0 0.0
    %1002 = vmatmul.mubr.f32.gmra.mrb[0].mxu0 %v864
    %v1003 = vpop.f32.mrb[0].mxu0
    %v1004 = vadd.f32 %v822, %v1003
    %v1005 = vpop.f32.mrb[0].mxu0
    %1006 = vmatprep.mubr.f32.mxu0 0.0
    %1007 = vmatmul.mubr.f32.gmra.mrb[0].mxu0 %v867
    %v1008 = vpop.f32.mrb[0].mxu0
    %v1009 = vadd.f32 %v822, %v1008
    %v1010 = vpop.f32.mrb[0].mxu0
    %1011 = vmatprep.mubr.f32.mxu0 0.0
    %1012 = vmatmul.mubr.f32.gmra.mrb[0].mxu0 %v870
    %v1013 = vpop.f32.mrb[0].mxu0
    %v1014 = vadd.f32 %v822, %v1013
    %v1015 = vpop.f32.mrb[0].mxu0
    %1016 = vdwg.mxu0
    %v1017 = vld [vmem:[#allocation10] sm:$0x1]
    %v1019 = vlaneseq
    %v1020 = vshrl.u32 %v1019, 7
    %v1021 = vsub.s32 0, %v1020
    %v1022 = vrot.slane %v1017, %v1021
    %v1024 = vmul.f32 %v939, %v1022
    %v1025 = vmul.f32 %v944, %v1022
    %v1026 = vmul.f32 %v949, %v1022
    %v1027 = vmul.f32 %v954, %v1022
    %v1028 = vmul.f32 %v959, %v1022
    %v1029 = vmul.f32 %v964, %v1022
    %v1030 = vmul.f32 %v969, %v1022
    %v1031 = vmul.f32 %v974, %v1022
    %v1032 = vmul.f32 %v979, %v1022
    %v1033 = vmul.f32 %v984, %v1022
    %v1034 = vmul.f32 %v989, %v1022
    %v1035 = vmul.f32 %v994, %v1022
    %v1036 = vmul.f32 %v999, %v1022
    %v1037 = vmul.f32 %v1004, %v1022
    %v1038 = vmul.f32 %v1009, %v1022
    %v1039 = vmul.f32 %v1014, %v1022
    %vm1040 = vcmask 523264
    %v1041 = vsel %vm1040, %v1024, -inf
    %1042 = vmax.xlane.f32.xlu0 %v1041
    %v1043 = vpop.xlane.xlu0 %1042
    %v1044 = vsel %vm1040, %v1025, -inf
    %1045 = vmax.xlane.f32.xlu0 %v1044
    %v1046 = vpop.xlane.xlu0 %1045
    %v1047 = vsel %vm1040, %v1026, -inf
    %1048 = vmax.xlane.f32.xlu0 %v1047
    %v1049 = vpop.xlane.xlu0 %1048
    %v1050 = vsel %vm1040, %v1027, -inf
    %1051 = vmax.xlane.f32.xlu0 %v1050
    %v1052 = vpop.xlane.xlu0 %1051
    %v1053 = vsel %vm1040, %v1028, -inf
    %1054 = vmax.xlane.f32.xlu0 %v1053
    %v1055 = vpop.xlane.xlu0 %1054
    %v1056 = vsel %vm1040, %v1029, -inf
    %1057 = vmax.xlane.f32.xlu0 %v1056
    %v1058 = vpop.xlane.xlu0 %1057
    %v1059 = vsel %vm1040, %v1030, -inf
    %1060 = vmax.xlane.f32.xlu0 %v1059
    %v1061 = vpop.xlane.xlu0 %1060
    %v1062 = vsel %vm1040, %v1031, -inf
    %1063 = vmax.xlane.f32.xlu0 %v1062
    %v1064 = vpop.xlane.xlu0 %1063
    %v1065 = vsel %vm1040, %v1032, -inf
    %1066 = vmax.xlane.f32.xlu0 %v1065
    %v1067 = vpop.xlane.xlu0 %1066
    %v1068 = vsel %vm1040, %v1033, -inf
    %1069 = vmax.xlane.f32.xlu0 %v1068
    %v1070 = vpop.xlane.xlu0 %1069
    %v1071 = vsel %vm1040, %v1034, -inf
    %1072 = vmax.xlane.f32.xlu0 %v1071
    %v1073 = vpop.xlane.xlu0 %1072
    %v1074 = vsel %vm1040, %v1035, -inf
    %1075 = vmax.xlane.f32.xlu0 %v1074
    %v1076 = vpop.xlane.xlu0 %1075
    %v1077 = vsel %vm1040, %v1036, -inf
    %1078 = vmax.xlane.f32.xlu0 %v1077
    %v1079 = vpop.xlane.xlu0 %1078
    %v1080 = vsel %vm1040, %v1037, -inf
    %1081 = vmax.xlane.f32.xlu0 %v1080
    %v1082 = vpop.xlane.xlu0 %1081
    %v1083 = vsel %vm1040, %v1038, -inf
    %1084 = vmax.xlane.f32.xlu0 %v1083
    %v1085 = vpop.xlane.xlu0 %1084
    %v1086 = vsel %vm1040, %v1039, -inf
    %1087 = vmax.xlane.f32.xlu0 %v1086
    %v1088 = vpop.xlane.xlu0 %1087
    %v1089 = vsub.f32 %v1024, %v1043
    %v1090 = vsub.f32 %v1025, %v1046
    %v1091 = vsub.f32 %v1026, %v1049
    %v1092 = vsub.f32 %v1027, %v1052
    %v1093 = vsub.f32 %v1028, %v1055
    %v1094 = vsub.f32 %v1029, %v1058
    %v1095 = vsub.f32 %v1030, %v1061
    %v1096 = vsub.f32 %v1031, %v1064
    %v1097 = vsub.f32 %v1032, %v1067
    %v1098 = vsub.f32 %v1033, %v1070
    %v1099 = vsub.f32 %v1034, %v1073
    %v1100 = vsub.f32 %v1035, %v1076
    %v1101 = vsub.f32 %v1036, %v1079
    %v1102 = vsub.f32 %v1037, %v1082
    %v1103 = vsub.f32 %v1038, %v1085
    %v1104 = vsub.f32 %v1039, %v1088
    %v1105 = vmul.f32 %v1089, 1.442695
    %v1106 = vpow.pop %v1105
    %v1107 = vmul.f32 %v1090, 1.442695
    %v1108 = vpow.pop %v1107
    %v1109 = vmul.f32 %v1091, 1.442695
    %v1110 = vpow.pop %v1109
    %v1111 = vmul.f32 %v1092, 1.442695
    %v1112 = vpow.pop %v1111
    %v1113 = vmul.f32 %v1093, 1.442695
    %v1114 = vpow.pop %v1113
    %v1115 = vmul.f32 %v1094, 1.442695
    %v1116 = vpow.pop %v1115
    %v1117 = vmul.f32 %v1095, 1.442695
    %v1118 = vpow.pop %v1117
    %v1119 = vmul.f32 %v1096, 1.442695
    %v1120 = vpow.pop %v1119
    %v1121 = vmul.f32 %v1097, 1.442695
    %v1122 = vpow.pop %v1121
    %v1123 = vmul.f32 %v1098, 1.442695
    %v1124 = vpow.pop %v1123
    %v1125 = vmul.f32 %v1099, 1.442695
    %v1126 = vpow.pop %v1125
    %v1127 = vmul.f32 %v1100, 1.442695
    %v1128 = vpow.pop %v1127
    %v1129 = vmul.f32 %v1101, 1.442695
    %v1130 = vpow.pop %v1129
    %v1131 = vmul.f32 %v1102, 1.442695
    %v1132 = vpow.pop %v1131
    %v1133 = vmul.f32 %v1103, 1.442695
    %v1134 = vpow.pop %v1133
    %v1135 = vmul.f32 %v1104, 1.442695
    %v1136 = vpow.pop %v1135
    %v1137 = vld [vmem:[%s21] sm:$0xff]
    %v1138 = vld [vmem:[%s21 + $0x8] sm:$0xff]
    %v1139 = vld [vmem:[%s21 + $0x10] sm:$0xff]
    %v1140 = vld [vmem:[%s21 + $0x18] sm:$0xff]
    %v1141 = vld [vmem:[%s21 + $0x20] sm:$0xff]
    %v1142 = vld [vmem:[%s21 + $0x28] sm:$0xff]
    %v1143 = vld [vmem:[%s21 + $0x30] sm:$0xff]
    %v1144 = vld [vmem:[%s21 + $0x38] sm:$0xff]
    %v1146 = vsel %vm1040, %v1106, 0
    %v1149 = vsel %vm1040, %v1108, 0
    %v1152 = vsel %vm1040, %v1110, 0
    %v1155 = vsel %vm1040, %v1112, 0
    %v1158 = vsel %vm1040, %v1114, 0
    %v1161 = vsel %vm1040, %v1116, 0
    %v1164 = vsel %vm1040, %v1118, 0
    %v1167 = vsel %vm1040, %v1120, 0
    %v1170 = vsel %vm1040, %v1122, 0
    %v1173 = vsel %vm1040, %v1124, 0
    %v1176 = vsel %vm1040, %v1126, 0
    %v1179 = vsel %vm1040, %v1128, 0
    %v1182 = vsel %vm1040, %v1130, 0
    %v1185 = vsel %vm1040, %v1132, 0
    %v1188 = vsel %vm1040, %v1134, 0
    %v1191 = vsel %vm1040, %v1136, 0
    %1193 = vmatprep.subr.mxu0 0.0
    %1194 = vmatpush1.msra.mxu0 %v1137
    %1195 = vmatprep.subr.mxu0 0.0
    %1196 = vmatpush1.msra.mxu0 %v1138
    %1197 = vmatprep.subr.mxu0 0.0
    %1198 = vmatpush1.msra.mxu0 %v1139
    %1199 = vmatprep.subr.mxu0 0.0
    %1200 = vmatpush1.msra.mxu0 %v1140
    %1201 = vmatprep.subr.mxu0 0.0
    %1202 = vmatpush1.msra.mxu0 %v1141
    %1203 = vmatprep.subr.mxu0 0.0
    %1204 = vmatpush1.msra.mxu0 %v1142
    %1205 = vmatprep.subr.mxu0 0.0
    %1206 = vmatpush1.msra.mxu0 %v1143
    %1207 = vmatprep.subr.mxu0 0.0
    %1208 = vmatpush1.msra.mxu0 %v1144
    %1209 = vmatprep.subr.mxu0 0.0
    %1210 = vmatpush1.msra.mxu0 0.0
    %1211 = vmatprep.subr.mxu0 0.0
    %1212 = vmatpush1.msra.mxu0 0.0
    %1213 = vmatprep.subr.mxu0 0.0
    %1214 = vmatpush1.msra.mxu0 0.0
    %1215 = vmatprep.subr.mxu0 0.0
    %1216 = vmatpush1.msra.mxu0 0.0
    %1217 = vmatprep.subr.mxu0 0.0
    %1218 = vmatpush1.msra.mxu0 0.0
    %1219 = vmatprep.subr.mxu0 0.0
    %1220 = vmatpush1.msra.mxu0 0.0
    %1221 = vmatprep.subr.mxu0 0.0
    %1222 = vmatpush1.msra.mxu0 0.0
    %1223 = vmatprep.subr.mxu0 0.0
    %1224 = vmatpush1.msra.mxu0 0.0
    %1225 = vmatprep.subr.mxu0 0.0
    %1226 = vmatpush1.msra.mxu0 0.0
    %1227 = vmatprep.subr.mxu0 0.0
    %1228 = vmatpush1.msra.mxu0 0.0
    %1229 = vmatprep.subr.mxu0 0.0
    %1230 = vmatpush1.msra.mxu0 0.0
    %1231 = vmatprep.subr.mxu0 0.0
    %1232 = vmatpush1.msra.mxu0 0.0
    %1233 = vmatprep.subr.mxu0 0.0
    %1234 = vmatpush1.msra.mxu0 0.0
    %1235 = vmatprep.subr.mxu0 0.0
    %1236 = vmatpush1.msra.mxu0 0.0
    %1237 = vmatprep.subr.mxu0 0.0
    %1238 = vmatpush1.msra.mxu0 0.0
    %1239 = vmatprep.subr.mxu0 0.0
    %1240 = vmatpush1.msra.mxu0 0.0
    %1241 = vmatprep.subr.mxu0 0.0
    %1242 = vmatpush1.msra.mxu0 0.0
    %1243 = vmatprep.subr.mxu0 0.0
    %1244 = vmatpush1.msra.mxu0 0.0
    %1245 = vmatprep.subr.mxu0 0.0
    %1246 = vmatpush1.msra.mxu0 0.0
    %1247 = vmatprep.subr.mxu0 0.0
    %1248 = vmatpush1.msra.mxu0 0.0
    %1249 = vmatprep.subr.mxu0 0.0
    %1250 = vmatpush1.msra.mxu0 0.0
    %1251 = vmatprep.subr.mxu0 0.0
    %1252 = vmatpush1.msra.mxu0 0.0
    %1253 = vmatprep.subr.mxu0 0.0
    %1254 = vmatpush1.msra.mxu0 0.0
    %1255 = vmatprep.subr.mxu0 0.0
    %1256 = vmatpush1.msra.mxu0 0.0
    %1257 = vmatprep.mubr.f32.mxu0 0.0
    %1258 = vmatmul.mubr.f32.gmra.mrb[0].mxu0 %v1146
    %v1259 = vpop.f32.mrb[0].mxu0
    %v1260 = vadd.f32 0.0, %v1259
    %v1261 = vpop.f32.mrb[0].mxu0
    %1262 = vmatprep.mubr.f32.mxu0 0.0
    %1263 = vmatmul.mubr.f32.gmra.mrb[0].mxu0 %v1149
    %v1264 = vpop.f32.mrb[0].mxu0
    %v1265 = vadd.f32 0.0, %v1264
    %v1266 = vpop.f32.mrb[0].mxu0
    %1267 = vmatprep.mubr.f32.mxu0 0.0
    %1268 = vmatmul.mubr.f32.gmra.mrb[0].mxu0 %v1152
    %v1269 = vpop.f32.mrb[0].mxu0
    %v1270 = vadd.f32 0.0, %v1269
    %v1271 = vpop.f32.mrb[0].mxu0
    %1272 = vmatprep.mubr.f32.mxu0 0.0
    %1273 = vmatmul.mubr.f32.gmra.mrb[0].mxu0 %v1155
    %v1274 = vpop.f32.mrb[0].mxu0
    %v1275 = vadd.f32 0.0, %v1274
    %v1276 = vpop.f32.mrb[0].mxu0
    %1277 = vmatprep.mubr.f32.mxu0 0.0
    %1278 = vmatmul.mubr.f32.gmra.mrb[0].mxu0 %v1158
    %v1279 = vpop.f32.mrb[0].mxu0
    %v1280 = vadd.f32 0.0, %v1279
    %v1281 = vpop.f32.mrb[0].mxu0
    %1282 = vmatprep.mubr.f32.mxu0 0.0
    %1283 = vmatmul.mubr.f32.gmra.mrb[0].mxu0 %v1161
    %v1284 = vpop.f32.mrb[0].mxu0
    %v1285 = vadd.f32 0.0, %v1284
    %v1286 = vpop.f32.mrb[0].mxu0
    %1287 = vmatprep.mubr.f32.mxu0 0.0
    %1288 = vmatmul.mubr.f32.gmra.mrb[0].mxu0 %v1164
    %v1289 = vpop.f32.mrb[0].mxu0
    %v1290 = vadd.f32 0.0, %v1289
    %v1291 = vpop.f32.mrb[0].mxu0
    %1292 = vmatprep.mubr.f32.mxu0 0.0
    %1293 = vmatmul.mubr.f32.gmra.mrb[0].mxu0 %v1167
    %v1294 = vpop.f32.mrb[0].mxu0
    %v1295 = vadd.f32 0.0, %v1294
    %v1296 = vpop.f32.mrb[0].mxu0
    %1297 = vmatprep.mubr.f32.mxu0 0.0
    %1298 = vmatmul.mubr.f32.gmra.mrb[0].mxu0 %v1170
    %v1299 = vpop.f32.mrb[0].mxu0
    %v1300 = vadd.f32 0.0, %v1299
    %v1301 = vpop.f32.mrb[0].mxu0
    %1302 = vmatprep.mubr.f32.mxu0 0.0
    %1303 = vmatmul.mubr.f32.gmra.mrb[0].mxu0 %v1173
    %v1304 = vpop.f32.mrb[0].mxu0
    %v1305 = vadd.f32 0.0, %v1304
    %v1306 = vpop.f32.mrb[0].mxu0
    %1307 = vmatprep.mubr.f32.mxu0 0.0
    %1308 = vmatmul.mubr.f32.gmra.mrb[0].mxu0 %v1176
    %v1309 = vpop.f32.mrb[0].mxu0
    %v1310 = vadd.f32 0.0, %v1309
    %v1311 = vpop.f32.mrb[0].mxu0
    %1312 = vmatprep.mubr.f32.mxu0 0.0
    %1313 = vmatmul.mubr.f32.gmra.mrb[0].mxu0 %v1179
    %v1314 = vpop.f32.mrb[0].mxu0
    %v1315 = vadd.f32 0.0, %v1314
    %v1316 = vpop.f32.mrb[0].mxu0
    %1317 = vmatprep.mubr.f32.mxu0 0.0
    %1318 = vmatmul.mubr.f32.gmra.mrb[0].mxu0 %v1182
    %v1319 = vpop.f32.mrb[0].mxu0
    %v1320 = vadd.f32 0.0, %v1319
    %v1321 = vpop.f32.mrb[0].mxu0
    %1322 = vmatprep.mubr.f32.mxu0 0.0
    %1323 = vmatmul.mubr.f32.gmra.mrb[0].mxu0 %v1185
    %v1324 = vpop.f32.mrb[0].mxu0
    %v1325 = vadd.f32 0.0, %v1324
    %v1326 = vpop.f32.mrb[0].mxu0
    %1327 = vmatprep.mubr.f32.mxu0 0.0
    %1328 = vmatmul.mubr.f32.gmra.mrb[0].mxu0 %v1188
    %v1329 = vpop.f32.mrb[0].mxu0
    %v1330 = vadd.f32 0.0, %v1329
    %v1331 = vpop.f32.mrb[0].mxu0
    %1332 = vmatprep.mubr.f32.mxu0 0.0
    %1333 = vmatmul.mubr.f32.gmra.mrb[0].mxu0 %v1191
    %v1334 = vpop.f32.mrb[0].mxu0
    %v1335 = vadd.f32 0.0, %v1334
    %v1336 = vpop.f32.mrb[0].mxu0
    %1337 = vdwg.mxu0
    %v1338 = vrcp.pop %v1260
    %v1339 = vrcp.pop %v1265
    %v1340 = vrcp.pop %v1270
    %v1341 = vrcp.pop %v1275
    %v1342 = vrcp.pop %v1280
    %v1343 = vrcp.pop %v1285
    %v1344 = vrcp.pop %v1290
    %v1345 = vrcp.pop %v1295
    %v1346 = vrcp.pop %v1300
    %v1347 = vrcp.pop %v1305
    %v1348 = vrcp.pop %v1310
    %v1349 = vrcp.pop %v1315
    %v1350 = vrcp.pop %v1320
    %v1351 = vrcp.pop %v1325
    %v1352 = vrcp.pop %v1330
    %v1353 = vrcp.pop %v1335
    %v1354 = vmul.f32 %v1106, %v1338
    %v1355 = vmul.f32 %v1108, %v1339
    %v1356 = vmul.f32 %v1110, %v1340
    %v1357 = vmul.f32 %v1112, %v1341
    %v1358 = vmul.f32 %v1114, %v1342
    %v1359 = vmul.f32 %v1116, %v1343
    %v1360 = vmul.f32 %v1118, %v1344
    %v1361 = vmul.f32 %v1120, %v1345
    %v1362 = vmul.f32 %v1122, %v1346
    %v1363 = vmul.f32 %v1124, %v1347
    %v1364 = vmul.f32 %v1126, %v1348
    %v1365 = vmul.f32 %v1128, %v1349
    %v1366 = vmul.f32 %v1130, %v1350
    %v1367 = vmul.f32 %v1132, %v1351
    %v1368 = vmul.f32 %v1134, %v1352
    %v1369 = vmul.f32 %v1136, %v1353
    %v1370 = vld [vmem:[%s23] sm:$0xff]
    %v1371 = vld [vmem:[%s23 + $0x8] sm:$0xff]
    %v1372 = vld [vmem:[%s23 + $0x10] sm:$0xff]
    %v1373 = vld [vmem:[%s23 + $0x18] sm:$0xff]
    %v1374 = vld [vmem:[%s23 + $0x20] sm:$0xff]
    %v1375 = vld [vmem:[%s23 + $0x28] sm:$0xff]
    %v1376 = vld [vmem:[%s23 + $0x30] sm:$0xff]
    %v1377 = vld [vmem:[%s23 + $0x38] sm:$0xff]
    %v1378 = vld [vmem:[%s22] sm:$0xff]
    %v1379 = vld [vmem:[%s22 + $0x8] sm:$0xff]
    %v1380 = vld [vmem:[%s22 + $0x10] sm:$0xff]
    %v1381 = vld [vmem:[%s22 + $0x18] sm:$0xff]
    %v1382 = vld [vmem:[%s22 + $0x20] sm:$0xff]
    %v1383 = vld [vmem:[%s22 + $0x28] sm:$0xff]
    %v1384 = vld [vmem:[%s22 + $0x30] sm:$0xff]
    %v1385 = vld [vmem:[%s22 + $0x38] sm:$0xff]
    %v1386 = vld [vmem:[%s10] sm:$0xff]
    %v1387 = vld [vmem:[%s10 + $0x8] sm:$0xff]
    %v1388 = vld [vmem:[%s10 + $0x10] sm:$0xff]
    %v1389 = vld [vmem:[%s10 + $0x18] sm:$0xff]
    %v1390 = vld [vmem:[%s11] sm:$0xff]
    %v1391 = vld [vmem:[%s11 + $0x8] sm:$0xff]
    %v1392 = vld [vmem:[%s11 + $0x10] sm:$0xff]
    %v1393 = vld [vmem:[%s11 + $0x18] sm:$0xff]
    %v1394 = vld [vmem:[%s12] sm:$0xff]
    %v1395 = vld [vmem:[%s12 + $0x8] sm:$0xff]
    %v1396 = vld [vmem:[%s12 + $0x10] sm:$0xff]
    %v1397 = vld [vmem:[%s12 + $0x18] sm:$0xff]
    %v1398 = vsel %vm1040, %v1354, 0.0
    %v1399 = vsel %vm1040, %v1355, 0.0
    %v1400 = vadd.f32 %v1398, %v1399
    %v1401 = vsel %vm1040, %v1356, 0.0
    %v1402 = vadd.f32 %v1400, %v1401
    %v1403 = vsel %vm1040, %v1357, 0.0
    %v1404 = vadd.f32 %v1402, %v1403
    %v1405 = vsel %vm1040, %v1358, 0.0
    %v1406 = vadd.f32 %v1404, %v1405
    %v1407 = vsel %vm1040, %v1359, 0.0
    %v1408 = vadd.f32 %v1406, %v1407
    %v1409 = vsel %vm1040, %v1360, 0.0
    %v1410 = vadd.f32 %v1408, %v1409
    %v1411 = vsel %vm1040, %v1361, 0.0
    %v1412 = vadd.f32 %v1410, %v1411
    %v1413 = vrot.slane %v1412, 4
    %v1414 = vadd.f32 %v1412, %v1413
    %v1415 = vrot.slane %v1414, 2
    %v1416 = vadd.f32 %v1414, %v1415
    %v1417 = vrot.slane %v1416, 1
    %v1418 = vadd.f32 %v1416, %v1417
    %v1419 = vadd.f32 %v1418, 1e-05
    %v1420 = vrcp.pop %v1419
    %v1421 = vmul.f32 %v1354, %v1420
    %v1422 = vmul.f32 %v1355, %v1420
    %v1423 = vmul.f32 %v1356, %v1420
    %v1424 = vmul.f32 %v1357, %v1420
    %v1425 = vmul.f32 %v1358, %v1420
    %v1426 = vmul.f32 %v1359, %v1420
    %v1427 = vmul.f32 %v1360, %v1420
    %v1428 = vmul.f32 %v1361, %v1420
    %1429 = vxpose.xlu0.b32.start [1/16] %v1421, 128
    %1430 = vxpose.xlu0.b32.cont [2/16] %v1422, 128
    %1431 = vxpose.xlu0.b32.cont [3/16] %v1423, 128
    %1432 = vxpose.xlu0.b32.cont [4/16] %v1424, 128
    %1433 = vxpose.xlu0.b32.cont [5/16] %v1425, 128
    %1434 = vxpose.xlu0.b32.cont [6/16] %v1426, 128
    %1435 = vxpose.xlu0.b32.cont [7/16] %v1427, 128
    %1436 = vxpose.xlu0.b32.cont [8/16] %v1428, 128
    %1437 = vxpose.xlu0.b32.cont [9/16] 0.0, 128
    %1438 = vxpose.xlu0.b32.cont [10/16] 0.0, 128
    %1439 = vxpose.xlu0.b32.cont [11/16] 0.0, 128
    %1440 = vxpose.xlu0.b32.cont [12/16] 0.0, 128
    %1441 = vxpose.xlu0.b32.cont [13/16] 0.0, 128
    %1442 = vxpose.xlu0.b32.cont [14/16] 0.0, 128
    %1443 = vxpose.xlu0.b32.cont [15/16] 0.0, 128
    %1444 = vxpose.xlu0.b32.end [16/16] 0.0, 128
    %v1445 = vpop.trf.xlu0
    %v1446 = vpop.trf.xlu0
    %v1447 = vpop.trf.xlu0
    %v1448 = vpop.trf.xlu0
    %v1449 = vpop.trf.xlu0
    %v1450 = vpop.trf.xlu0
    %v1451 = vpop.trf.xlu0
    %v1452 = vpop.trf.xlu0
    %v1453 = vpop.trf.xlu0
    %v1454 = vpop.trf.xlu0
    %v1455 = vpop.trf.xlu0
    %v1456 = vpop.trf.xlu0
    %v1457 = vpop.trf.xlu0
    %v1458 = vpop.trf.xlu0
    %v1459 = vpop.trf.xlu0
    %v1460 = vpop.trf.xlu0
    %v1462 = vsel %vm1040, %v1445, 0
    %v1465 = vsel %vm1040, %v1446, 0
    %v1468 = vsel %vm1040, %v1447, 0
    %v1471 = vsel %vm1040, %v1448, 0
    %v1474 = vsel %vm1040, %v1449, 0
    %v1477 = vsel %vm1040, %v1450, 0
    %v1480 = vsel %vm1040, %v1451, 0
    %v1483 = vsel %vm1040, %v1452, 0
    %1485 = vmatprep.subr.mxu0 0.0
    %1486 = vmatpush1.msra.mxu0 %v579
    %1487 = vmatprep.subr.mxu0 0.0
    %1488 = vmatpush1.msra.mxu0 %v584
    %1489 = vmatprep.subr.mxu0 0.0
    %1490 = vmatpush1.msra.mxu0 %v589
    %1491 = vmatprep.subr.mxu0 0.0
    %1492 = vmatpush1.msra.mxu0 %v594
    %1493 = vmatprep.subr.mxu0 0.0
    %1494 = vmatpush1.msra.mxu0 %v599
    %1495 = vmatprep.subr.mxu0 0.0
    %1496 = vmatpush1.msra.mxu0 %v604
    %1497 = vmatprep.subr.mxu0 0.0
    %1498 = vmatpush1.msra.mxu0 %v609
    %1499 = vmatprep.subr.mxu0 0.0
    %1500 = vmatpush1.msra.mxu0 %v614
    %1501 = vmatprep.subr.mxu0 0.0
    %1502 = vmatpush1.msra.mxu0 0.0
    %1503 = vmatprep.subr.mxu0 0.0
    %1504 = vmatpush1.msra.mxu0 0.0
    %1505 = vmatprep.subr.mxu0 0.0
    %1506 = vmatpush1.msra.mxu0 0.0
    %1507 = vmatprep.subr.mxu0 0.0
    %1508 = vmatpush1.msra.mxu0 0.0
    %1509 = vmatprep.subr.mxu0 0.0
    %1510 = vmatpush1.msra.mxu0 0.0
    %1511 = vmatprep.subr.mxu0 0.0
    %1512 = vmatpush1.msra.mxu0 0.0
    %1513 = vmatprep.subr.mxu0 0.0
    %1514 = vmatpush1.msra.mxu0 0.0
    %1515 = vmatprep.subr.mxu0 0.0
    %1516 = vmatpush1.msra.mxu0 0.0
    %1517 = vmatprep.subr.mxu0 0.0
    %1518 = vmatpush1.msra.mxu0 0.0
    %1519 = vmatprep.subr.mxu0 0.0
    %1520 = vmatpush1.msra.mxu0 0.0
    %1521 = vmatprep.subr.mxu0 0.0
    %1522 = vmatpush1.msra.mxu0 0.0
    %1523 = vmatprep.subr.mxu0 0.0
    %1524 = vmatpush1.msra.mxu0 0.0
    %1525 = vmatprep.subr.mxu0 0.0
    %1526 = vmatpush1.msra.mxu0 0.0
    %1527 = vmatprep.subr.mxu0 0.0
    %1528 = vmatpush1.msra.mxu0 0.0
    %1529 = vmatprep.subr.mxu0 0.0
    %1530 = vmatpush1.msra.mxu0 0.0
    %1531 = vmatprep.subr.mxu0 0.0
    %1532 = vmatpush1.msra.mxu0 0.0
    %1533 = vmatprep.subr.mxu0 0.0
    %1534 = vmatpush1.msra.mxu0 0.0
    %1535 = vmatprep.subr.mxu0 0.0
    %1536 = vmatpush1.msra.mxu0 0.0
    %1537 = vmatprep.subr.mxu0 0.0
    %1538 = vmatpush1.msra.mxu0 0.0
    %1539 = vmatprep.subr.mxu0 0.0
    %1540 = vmatpush1.msra.mxu0 0.0
    %1541 = vmatprep.subr.mxu0 0.0
    %1542 = vmatpush1.msra.mxu0 0.0
    %1543 = vmatprep.subr.mxu0 0.0
    %1544 = vmatpush1.msra.mxu0 0.0
    %1545 = vmatprep.subr.mxu0 0.0
    %1546 = vmatpush1.msra.mxu0 0.0
    %1547 = vmatprep.subr.mxu0 0.0
    %1548 = vmatpush1.msra.mxu0 0.0
    %1549 = vmatprep.mubr.f32.mxu0 0.0
    %1550 = vmatmul.mubr.f32.gmra.mrb[0].mxu0 %v1462
    %v1551 = vpop.f32.mrb[0].mxu0
    %v1552 = vadd.f32 0.0, %v1551
    %v1553 = vpop.f32.mrb[0].mxu0
    %1554 = vmatprep.mubr.f32.mxu0 0.0
    %1555 = vmatmul.mubr.f32.gmra.mrb[0].mxu0 %v1465
    %v1556 = vpop.f32.mrb[0].mxu0
    %v1557 = vadd.f32 0.0, %v1556
    %v1558 = vpop.f32.mrb[0].mxu0
    %1559 = vmatprep.mubr.f32.mxu0 0.0
    %1560 = vmatmul.mubr.f32.gmra.mrb[0].mxu0 %v1468
    %v1561 = vpop.f32.mrb[0].mxu0
    %v1562 = vadd.f32 0.0, %v1561
    %v1563 = vpop.f32.mrb[0].mxu0
    %1564 = vmatprep.mubr.f32.mxu0 0.0
    %1565 = vmatmul.mubr.f32.gmra.mrb[0].mxu0 %v1471
    %v1566 = vpop.f32.mrb[0].mxu0
    %v1567 = vadd.f32 0.0, %v1566
    %v1568 = vpop.f32.mrb[0].mxu0
    %1569 = vmatprep.mubr.f32.mxu0 0.0
    %1570 = vmatmul.mubr.f32.gmra.mrb[0].mxu0 %v1474
    %v1571 = vpop.f32.mrb[0].mxu0
    %v1572 = vadd.f32 0.0, %v1571
    %v1573 = vpop.f32.mrb[0].mxu0
    %1574 = vmatprep.mubr.f32.mxu0 0.0
    %1575 = vmatmul.mubr.f32.gmra.mrb[0].mxu0 %v1477
    %v1576 = vpop.f32.mrb[0].mxu0
    %v1577 = vadd.f32 0.0, %v1576
    %v1578 = vpop.f32.mrb[0].mxu0
    %1579 = vmatprep.mubr.f32.mxu0 0.0
    %1580 = vmatmul.mubr.f32.gmra.mrb[0].mxu0 %v1480
    %v1581 = vpop.f32.mrb[0].mxu0
    %v1582 = vadd.f32 0.0, %v1581
    %v1583 = vpop.f32.mrb[0].mxu0
    %1584 = vmatprep.mubr.f32.mxu0 0.0
    %1585 = vmatmul.mubr.f32.gmra.mrb[0].mxu0 %v1483
    %v1586 = vpop.f32.mrb[0].mxu0
    %v1587 = vadd.f32 0.0, %v1586
    %v1588 = vpop.f32.mrb[0].mxu0
    %1589 = vdwg.mxu0
    %v1591 = vsel %vm199, %v1552, 0
    %v1594 = vsel %vm199, %v1557, 0
    %v1597 = vsel %vm199, %v1562, 0
    %v1600 = vsel %vm199, %v1567, 0
    %v1603 = vsel %vm199, %v1572, 0
    %v1606 = vsel %vm199, %v1577, 0
    %v1609 = vsel %vm199, %v1582, 0
    %v1612 = vsel %vm199, %v1587, 0
    %1614 = vmatprep.subr.mxu0 0.0
    %1615 = vmatpush1.msra.mxu0 %v1386
    %1616 = vmatprep.subr.mxu0 0.0
    %1617 = vmatpush1.msra.mxu0 %v1387
    %1618 = vmatprep.subr.mxu0 0.0
    %1619 = vmatpush1.msra.mxu0 %v1388
    %1620 = vmatprep.subr.mxu0 0.0
    %1621 = vmatpush1.msra.mxu0 %v1389
    %1622 = vmatprep.subr.mxu0 0.0
    %1623 = vmatpush1.msra.mxu0 0.0
    %1624 = vmatprep.subr.mxu0 0.0
    %1625 = vmatpush1.msra.mxu0 0.0
    %1626 = vmatprep.subr.mxu0 0.0
    %1627 = vmatpush1.msra.mxu0 0.0
    %1628 = vmatprep.subr.mxu0 0.0
    %1629 = vmatpush1.msra.mxu0 0.0
    %1630 = vmatprep.subr.mxu0 0.0
    %1631 = vmatpush1.msra.mxu0 0.0
    %1632 = vmatprep.subr.mxu0 0.0
    %1633 = vmatpush1.msra.mxu0 0.0
    %1634 = vmatprep.subr.mxu0 0.0
    %1635 = vmatpush1.msra.mxu0 0.0
    %1636 = vmatprep.subr.mxu0 0.0
    %1637 = vmatpush1.msra.mxu0 0.0
    %1638 = vmatprep.subr.mxu0 0.0
    %1639 = vmatpush1.msra.mxu0 0.0
    %1640 = vmatprep.subr.mxu0 0.0
    %1641 = vmatpush1.msra.mxu0 0.0
    %1642 = vmatprep.subr.mxu0 0.0
    %1643 = vmatpush1.msra.mxu0 0.0
    %1644 = vmatprep.subr.mxu0 0.0
    %1645 = vmatpush1.msra.mxu0 0.0
    %1646 = vmatprep.subr.mxu0 0.0
    %1647 = vmatpush1.msra.mxu0 0.0
    %1648 = vmatprep.subr.mxu0 0.0
    %1649 = vmatpush1.msra.mxu0 0.0
    %1650 = vmatprep.subr.mxu0 0.0
    %1651 = vmatpush1.msra.mxu0 0.0
    %1652 = vmatprep.subr.mxu0 0.0
    %1653 = vmatpush1.msra.mxu0 0.0
    %1654 = vmatprep.subr.mxu0 0.0
    %1655 = vmatpush1.msra.mxu0 0.0
    %1656 = vmatprep.subr.mxu0 0.0
    %1657 = vmatpush1.msra.mxu0 0.0
    %1658 = vmatprep.subr.mxu0 0.0
    %1659 = vmatpush1.msra.mxu0 0.0
    %1660 = vmatprep.subr.mxu0 0.0
    %1661 = vmatpush1.msra.mxu0 0.0
    %1662 = vmatprep.subr.mxu0 0.0
    %1663 = vmatpush1.msra.mxu0 0.0
    %1664 = vmatprep.subr.mxu0 0.0
    %1665 = vmatpush1.msra.mxu0 0.0
    %1666 = vmatprep.subr.mxu0 0.0
    %1667 = vmatpush1.msra.mxu0 0.0
    %1668 = vmatprep.subr.mxu0 0.0
    %1669 = vmatpush1.msra.mxu0 0.0
    %1670 = vmatprep.subr.mxu0 0.0
    %1671 = vmatpush1.msra.mxu0 0.0
    %1672 = vmatprep.subr.mxu0 0.0
    %1673 = vmatpush1.msra.mxu0 0.0
    %1674 = vmatprep.subr.mxu0 0.0
    %1675 = vmatpush1.msra.mxu0 0.0
    %1676 = vmatprep.subr.mxu0 0.0
    %1677 = vmatpush1.msra.mxu0 0.0
    %1678 = vmatprep.mubr.f32.mxu0 0.0
    %1679 = vmatmul.mubr.f32.gmra.mrb[0].mxu0 %v1591
    %v1680 = vpop.f32.mrb[0].mxu0
    %v1681 = vadd.f32 0.0, %v1680
    %v1682 = vpop.f32.mrb[0].mxu0
    %1683 = vmatprep.mubr.f32.mxu0 0.0
    %1684 = vmatmul.mubr.f32.gmra.mrb[0].mxu0 %v1594
    %v1685 = vpop.f32.mrb[0].mxu0
    %v1686 = vadd.f32 0.0, %v1685
    %v1687 = vpop.f32.mrb[0].mxu0
    %1688 = vmatprep.mubr.f32.mxu0 0.0
    %1689 = vmatmul.mubr.f32.gmra.mrb[0].mxu0 %v1597
    %v1690 = vpop.f32.mrb[0].mxu0
    %v1691 = vadd.f32 0.0, %v1690
    %v1692 = vpop.f32.mrb[0].mxu0
    %1693 = vmatprep.mubr.f32.mxu0 0.0
    %1694 = vmatmul.mubr.f32.gmra.mrb[0].mxu0 %v1600
    %v1695 = vpop.f32.mrb[0].mxu0
    %v1696 = vadd.f32 0.0, %v1695
    %v1697 = vpop.f32.mrb[0].mxu0
    %1698 = vmatprep.mubr.f32.mxu0 0.0
    %1699 = vmatmul.mubr.f32.gmra.mrb[0].mxu0 %v1603
    %v1700 = vpop.f32.mrb[0].mxu0
    %v1701 = vadd.f32 0.0, %v1700
    %v1702 = vpop.f32.mrb[0].mxu0
    %1703 = vmatprep.mubr.f32.mxu0 0.0
    %1704 = vmatmul.mubr.f32.gmra.mrb[0].mxu0 %v1606
    %v1705 = vpop.f32.mrb[0].mxu0
    %v1706 = vadd.f32 0.0, %v1705
    %v1707 = vpop.f32.mrb[0].mxu0
    %1708 = vmatprep.mubr.f32.mxu0 0.0
    %1709 = vmatmul.mubr.f32.gmra.mrb[0].mxu0 %v1609
    %v1710 = vpop.f32.mrb[0].mxu0
    %v1711 = vadd.f32 0.0, %v1710
    %v1712 = vpop.f32.mrb[0].mxu0
    %1713 = vmatprep.mubr.f32.mxu0 0.0
    %1714 = vmatmul.mubr.f32.gmra.mrb[0].mxu0 %v1612
    %v1715 = vpop.f32.mrb[0].mxu0
    %v1716 = vadd.f32 0.0, %v1715
    %v1717 = vpop.f32.mrb[0].mxu0
    %1718 = vdwg.mxu0
    %1719 = vmatprep.subr.mxu0 0.0
    %1720 = vmatpush1.msra.mxu0 %v1390
    %1721 = vmatprep.subr.mxu0 0.0
    %1722 = vmatpush1.msra.mxu0 %v1391
    %1723 = vmatprep.subr.mxu0 0.0
    %1724 = vmatpush1.msra.mxu0 %v1392
    %1725 = vmatprep.subr.mxu0 0.0
    %1726 = vmatpush1.msra.mxu0 %v1393
    %1727 = vmatprep.subr.mxu0 0.0
    %1728 = vmatpush1.msra.mxu0 0.0
    %1729 = vmatprep.subr.mxu0 0.0
    %1730 = vmatpush1.msra.mxu0 0.0
    %1731 = vmatprep.subr.mxu0 0.0
    %1732 = vmatpush1.msra.mxu0 0.0
    %1733 = vmatprep.subr.mxu0 0.0
    %1734 = vmatpush1.msra.mxu0 0.0
    %1735 = vmatprep.subr.mxu0 0.0
    %1736 = vmatpush1.msra.mxu0 0.0
    %1737 = vmatprep.subr.mxu0 0.0
    %1738 = vmatpush1.msra.mxu0 0.0
    %1739 = vmatprep.subr.mxu0 0.0
    %1740 = vmatpush1.msra.mxu0 0.0
    %1741 = vmatprep.subr.mxu0 0.0
    %1742 = vmatpush1.msra.mxu0 0.0
    %1743 = vmatprep.subr.mxu0 0.0
    %1744 = vmatpush1.msra.mxu0 0.0
    %1745 = vmatprep.subr.mxu0 0.0
    %1746 = vmatpush1.msra.mxu0 0.0
    %1747 = vmatprep.subr.mxu0 0.0
    %1748 = vmatpush1.msra.mxu0 0.0
    %1749 = vmatprep.subr.mxu0 0.0
    %1750 = vmatpush1.msra.mxu0 0.0
    %1751 = vmatprep.subr.mxu0 0.0
    %1752 = vmatpush1.msra.mxu0 0.0
    %1753 = vmatprep.subr.mxu0 0.0
    %1754 = vmatpush1.msra.mxu0 0.0
    %1755 = vmatprep.subr.mxu0 0.0
    %1756 = vmatpush1.msra.mxu0 0.0
    %1757 = vmatprep.subr.mxu0 0.0
    %1758 = vmatpush1.msra.mxu0 0.0
    %1759 = vmatprep.subr.mxu0 0.0
    %1760 = vmatpush1.msra.mxu0 0.0
    %1761 = vmatprep.subr.mxu0 0.0
    %1762 = vmatpush1.msra.mxu0 0.0
    %1763 = vmatprep.subr.mxu0 0.0
    %1764 = vmatpush1.msra.mxu0 0.0
    %1765 = vmatprep.subr.mxu0 0.0
    %1766 = vmatpush1.msra.mxu0 0.0
    %1767 = vmatprep.subr.mxu0 0.0
    %1768 = vmatpush1.msra.mxu0 0.0
    %1769 = vmatprep.subr.mxu0 0.0
    %1770 = vmatpush1.msra.mxu0 0.0
    %1771 = vmatprep.subr.mxu0 0.0
    %1772 = vmatpush1.msra.mxu0 0.0
    %1773 = vmatprep.subr.mxu0 0.0
    %1774 = vmatpush1.msra.mxu0 0.0
    %1775 = vmatprep.subr.mxu0 0.0
    %1776 = vmatpush1.msra.mxu0 0.0
    %1777 = vmatprep.subr.mxu0 0.0
    %1778 = vmatpush1.msra.mxu0 0.0
    %1779 = vmatprep.subr.mxu0 0.0
    %1780 = vmatpush1.msra.mxu0 0.0
    %1781 = vmatprep.subr.mxu0 0.0
    %1782 = vmatpush1.msra.mxu0 0.0
    %1783 = vmatprep.mubr.f32.mxu0 0.0
    %1784 = vmatmul.mubr.f32.gmra.mrb[0].mxu0 %v1591
    %v1785 = vpop.f32.mrb[0].mxu0
    %v1786 = vadd.f32 0.0, %v1785
    %v1787 = vpop.f32.mrb[0].mxu0
    %1788 = vmatprep.mubr.f32.mxu0 0.0
    %1789 = vmatmul.mubr.f32.gmra.mrb[0].mxu0 %v1594
    %v1790 = vpop.f32.mrb[0].mxu0
    %v1791 = vadd.f32 0.0, %v1790
    %v1792 = vpop.f32.mrb[0].mxu0
    %1793 = vmatprep.mubr.f32.mxu0 0.0
    %1794 = vmatmul.mubr.f32.gmra.mrb[0].mxu0 %v1597
    %v1795 = vpop.f32.mrb[0].mxu0
    %v1796 = vadd.f32 0.0, %v1795
    %v1797 = vpop.f32.mrb[0].mxu0
    %1798 = vmatprep.mubr.f32.mxu0 0.0
    %1799 = vmatmul.mubr.f32.gmra.mrb[0].mxu0 %v1600
    %v1800 = vpop.f32.mrb[0].mxu0
    %v1801 = vadd.f32 0.0, %v1800
    %v1802 = vpop.f32.mrb[0].mxu0
    %1803 = vmatprep.mubr.f32.mxu0 0.0
    %1804 = vmatmul.mubr.f32.gmra.mrb[0].mxu0 %v1603
    %v1805 = vpop.f32.mrb[0].mxu0
    %v1806 = vadd.f32 0.0, %v1805
    %v1807 = vpop.f32.mrb[0].mxu0
    %1808 = vmatprep.mubr.f32.mxu0 0.0
    %1809 = vmatmul.mubr.f32.gmra.mrb[0].mxu0 %v1606
    %v1810 = vpop.f32.mrb[0].mxu0
    %v1811 = vadd.f32 0.0, %v1810
    %v1812 = vpop.f32.mrb[0].mxu0
    %1813 = vmatprep.mubr.f32.mxu0 0.0
    %1814 = vmatmul.mubr.f32.gmra.mrb[0].mxu0 %v1609
    %v1815 = vpop.f32.mrb[0].mxu0
    %v1816 = vadd.f32 0.0, %v1815
    %v1817 = vpop.f32.mrb[0].mxu0
    %1818 = vmatprep.mubr.f32.mxu0 0.0
    %1819 = vmatmul.mubr.f32.gmra.mrb[0].mxu0 %v1612
    %v1820 = vpop.f32.mrb[0].mxu0
    %v1821 = vadd.f32 0.0, %v1820
    %v1822 = vpop.f32.mrb[0].mxu0
    %1823 = vdwg.mxu0
    %v1824 = vmul.f32 %v1786, %v1370
    %v1825 = vmul.f32 %v1791, %v1371
    %v1826 = vmul.f32 %v1796, %v1372
    %v1827 = vmul.f32 %v1801, %v1373
    %v1828 = vmul.f32 %v1806, %v1374
    %v1829 = vmul.f32 %v1811, %v1375
    %v1830 = vmul.f32 %v1816, %v1376
    %v1831 = vmul.f32 %v1821, %v1377
    %1832 = vmatprep.subr.mxu0 0.0
    %1833 = vmatpush1.msra.mxu0 %v1394
    %1834 = vmatprep.subr.mxu0 0.0
    %1835 = vmatpush1.msra.mxu0 %v1395
    %1836 = vmatprep.subr.mxu0 0.0
    %1837 = vmatpush1.msra.mxu0 %v1396
    %1838 = vmatprep.subr.mxu0 0.0
    %1839 = vmatpush1.msra.mxu0 %v1397
    %1840 = vmatprep.subr.mxu0 0.0
    %1841 = vmatpush1.msra.mxu0 0.0
    %1842 = vmatprep.subr.mxu0 0.0
    %1843 = vmatpush1.msra.mxu0 0.0
    %1844 = vmatprep.subr.mxu0 0.0
    %1845 = vmatpush1.msra.mxu0 0.0
    %1846 = vmatprep.subr.mxu0 0.0
    %1847 = vmatpush1.msra.mxu0 0.0
    %1848 = vmatprep.subr.mxu0 0.0
    %1849 = vmatpush1.msra.mxu0 0.0
    %1850 = vmatprep.subr.mxu0 0.0
    %1851 = vmatpush1.msra.mxu0 0.0
    %1852 = vmatprep.subr.mxu0 0.0
    %1853 = vmatpush1.msra.mxu0 0.0
    %1854 = vmatprep.subr.mxu0 0.0
    %1855 = vmatpush1.msra.mxu0 0.0
    %1856 = vmatprep.subr.mxu0 0.0
    %1857 = vmatpush1.msra.mxu0 0.0
    %1858 = vmatprep.subr.mxu0 0.0
    %1859 = vmatpush1.msra.mxu0 0.0
    %1860 = vmatprep.subr.mxu0 0.0
    %1861 = vmatpush1.msra.mxu0 0.0
    %1862 = vmatprep.subr.mxu0 0.0
    %1863 = vmatpush1.msra.mxu0 0.0
    %1864 = vmatprep.subr.mxu0 0.0
    %1865 = vmatpush1.msra.mxu0 0.0
    %1866 = vmatprep.subr.mxu0 0.0
    %1867 = vmatpush1.msra.mxu0 0.0
    %1868 = vmatprep.subr.mxu0 0.0
    %1869 = vmatpush1.msra.mxu0 0.0
    %1870 = vmatprep.subr.mxu0 0.0
    %1871 = vmatpush1.msra.mxu0 0.0
    %1872 = vmatprep.subr.mxu0 0.0
    %1873 = vmatpush1.msra.mxu0 0.0
    %1874 = vmatprep.subr.mxu0 0.0
    %1875 = vmatpush1.msra.mxu0 0.0
    %1876 = vmatprep.subr.mxu0 0.0
    %1877 = vmatpush1.msra.mxu0 0.0
    %1878 = vmatprep.subr.mxu0 0.0
    %1879 = vmatpush1.msra.mxu0 0.0
    %1880 = vmatprep.subr.mxu0 0.0
    %1881 = vmatpush1.msra.mxu0 0.0
    %1882 = vmatprep.subr.mxu0 0.0
    %1883 = vmatpush1.msra.mxu0 0.0
    %1884 = vmatprep.subr.mxu0 0.0
    %1885 = vmatpush1.msra.mxu0 0.0
    %1886 = vmatprep.subr.mxu0 0.0
    %1887 = vmatpush1.msra.mxu0 0.0
    %1888 = vmatprep.subr.mxu0 0.0
    %1889 = vmatpush1.msra.mxu0 0.0
    %1890 = vmatprep.subr.mxu0 0.0
    %1891 = vmatpush1.msra.mxu0 0.0
    %1892 = vmatprep.subr.mxu0 0.0
    %1893 = vmatpush1.msra.mxu0 0.0
    %1894 = vmatprep.subr.mxu0 0.0
    %1895 = vmatpush1.msra.mxu0 0.0
    %1896 = vmatprep.mubr.f32.mxu0 0.0
    %1897 = vmatmul.mubr.f32.gmra.mrb[0].mxu0 %v1591
    %v1898 = vpop.f32.mrb[0].mxu0
    %v1899 = vadd.f32 0.0, %v1898
    %v1900 = vpop.f32.mrb[0].mxu0
    %1901 = vmatprep.mubr.f32.mxu0 0.0
    %1902 = vmatmul.mubr.f32.gmra.mrb[0].mxu0 %v1594
    %v1903 = vpop.f32.mrb[0].mxu0
    %v1904 = vadd.f32 0.0, %v1903
    %v1905 = vpop.f32.mrb[0].mxu0
    %1906 = vmatprep.mubr.f32.mxu0 0.0
    %1907 = vmatmul.mubr.f32.gmra.mrb[0].mxu0 %v1597
    %v1908 = vpop.f32.mrb[0].mxu0
    %v1909 = vadd.f32 0.0, %v1908
    %v1910 = vpop.f32.mrb[0].mxu0
    %1911 = vmatprep.mubr.f32.mxu0 0.0
    %1912 = vmatmul.mubr.f32.gmra.mrb[0].mxu0 %v1600
    %v1913 = vpop.f32.mrb[0].mxu0
    %v1914 = vadd.f32 0.0, %v1913
    %v1915 = vpop.f32.mrb[0].mxu0
    %1916 = vmatprep.mubr.f32.mxu0 0.0
    %1917 = vmatmul.mubr.f32.gmra.mrb[0].mxu0 %v1603
    %v1918 = vpop.f32.mrb[0].mxu0
    %v1919 = vadd.f32 0.0, %v1918
    %v1920 = vpop.f32.mrb[0].mxu0
    %1921 = vmatprep.mubr.f32.mxu0 0.0
    %1922 = vmatmul.mubr.f32.gmra.mrb[0].mxu0 %v1606
    %v1923 = vpop.f32.mrb[0].mxu0
    %v1924 = vadd.f32 0.0, %v1923
    %v1925 = vpop.f32.mrb[0].mxu0
    %1926 = vmatprep.mubr.f32.mxu0 0.0
    %1927 = vmatmul.mubr.f32.gmra.mrb[0].mxu0 %v1609
    %v1928 = vpop.f32.mrb[0].mxu0
    %v1929 = vadd.f32 0.0, %v1928
    %v1930 = vpop.f32.mrb[0].mxu0
    %1931 = vmatprep.mubr.f32.mxu0 0.0
    %1932 = vmatmul.mubr.f32.gmra.mrb[0].mxu0 %v1612
    %v1933 = vpop.f32.mrb[0].mxu0
    %v1934 = vadd.f32 0.0, %v1933
    %v1935 = vpop.f32.mrb[0].mxu0
    %1936 = vdwg.mxu0
    %v1938 = vsel %vm199, %v1681, 0
    %v1941 = vsel %vm199, %v1686, 0
    %v1944 = vsel %vm199, %v1691, 0
    %v1947 = vsel %vm199, %v1696, 0
    %v1950 = vsel %vm199, %v1701, 0
    %v1953 = vsel %vm199, %v1706, 0
    %v1956 = vsel %vm199, %v1711, 0
    %v1959 = vsel %vm199, %v1716, 0
    %v1962 = vsel %vm199, %v1824, 0
    %v1965 = vsel %vm199, %v1825, 0
    %v1968 = vsel %vm199, %v1826, 0
    %v1971 = vsel %vm199, %v1827, 0
    %v1974 = vsel %vm199, %v1828, 0
    %v1977 = vsel %vm199, %v1829, 0
    %v1980 = vsel %vm199, %v1830, 0
    %v1983 = vsel %vm199, %v1831, 0
    %1985 = vmatprep.subr.mxu0 0.0
    %1986 = vmatpush1.xpose.msra.mxu0 %v1962
    %1987 = vmatprep.subr.mxu0 0.0
    %1988 = vmatpush1.xpose.msra.mxu0 %v1965
    %1989 = vmatprep.subr.mxu0 0.0
    %1990 = vmatpush1.xpose.msra.mxu0 %v1968
    %1991 = vmatprep.subr.mxu0 0.0
    %1992 = vmatpush1.xpose.msra.mxu0 %v1971
    %1993 = vmatprep.subr.mxu0 0.0
    %1994 = vmatpush1.xpose.msra.mxu0 %v1974
    %1995 = vmatprep.subr.mxu0 0.0
    %1996 = vmatpush1.xpose.msra.mxu0 %v1977
    %1997 = vmatprep.subr.mxu0 0.0
    %1998 = vmatpush1.xpose.msra.mxu0 %v1980
    %1999 = vmatprep.subr.mxu0 0.0
    %2000 = vmatpush1.xpose.msra.mxu0 %v1983
    %2001 = vmatprep.subr.mxu0 0.0
    %2002 = vmatpush1.xpose.msra.mxu0 0.0
    %2003 = vmatprep.subr.mxu0 0.0
    %2004 = vmatpush1.xpose.msra.mxu0 0.0
    %2005 = vmatprep.subr.mxu0 0.0
    %2006 = vmatpush1.xpose.msra.mxu0 0.0
    %2007 = vmatprep.subr.mxu0 0.0
    %2008 = vmatpush1.xpose.msra.mxu0 0.0
    %2009 = vmatprep.subr.mxu0 0.0
    %2010 = vmatpush1.xpose.msra.mxu0 0.0
    %2011 = vmatprep.subr.mxu0 0.0
    %2012 = vmatpush1.xpose.msra.mxu0 0.0
    %2013 = vmatprep.subr.mxu0 0.0
    %2014 = vmatpush1.xpose.msra.mxu0 0.0
    %2015 = vmatprep.subr.mxu0 0.0
    %2016 = vmatpush1.xpose.msra.mxu0 0.0
    %2017 = vmatprep.subr.mxu0 0.0
    %2018 = vmatpush1.xpose.msra.mxu0 0.0
    %2019 = vmatprep.subr.mxu0 0.0
    %2020 = vmatpush1.xpose.msra.mxu0 0.0
    %2021 = vmatprep.subr.mxu0 0.0
    %2022 = vmatpush1.xpose.msra.mxu0 0.0
    %2023 = vmatprep.subr.mxu0 0.0
    %2024 = vmatpush1.xpose.msra.mxu0 0.0
    %2025 = vmatprep.subr.mxu0 0.0
    %2026 = vmatpush1.xpose.msra.mxu0 0.0
    %2027 = vmatprep.subr.mxu0 0.0
    %2028 = vmatpush1.xpose.msra.mxu0 0.0
    %2029 = vmatprep.subr.mxu0 0.0
    %2030 = vmatpush1.xpose.msra.mxu0 0.0
    %2031 = vmatprep.subr.mxu0 0.0
    %2032 = vmatpush1.xpose.msra.mxu0 0.0
    %2033 = vmatprep.subr.mxu0 0.0
    %2034 = vmatpush1.xpose.msra.mxu0 0.0
    %2035 = vmatprep.subr.mxu0 0.0
    %2036 = vmatpush1.xpose.msra.mxu0 0.0
    %2037 = vmatprep.subr.mxu0 0.0
    %2038 = vmatpush1.xpose.msra.mxu0 0.0
    %2039 = vmatprep.subr.mxu0 0.0
    %2040 = vmatpush1.xpose.msra.mxu0 0.0
    %2041 = vmatprep.subr.mxu0 0.0
    %2042 = vmatpush1.xpose.msra.mxu0 0.0
    %2043 = vmatprep.subr.mxu0 0.0
    %2044 = vmatpush1.xpose.msra.mxu0 0.0
    %2045 = vmatprep.subr.mxu0 0.0
    %2046 = vmatpush1.xpose.msra.mxu0 0.0
    %2047 = vmatprep.subr.mxu0 0.0
    %2048 = vmatpush1.xpose.msra.mxu0 0.0
    %2049 = vmatprep.mubr.f32.mxu0 0.0
    %2050 = vmatmul.mubr.f32.gmra.mrb[0].mxu0 %v1938
    %v2051 = vpop.f32.mrb[0].mxu0
    %v2052 = vadd.f32 0.0, %v2051
    %v2053 = vpop.f32.mrb[0].mxu0
    %2054 = vmatprep.mubr.f32.mxu0 0.0
    %2055 = vmatmul.mubr.f32.gmra.mrb[0].mxu0 %v1941
    %v2056 = vpop.f32.mrb[0].mxu0
    %v2057 = vadd.f32 0.0, %v2056
    %v2058 = vpop.f32.mrb[0].mxu0
    %2059 = vmatprep.mubr.f32.mxu0 0.0
    %2060 = vmatmul.mubr.f32.gmra.mrb[0].mxu0 %v1944
    %v2061 = vpop.f32.mrb[0].mxu0
    %v2062 = vadd.f32 0.0, %v2061
    %v2063 = vpop.f32.mrb[0].mxu0
    %2064 = vmatprep.mubr.f32.mxu0 0.0
    %2065 = vmatmul.mubr.f32.gmra.mrb[0].mxu0 %v1947
    %v2066 = vpop.f32.mrb[0].mxu0
    %v2067 = vadd.f32 0.0, %v2066
    %v2068 = vpop.f32.mrb[0].mxu0
    %2069 = vmatprep.mubr.f32.mxu0 0.0
    %2070 = vmatmul.mubr.f32.gmra.mrb[0].mxu0 %v1950
    %v2071 = vpop.f32.mrb[0].mxu0
    %v2072 = vadd.f32 0.0, %v2071
    %v2073 = vpop.f32.mrb[0].mxu0
    %2074 = vmatprep.mubr.f32.mxu0 0.0
    %2075 = vmatmul.mubr.f32.gmra.mrb[0].mxu0 %v1953
    %v2076 = vpop.f32.mrb[0].mxu0
    %v2077 = vadd.f32 0.0, %v2076
    %v2078 = vpop.f32.mrb[0].mxu0
    %2079 = vmatprep.mubr.f32.mxu0 0.0
    %2080 = vmatmul.mubr.f32.gmra.mrb[0].mxu0 %v1956
    %v2081 = vpop.f32.mrb[0].mxu0
    %v2082 = vadd.f32 0.0, %v2081
    %v2083 = vpop.f32.mrb[0].mxu0
    %2084 = vmatprep.mubr.f32.mxu0 0.0
    %2085 = vmatmul.mubr.f32.gmra.mrb[0].mxu0 %v1959
    %v2086 = vpop.f32.mrb[0].mxu0
    %v2087 = vadd.f32 0.0, %v2086
    %v2088 = vpop.f32.mrb[0].mxu0
    %2089 = vdwg.mxu0
    %v2090 = vmul.f32 %v2052, 0.35355338
    %v2091 = vmul.f32 %v2057, 0.35355338
    %v2092 = vmul.f32 %v2062, 0.35355338
    %v2093 = vmul.f32 %v2067, 0.35355338
    %v2094 = vmul.f32 %v2072, 0.35355338
    %v2095 = vmul.f32 %v2077, 0.35355338
    %v2096 = vmul.f32 %v2082, 0.35355338
    %v2097 = vmul.f32 %v2087, 0.35355338
    %v2098 = vadd.f32 %v2090, %v1378
    %v2099 = vadd.f32 %v2091, %v1379
    %v2100 = vadd.f32 %v2092, %v1380
    %v2101 = vadd.f32 %v2093, %v1381
    %v2102 = vadd.f32 %v2094, %v1382
    %v2103 = vadd.f32 %v2095, %v1383
    %v2104 = vadd.f32 %v2096, %v1384
    %v2105 = vadd.f32 %v2097, %v1385
    %v2106 = vsel %vm1040, %v2098, -inf
    %2107 = vmax.xlane.f32.xlu0 %v2106
    %v2108 = vpop.xlane.xlu0 %2107
    %v2109 = vsel %vm1040, %v2099, -inf
    %2110 = vmax.xlane.f32.xlu0 %v2109
    %v2111 = vpop.xlane.xlu0 %2110
    %v2112 = vsel %vm1040, %v2100, -inf
    %2113 = vmax.xlane.f32.xlu0 %v2112
    %v2114 = vpop.xlane.xlu0 %2113
    %v2115 = vsel %vm1040, %v2101, -inf
    %2116 = vmax.xlane.f32.xlu0 %v2115
    %v2117 = vpop.xlane.xlu0 %2116
    %v2118 = vsel %vm1040, %v2102, -inf
    %2119 = vmax.xlane.f32.xlu0 %v2118
    %v2120 = vpop.xlane.xlu0 %2119
    %v2121 = vsel %vm1040, %v2103, -inf
    %2122 = vmax.xlane.f32.xlu0 %v2121
    %v2123 = vpop.xlane.xlu0 %2122
    %v2124 = vsel %vm1040, %v2104, -inf
    %2125 = vmax.xlane.f32.xlu0 %v2124
    %v2126 = vpop.xlane.xlu0 %2125
    %v2127 = vsel %vm1040, %v2105, -inf
    %2128 = vmax.xlane.f32.xlu0 %v2127
    %v2129 = vpop.xlane.xlu0 %2128
    %v2130 = vsub.f32 %v2098, %v2108
    %v2131 = vsub.f32 %v2099, %v2111
    %v2132 = vsub.f32 %v2100, %v2114
    %v2133 = vsub.f32 %v2101, %v2117
    %v2134 = vsub.f32 %v2102, %v2120
    %v2135 = vsub.f32 %v2103, %v2123
    %v2136 = vsub.f32 %v2104, %v2126
    %v2137 = vsub.f32 %v2105, %v2129
    %v2138 = vmul.f32 %v2130, 1.442695
    %v2139 = vpow.pop %v2138
    %v2140 = vmul.f32 %v2131, 1.442695
    %v2141 = vpow.pop %v2140
    %v2142 = vmul.f32 %v2132, 1.442695
    %v2143 = vpow.pop %v2142
    %v2144 = vmul.f32 %v2133, 1.442695
    %v2145 = vpow.pop %v2144
    %v2146 = vmul.f32 %v2134, 1.442695
    %v2147 = vpow.pop %v2146
    %v2148 = vmul.f32 %v2135, 1.442695
    %v2149 = vpow.pop %v2148
    %v2150 = vmul.f32 %v2136, 1.442695
    %v2151 = vpow.pop %v2150
    %v2152 = vmul.f32 %v2137, 1.442695
    %v2153 = vpow.pop %v2152
    %v2154 = vsel %vm1040, %v2139, 0.0
    %2155 = vadd.xlane.f32.xlu0 %v2154
    %v2156 = vpop.xlane.xlu0 %2155
    %v2157 = vsel %vm1040, %v2141, 0.0
    %2158 = vadd.xlane.f32.xlu0 %v2157
    %v2159 = vpop.xlane.xlu0 %2158
    %v2160 = vsel %vm1040, %v2143, 0.0
    %2161 = vadd.xlane.f32.xlu0 %v2160
    %v2162 = vpop.xlane.xlu0 %2161
    %v2163 = vsel %vm1040, %v2145, 0.0
    %2164 = vadd.xlane.f32.xlu0 %v2163
    %v2165 = vpop.xlane.xlu0 %2164
    %v2166 = vsel %vm1040, %v2147, 0.0
    %2167 = vadd.xlane.f32.xlu0 %v2166
    %v2168 = vpop.xlane.xlu0 %2167
    %v2169 = vsel %vm1040, %v2149, 0.0
    %2170 = vadd.xlane.f32.xlu0 %v2169
    %v2171 = vpop.xlane.xlu0 %2170
    %v2172 = vsel %vm1040, %v2151, 0.0
    %2173 = vadd.xlane.f32.xlu0 %v2172
    %v2174 = vpop.xlane.xlu0 %2173
    %v2175 = vsel %vm1040, %v2153, 0.0
    %2176 = vadd.xlane.f32.xlu0 %v2175
    %v2177 = vpop.xlane.xlu0 %2176
    %v2178 = vrcp.pop %v2156
    %v2179 = vrcp.pop %v2159
    %v2180 = vrcp.pop %v2162
    %v2181 = vrcp.pop %v2165
    %v2182 = vrcp.pop %v2168
    %v2183 = vrcp.pop %v2171
    %v2184 = vrcp.pop %v2174
    %v2185 = vrcp.pop %v2177
    %v2186 = vmul.f32 %v2139, %v2178
    %v2187 = vmul.f32 %v2141, %v2179
    %v2188 = vmul.f32 %v2143, %v2180
    %v2189 = vmul.f32 %v2145, %v2181
    %v2190 = vmul.f32 %v2147, %v2182
    %v2191 = vmul.f32 %v2149, %v2183
    %v2192 = vmul.f32 %v2151, %v2184
    %v2193 = vmul.f32 %v2153, %v2185
    %v2195 = vsel %vm1040, %v2186, 0
    %v2198 = vsel %vm1040, %v2187, 0
    %v2201 = vsel %vm1040, %v2188, 0
    %v2204 = vsel %vm1040, %v2189, 0
    %v2207 = vsel %vm1040, %v2190, 0
    %v2210 = vsel %vm1040, %v2191, 0
    %v2213 = vsel %vm1040, %v2192, 0
    %v2216 = vsel %vm1040, %v2193, 0
    %2218 = vmatprep.subr.mxu0 0.0
    %2219 = vmatpush1.msra.mxu0 %v1899
    %2220 = vmatprep.subr.mxu0 0.0
    %2221 = vmatpush1.msra.mxu0 %v1904
    %2222 = vmatprep.subr.mxu0 0.0
    %2223 = vmatpush1.msra.mxu0 %v1909
    %2224 = vmatprep.subr.mxu0 0.0
    %2225 = vmatpush1.msra.mxu0 %v1914
    %2226 = vmatprep.subr.mxu0 0.0
    %2227 = vmatpush1.msra.mxu0 %v1919
    %2228 = vmatprep.subr.mxu0 0.0
    %2229 = vmatpush1.msra.mxu0 %v1924
    %2230 = vmatprep.subr.mxu0 0.0
    %2231 = vmatpush1.msra.mxu0 %v1929
    %2232 = vmatprep.subr.mxu0 0.0
    %2233 = vmatpush1.msra.mxu0 %v1934
    %2234 = vmatprep.subr.mxu0 0.0
    %2235 = vmatpush1.msra.mxu0 0.0
    %2236 = vmatprep.subr.mxu0 0.0
    %2237 = vmatpush1.msra.mxu0 0.0
    %2238 = vmatprep.subr.mxu0 0.0
    %2239 = vmatpush1.msra.mxu0 0.0
    %2240 = vmatprep.subr.mxu0 0.0
    %2241 = vmatpush1.msra.mxu0 0.0
    %2242 = vmatprep.subr.mxu0 0.0
    %2243 = vmatpush1.msra.mxu0 0.0
    %2244 = vmatprep.subr.mxu0 0.0
    %2245 = vmatpush1.msra.mxu0 0.0
    %2246 = vmatprep.subr.mxu0 0.0
    %2247 = vmatpush1.msra.mxu0 0.0
    %2248 = vmatprep.subr.mxu0 0.0
    %2249 = vmatpush1.msra.mxu0 0.0
    %2250 = vmatprep.subr.mxu0 0.0
    %2251 = vmatpush1.msra.mxu0 0.0
    %2252 = vmatprep.subr.mxu0 0.0
    %2253 = vmatpush1.msra.mxu0 0.0
    %2254 = vmatprep.subr.mxu0 0.0
    %2255 = vmatpush1.msra.mxu0 0.0
    %2256 = vmatprep.subr.mxu0 0.0
    %2257 = vmatpush1.msra.mxu0 0.0
    %2258 = vmatprep.subr.mxu0 0.0
    %2259 = vmatpush1.msra.mxu0 0.0
    %2260 = vmatprep.subr.mxu0 0.0
    %2261 = vmatpush1.msra.mxu0 0.0
    %2262 = vmatprep.subr.mxu0 0.0
    %2263 = vmatpush1.msra.mxu0 0.0
    %2264 = vmatprep.subr.mxu0 0.0
    %2265 = vmatpush1.msra.mxu0 0.0
    %2266 = vmatprep.subr.mxu0 0.0
    %2267 = vmatpush1.msra.mxu0 0.0
    %2268 = vmatprep.subr.mxu0 0.0
    %2269 = vmatpush1.msra.mxu0 0.0
    %2270 = vmatprep.subr.mxu0 0.0
    %2271 = vmatpush1.msra.mxu0 0.0
    %2272 = vmatprep.subr.mxu0 0.0
    %2273 = vmatpush1.msra.mxu0 0.0
    %2274 = vmatprep.subr.mxu0 0.0
    %2275 = vmatpush1.msra.mxu0 0.0
    %2276 = vmatprep.subr.mxu0 0.0
    %2277 = vmatpush1.msra.mxu0 0.0
    %2278 = vmatprep.subr.mxu0 0.0
    %2279 = vmatpush1.msra.mxu0 0.0
    %2280 = vmatprep.subr.mxu0 0.0
    %2281 = vmatpush1.msra.mxu0 0.0
    %2282 = vmatprep.mubr.f32.mxu0 0.0
    %2283 = vmatmul.mubr.f32.gmra.mrb[0].mxu0 %v2195
    %v2284 = vpop.f32.mrb[0].mxu0
    %v2285 = vadd.f32 0.0, %v2284
    %v2286 = vpop.f32.mrb[0].mxu0
    %2287 = vmatprep.mubr.f32.mxu0 0.0
    %2288 = vmatmul.mubr.f32.gmra.mrb[0].mxu0 %v2198
    %v2289 = vpop.f32.mrb[0].mxu0
    %v2290 = vadd.f32 0.0, %v2289
    %v2291 = vpop.f32.mrb[0].mxu0
    %2292 = vmatprep.mubr.f32.mxu0 0.0
    %2293 = vmatmul.mubr.f32.gmra.mrb[0].mxu0 %v2201
    %v2294 = vpop.f32.mrb[0].mxu0
    %v2295 = vadd.f32 0.0, %v2294
    %v2296 = vpop.f32.mrb[0].mxu0
    %2297 = vmatprep.mubr.f32.mxu0 0.0
    %2298 = vmatmul.mubr.f32.gmra.mrb[0].mxu0 %v2204
    %v2299 = vpop.f32.mrb[0].mxu0
    %v2300 = vadd.f32 0.0, %v2299
    %v2301 = vpop.f32.mrb[0].mxu0
    %2302 = vmatprep.mubr.f32.mxu0 0.0
    %2303 = vmatmul.mubr.f32.gmra.mrb[0].mxu0 %v2207
    %v2304 = vpop.f32.mrb[0].mxu0
    %v2305 = vadd.f32 0.0, %v2304
    %v2306 = vpop.f32.mrb[0].mxu0
    %2307 = vmatprep.mubr.f32.mxu0 0.0
    %2308 = vmatmul.mubr.f32.gmra.mrb[0].mxu0 %v2210
    %v2309 = vpop.f32.mrb[0].mxu0
    %v2310 = vadd.f32 0.0, %v2309
    %v2311 = vpop.f32.mrb[0].mxu0
    %2312 = vmatprep.mubr.f32.mxu0 0.0
    %2313 = vmatmul.mubr.f32.gmra.mrb[0].mxu0 %v2213
    %v2314 = vpop.f32.mrb[0].mxu0
    %v2315 = vadd.f32 0.0, %v2314
    %v2316 = vpop.f32.mrb[0].mxu0
    %2317 = vmatprep.mubr.f32.mxu0 0.0
    %2318 = vmatmul.mubr.f32.gmra.mrb[0].mxu0 %v2216
    %v2319 = vpop.f32.mrb[0].mxu0
    %v2320 = vadd.f32 0.0, %v2319
    %v2321 = vpop.f32.mrb[0].mxu0
    %2322 = vdwg.mxu0
    %v2323 = vmul.f32 %v2285, %v1370
    %v2324 = vmul.f32 %v2290, %v1371
    %v2325 = vmul.f32 %v2295, %v1372
    %v2326 = vmul.f32 %v2300, %v1373
    %v2327 = vmul.f32 %v2305, %v1374
    %v2328 = vmul.f32 %v2310, %v1375
    %v2329 = vmul.f32 %v2315, %v1376
    %v2330 = vmul.f32 %v2320, %v1377
    %v2332 = vsel %vm1040, %v1354, 0
    %v2335 = vsel %vm1040, %v1355, 0
    %v2338 = vsel %vm1040, %v1356, 0
    %v2341 = vsel %vm1040, %v1357, 0
    %v2344 = vsel %vm1040, %v1358, 0
    %v2347 = vsel %vm1040, %v1359, 0
    %v2350 = vsel %vm1040, %v1360, 0
    %v2353 = vsel %vm1040, %v1361, 0
    %2355 = vmatprep.subr.mxu0 0.0
    %2356 = vmatpush1.msra.mxu0 %v2323
    %2357 = vmatprep.subr.mxu0 0.0
    %2358 = vmatpush1.msra.mxu0 %v2324
    %2359 = vmatprep.subr.mxu0 0.0
    %2360 = vmatpush1.msra.mxu0 %v2325
    %2361 = vmatprep.subr.mxu0 0.0
    %2362 = vmatpush1.msra.mxu0 %v2326
    %2363 = vmatprep.subr.mxu0 0.0
    %2364 = vmatpush1.msra.mxu0 %v2327
    %2365 = vmatprep.subr.mxu0 0.0
    %2366 = vmatpush1.msra.mxu0 %v2328
    %2367 = vmatprep.subr.mxu0 0.0
    %2368 = vmatpush1.msra.mxu0 %v2329
    %2369 = vmatprep.subr.mxu0 0.0
    %2370 = vmatpush1.msra.mxu0 %v2330
    %2371 = vmatprep.subr.mxu0 0.0
    %2372 = vmatpush1.msra.mxu0 0.0
    %2373 = vmatprep.subr.mxu0 0.0
    %2374 = vmatpush1.msra.mxu0 0.0
    %2375 = vmatprep.subr.mxu0 0.0
    %2376 = vmatpush1.msra.mxu0 0.0
    %2377 = vmatprep.subr.mxu0 0.0
    %2378 = vmatpush1.msra.mxu0 0.0
    %2379 = vmatprep.subr.mxu0 0.0
    %2380 = vmatpush1.msra.mxu0 0.0
    %2381 = vmatprep.subr.mxu0 0.0
    %2382 = vmatpush1.msra.mxu0 0.0
    %2383 = vmatprep.subr.mxu0 0.0
    %2384 = vmatpush1.msra.mxu0 0.0
    %2385 = vmatprep.subr.mxu0 0.0
    %2386 = vmatpush1.msra.mxu0 0.0
    %2387 = vmatprep.subr.mxu0 0.0
    %2388 = vmatpush1.msra.mxu0 0.0
    %2389 = vmatprep.subr.mxu0 0.0
    %2390 = vmatpush1.msra.mxu0 0.0
    %2391 = vmatprep.subr.mxu0 0.0
    %2392 = vmatpush1.msra.mxu0 0.0
    %2393 = vmatprep.subr.mxu0 0.0
    %2394 = vmatpush1.msra.mxu0 0.0
    %2395 = vmatprep.subr.mxu0 0.0
    %2396 = vmatpush1.msra.mxu0 0.0
    %2397 = vmatprep.subr.mxu0 0.0
    %2398 = vmatpush1.msra.mxu0 0.0
    %2399 = vmatprep.subr.mxu0 0.0
    %2400 = vmatpush1.msra.mxu0 0.0
    %2401 = vmatprep.subr.mxu0 0.0
    %2402 = vmatpush1.msra.mxu0 0.0
    %2403 = vmatprep.subr.mxu0 0.0
    %2404 = vmatpush1.msra.mxu0 0.0
    %2405 = vmatprep.subr.mxu0 0.0
    %2406 = vmatpush1.msra.mxu0 0.0
    %2407 = vmatprep.subr.mxu0 0.0
    %2408 = vmatpush1.msra.mxu0 0.0
    %2409 = vmatprep.subr.mxu0 0.0
    %2410 = vmatpush1.msra.mxu0 0.0
    %2411 = vmatprep.subr.mxu0 0.0
    %2412 = vmatpush1.msra.mxu0 0.0
    %2413 = vmatprep.subr.mxu0 0.0
    %2414 = vmatpush1.msra.mxu0 0.0
    %2415 = vmatprep.subr.mxu0 0.0
    %2416 = vmatpush1.msra.mxu0 0.0
    %2417 = vmatprep.subr.mxu0 0.0
    %2418 = vmatpush1.msra.mxu0 0.0
    %2419 = vmatprep.mubr.f32.mxu0 0.0
    %2420 = vmatmul.mubr.f32.gmra.mrb[0].mxu0 %v2332
    %v2421 = vpop.f32.mrb[0].mxu0
    %v2422 = vadd.f32 0.0, %v2421
    %v2423 = vpop.f32.mrb[0].mxu0
    %2424 = vmatprep.mubr.f32.mxu0 0.0
    %2425 = vmatmul.mubr.f32.gmra.mrb[0].mxu0 %v2335
    %v2426 = vpop.f32.mrb[0].mxu0
    %v2427 = vadd.f32 0.0, %v2426
    %v2428 = vpop.f32.mrb[0].mxu0
    %2429 = vmatprep.mubr.f32.mxu0 0.0
    %2430 = vmatmul.mubr.f32.gmra.mrb[0].mxu0 %v2338
    %v2431 = vpop.f32.mrb[0].mxu0
    %v2432 = vadd.f32 0.0, %v2431
    %v2433 = vpop.f32.mrb[0].mxu0
    %2434 = vmatprep.mubr.f32.mxu0 0.0
    %2435 = vmatmul.mubr.f32.gmra.mrb[0].mxu0 %v2341
    %v2436 = vpop.f32.mrb[0].mxu0
    %v2437 = vadd.f32 0.0, %v2436
    %v2438 = vpop.f32.mrb[0].mxu0
    %2439 = vmatprep.mubr.f32.mxu0 0.0
    %2440 = vmatmul.mubr.f32.gmra.mrb[0].mxu0 %v2344
    %v2441 = vpop.f32.mrb[0].mxu0
    %v2442 = vadd.f32 0.0, %v2441
    %v2443 = vpop.f32.mrb[0].mxu0
    %2444 = vmatprep.mubr.f32.mxu0 0.0
    %2445 = vmatmul.mubr.f32.gmra.mrb[0].mxu0 %v2347
    %v2446 = vpop.f32.mrb[0].mxu0
    %v2447 = vadd.f32 0.0, %v2446
    %v2448 = vpop.f32.mrb[0].mxu0
    %2449 = vmatprep.mubr.f32.mxu0 0.0
    %2450 = vmatmul.mubr.f32.gmra.mrb[0].mxu0 %v2350
    %v2451 = vpop.f32.mrb[0].mxu0
    %v2452 = vadd.f32 0.0, %v2451
    %v2453 = vpop.f32.mrb[0].mxu0
    %2454 = vmatprep.mubr.f32.mxu0 0.0
    %2455 = vmatmul.mubr.f32.gmra.mrb[0].mxu0 %v2353
    %v2456 = vpop.f32.mrb[0].mxu0
    %v2457 = vadd.f32 0.0, %v2456
    %v2458 = vpop.f32.mrb[0].mxu0
    %2459 = vdwg.mxu0
    %v2460 = vsel %vm1040, %v1362, 0.0
    %v2461 = vsel %vm1040, %v1363, 0.0
    %v2462 = vadd.f32 %v2460, %v2461
    %v2463 = vsel %vm1040, %v1364, 0.0
    %v2464 = vadd.f32 %v2462, %v2463
    %v2465 = vsel %vm1040, %v1365, 0.0
    %v2466 = vadd.f32 %v2464, %v2465
    %v2467 = vsel %vm1040, %v1366, 0.0
    %v2468 = vadd.f32 %v2466, %v2467
    %v2469 = vsel %vm1040, %v1367, 0.0
    %v2470 = vadd.f32 %v2468, %v2469
    %v2471 = vsel %vm1040, %v1368, 0.0
    %v2472 = vadd.f32 %v2470, %v2471
    %v2473 = vsel %vm1040, %v1369, 0.0
    %v2474 = vadd.f32 %v2472, %v2473
    %v2475 = vrot.slane %v2474, 4
    %v2476 = vadd.f32 %v2474, %v2475
    %v2477 = vrot.slane %v2476, 2
    %v2478 = vadd.f32 %v2476, %v2477
    %v2479 = vrot.slane %v2478, 1
    %v2480 = vadd.f32 %v2478, %v2479
    %v2481 = vadd.f32 %v2480, 1e-05
    %v2482 = vrcp.pop %v2481
    %v2483 = vmul.f32 %v1362, %v2482
    %v2484 = vmul.f32 %v1363, %v2482
    %v2485 = vmul.f32 %v1364, %v2482
    %v2486 = vmul.f32 %v1365, %v2482
    %v2487 = vmul.f32 %v1366, %v2482
    %v2488 = vmul.f32 %v1367, %v2482
    %v2489 = vmul.f32 %v1368, %v2482
    %v2490 = vmul.f32 %v1369, %v2482
    %2491 = vxpose.xlu0.b32.start [1/16] %v2483, 128
    %2492 = vxpose.xlu0.b32.cont [2/16] %v2484, 128
    %2493 = vxpose.xlu0.b32.cont [3/16] %v2485, 128
    %2494 = vxpose.xlu0.b32.cont [4/16] %v2486, 128
    %2495 = vxpose.xlu0.b32.cont [5/16] %v2487, 128
    %2496 = vxpose.xlu0.b32.cont [6/16] %v2488, 128
    %2497 = vxpose.xlu0.b32.cont [7/16] %v2489, 128
    %2498 = vxpose.xlu0.b32.cont [8/16] %v2490, 128
    %2499 = vxpose.xlu0.b32.cont [9/16] 0.0, 128
    %2500 = vxpose.xlu0.b32.cont [10/16] 0.0, 128
    %2501 = vxpose.xlu0.b32.cont [11/16] 0.0, 128
    %2502 = vxpose.xlu0.b32.cont [12/16] 0.0, 128
    %2503 = vxpose.xlu0.b32.cont [13/16] 0.0, 128
    %2504 = vxpose.xlu0.b32.cont [14/16] 0.0, 128
    %2505 = vxpose.xlu0.b32.cont [15/16] 0.0, 128
    %2506 = vxpose.xlu0.b32.end [16/16] 0.0, 128
    %v2507 = vpop.trf.xlu0
    %v2508 = vpop.trf.xlu0
    %v2509 = vpop.trf.xlu0
    %v2510 = vpop.trf.xlu0
    %v2511 = vpop.trf.xlu0
    %v2512 = vpop.trf.xlu0
    %v2513 = vpop.trf.xlu0
    %v2514 = vpop.trf.xlu0
    %v2515 = vpop.trf.xlu0
    %v2516 = vpop.trf.xlu0
    %v2517 = vpop.trf.xlu0
    %v2518 = vpop.trf.xlu0
    %v2519 = vpop.trf.xlu0
    %v2520 = vpop.trf.xlu0
    %v2521 = vpop.trf.xlu0
    %v2522 = vpop.trf.xlu0
    %v2524 = vsel %vm1040, %v2507, 0
    %v2527 = vsel %vm1040, %v2508, 0
    %v2530 = vsel %vm1040, %v2509, 0
    %v2533 = vsel %vm1040, %v2510, 0
    %v2536 = vsel %vm1040, %v2511, 0
    %v2539 = vsel %vm1040, %v2512, 0
    %v2542 = vsel %vm1040, %v2513, 0
    %v2545 = vsel %vm1040, %v2514, 0
    %2547 = vmatprep.subr.mxu0 0.0
    %2548 = vmatpush1.msra.mxu0 %v619
    %2549 = vmatprep.subr.mxu0 0.0
    %2550 = vmatpush1.msra.mxu0 %v624
    %2551 = vmatprep.subr.mxu0 0.0
    %2552 = vmatpush1.msra.mxu0 %v629
    %2553 = vmatprep.subr.mxu0 0.0
    %2554 = vmatpush1.msra.mxu0 %v634
    %2555 = vmatprep.subr.mxu0 0.0
    %2556 = vmatpush1.msra.mxu0 %v639
    %2557 = vmatprep.subr.mxu0 0.0
    %2558 = vmatpush1.msra.mxu0 %v644
    %2559 = vmatprep.subr.mxu0 0.0
    %2560 = vmatpush1.msra.mxu0 %v649
    %2561 = vmatprep.subr.mxu0 0.0
    %2562 = vmatpush1.msra.mxu0 %v654
    %2563 = vmatprep.subr.mxu0 0.0
    %2564 = vmatpush1.msra.mxu0 0.0
    %2565 = vmatprep.subr.mxu0 0.0
    %2566 = vmatpush1.msra.mxu0 0.0
    %2567 = vmatprep.subr.mxu0 0.0
    %2568 = vmatpush1.msra.mxu0 0.0
    %2569 = vmatprep.subr.mxu0 0.0
    %2570 = vmatpush1.msra.mxu0 0.0
    %2571 = vmatprep.subr.mxu0 0.0
    %2572 = vmatpush1.msra.mxu0 0.0
    %2573 = vmatprep.subr.mxu0 0.0
    %2574 = vmatpush1.msra.mxu0 0.0
    %2575 = vmatprep.subr.mxu0 0.0
    %2576 = vmatpush1.msra.mxu0 0.0
    %2577 = vmatprep.subr.mxu0 0.0
    %2578 = vmatpush1.msra.mxu0 0.0
    %2579 = vmatprep.subr.mxu0 0.0
    %2580 = vmatpush1.msra.mxu0 0.0
    %2581 = vmatprep.subr.mxu0 0.0
    %2582 = vmatpush1.msra.mxu0 0.0
    %2583 = vmatprep.subr.mxu0 0.0
    %2584 = vmatpush1.msra.mxu0 0.0
    %2585 = vmatprep.subr.mxu0 0.0
    %2586 = vmatpush1.msra.mxu0 0.0
    %2587 = vmatprep.subr.mxu0 0.0
    %2588 = vmatpush1.msra.mxu0 0.0
    %2589 = vmatprep.subr.mxu0 0.0
    %2590 = vmatpush1.msra.mxu0 0.0
    %2591 = vmatprep.subr.mxu0 0.0
    %2592 = vmatpush1.msra.mxu0 0.0
    %2593 = vmatprep.subr.mxu0 0.0
    %2594 = vmatpush1.msra.mxu0 0.0
    %2595 = vmatprep.subr.mxu0 0.0
    %2596 = vmatpush1.msra.mxu0 0.0
    %2597 = vmatprep.subr.mxu0 0.0
    %2598 = vmatpush1.msra.mxu0 0.0
    %2599 = vmatprep.subr.mxu0 0.0
    %2600 = vmatpush1.msra.mxu0 0.0
    %2601 = vmatprep.subr.mxu0 0.0
    %2602 = vmatpush1.msra.mxu0 0.0
    %2603 = vmatprep.subr.mxu0 0.0
    %2604 = vmatpush1.msra.mxu0 0.0
    %2605 = vmatprep.subr.mxu0 0.0
    %2606 = vmatpush1.msra.mxu0 0.0
    %2607 = vmatprep.subr.mxu0 0.0
    %2608 = vmatpush1.msra.mxu0 0.0
    %2609 = vmatprep.subr.mxu0 0.0
    %2610 = vmatpush1.msra.mxu0 0.0
    %2611 = vmatprep.mubr.f32.mxu0 0.0
    %2612 = vmatmul.mubr.f32.gmra.mrb[0].mxu0 %v2524
    %v2613 = vpop.f32.mrb[0].mxu0
    %v2614 = vadd.f32 0.0, %v2613
    %v2615 = vpop.f32.mrb[0].mxu0
    %2616 = vmatprep.mubr.f32.mxu0 0.0
    %2617 = vmatmul.mubr.f32.gmra.mrb[0].mxu0 %v2527
    %v2618 = vpop.f32.mrb[0].mxu0
    %v2619 = vadd.f32 0.0, %v2618
    %v2620 = vpop.f32.mrb[0].mxu0
    %2621 = vmatprep.mubr.f32.mxu0 0.0
    %2622 = vmatmul.mubr.f32.gmra.mrb[0].mxu0 %v2530
    %v2623 = vpop.f32.mrb[0].mxu0
    %v2624 = vadd.f32 0.0, %v2623
    %v2625 = vpop.f32.mrb[0].mxu0
    %2626 = vmatprep.mubr.f32.mxu0 0.0
    %2627 = vmatmul.mubr.f32.gmra.mrb[0].mxu0 %v2533
    %v2628 = vpop.f32.mrb[0].mxu0
    %v2629 = vadd.f32 0.0, %v2628
    %v2630 = vpop.f32.mrb[0].mxu0
    %2631 = vmatprep.mubr.f32.mxu0 0.0
    %2632 = vmatmul.mubr.f32.gmra.mrb[0].mxu0 %v2536
    %v2633 = vpop.f32.mrb[0].mxu0
    %v2634 = vadd.f32 0.0, %v2633
    %v2635 = vpop.f32.mrb[0].mxu0
    %2636 = vmatprep.mubr.f32.mxu0 0.0
    %2637 = vmatmul.mubr.f32.gmra.mrb[0].mxu0 %v2539
    %v2638 = vpop.f32.mrb[0].mxu0
    %v2639 = vadd.f32 0.0, %v2638
    %v2640 = vpop.f32.mrb[0].mxu0
    %2641 = vmatprep.mubr.f32.mxu0 0.0
    %2642 = vmatmul.mubr.f32.gmra.mrb[0].mxu0 %v2542
    %v2643 = vpop.f32.mrb[0].mxu0
    %v2644 = vadd.f32 0.0, %v2643
    %v2645 = vpop.f32.mrb[0].mxu0
    %2646 = vmatprep.mubr.f32.mxu0 0.0
    %2647 = vmatmul.mubr.f32.gmra.mrb[0].mxu0 %v2545
    %v2648 = vpop.f32.mrb[0].mxu0
    %v2649 = vadd.f32 0.0, %v2648
    %v2650 = vpop.f32.mrb[0].mxu0
    %2651 = vdwg.mxu0
    %v2653 = vsel %vm199, %v2614, 0
    %v2656 = vsel %vm199, %v2619, 0
    %v2659 = vsel %vm199, %v2624, 0
    %v2662 = vsel %vm199, %v2629, 0
    %v2665 = vsel %vm199, %v2634, 0
    %v2668 = vsel %vm199, %v2639, 0
    %v2671 = vsel %vm199, %v2644, 0
    %v2674 = vsel %vm199, %v2649, 0
    %2676 = vmatprep.subr.mxu0 0.0
    %2677 = vmatpush1.msra.mxu0 %v1386
    %2678 = vmatprep.subr.mxu0 0.0
    %2679 = vmatpush1.msra.mxu0 %v1387
    %2680 = vmatprep.subr.mxu0 0.0
    %2681 = vmatpush1.msra.mxu0 %v1388
    %2682 = vmatprep.subr.mxu0 0.0
    %2683 = vmatpush1.msra.mxu0 %v1389
    %2684 = vmatprep.subr.mxu0 0.0
    %2685 = vmatpush1.msra.mxu0 0.0
    %2686 = vmatprep.subr.mxu0 0.0
    %2687 = vmatpush1.msra.mxu0 0.0
    %2688 = vmatprep.subr.mxu0 0.0
    %2689 = vmatpush1.msra.mxu0 0.0
    %2690 = vmatprep.subr.mxu0 0.0
    %2691 = vmatpush1.msra.mxu0 0.0
    %2692 = vmatprep.subr.mxu0 0.0
    %2693 = vmatpush1.msra.mxu0 0.0
    %2694 = vmatprep.subr.mxu0 0.0
    %2695 = vmatpush1.msra.mxu0 0.0
    %2696 = vmatprep.subr.mxu0 0.0
    %2697 = vmatpush1.msra.mxu0 0.0
    %2698 = vmatprep.subr.mxu0 0.0
    %2699 = vmatpush1.msra.mxu0 0.0
    %2700 = vmatprep.subr.mxu0 0.0
    %2701 = vmatpush1.msra.mxu0 0.0
    %2702 = vmatprep.subr.mxu0 0.0
    %2703 = vmatpush1.msra.mxu0 0.0
    %2704 = vmatprep.subr.mxu0 0.0
    %2705 = vmatpush1.msra.mxu0 0.0
    %2706 = vmatprep.subr.mxu0 0.0
    %2707 = vmatpush1.msra.mxu0 0.0
    %2708 = vmatprep.subr.mxu0 0.0
    %2709 = vmatpush1.msra.mxu0 0.0
    %2710 = vmatprep.subr.mxu0 0.0
    %2711 = vmatpush1.msra.mxu0 0.0
    %2712 = vmatprep.subr.mxu0 0.0
    %2713 = vmatpush1.msra.mxu0 0.0
    %2714 = vmatprep.subr.mxu0 0.0
    %2715 = vmatpush1.msra.mxu0 0.0
    %2716 = vmatprep.subr.mxu0 0.0
    %2717 = vmatpush1.msra.mxu0 0.0
    %2718 = vmatprep.subr.mxu0 0.0
    %2719 = vmatpush1.msra.mxu0 0.0
    %2720 = vmatprep.subr.mxu0 0.0
    %2721 = vmatpush1.msra.mxu0 0.0
    %2722 = vmatprep.subr.mxu0 0.0
    %2723 = vmatpush1.msra.mxu0 0.0
    %2724 = vmatprep.subr.mxu0 0.0
    %2725 = vmatpush1.msra.mxu0 0.0
    %2726 = vmatprep.subr.mxu0 0.0
    %2727 = vmatpush1.msra.mxu0 0.0
    %2728 = vmatprep.subr.mxu0 0.0
    %2729 = vmatpush1.msra.mxu0 0.0
    %2730 = vmatprep.subr.mxu0 0.0
    %2731 = vmatpush1.msra.mxu0 0.0
    %2732 = vmatprep.subr.mxu0 0.0
    %2733 = vmatpush1.msra.mxu0 0.0
    %2734 = vmatprep.subr.mxu0 0.0
    %2735 = vmatpush1.msra.mxu0 0.0
    %2736 = vmatprep.subr.mxu0 0.0
    %2737 = vmatpush1.msra.mxu0 0.0
    %2738 = vmatprep.subr.mxu0 0.0
    %2739 = vmatpush1.msra.mxu0 0.0
    %2740 = vmatprep.mubr.f32.mxu0 0.0
    %2741 = vmatmul.mubr.f32.gmra.mrb[0].mxu0 %v2653
    %v2742 = vpop.f32.mrb[0].mxu0
    %v2743 = vadd.f32 0.0, %v2742
    %v2744 = vpop.f32.mrb[0].mxu0
    %2745 = vmatprep.mubr.f32.mxu0 0.0
    %2746 = vmatmul.mubr.f32.gmra.mrb[0].mxu0 %v2656
    %v2747 = vpop.f32.mrb[0].mxu0
    %v2748 = vadd.f32 0.0, %v2747
    %v2749 = vpop.f32.mrb[0].mxu0
    %2750 = vmatprep.mubr.f32.mxu0 0.0
    %2751 = vmatmul.mubr.f32.gmra.mrb[0].mxu0 %v2659
    %v2752 = vpop.f32.mrb[0].mxu0
    %v2753 = vadd.f32 0.0, %v2752
    %v2754 = vpop.f32.mrb[0].mxu0
    %2755 = vmatprep.mubr.f32.mxu0 0.0
    %2756 = vmatmul.mubr.f32.gmra.mrb[0].mxu0 %v2662
    %v2757 = vpop.f32.mrb[0].mxu0
    %v2758 = vadd.f32 0.0, %v2757
    %v2759 = vpop.f32.mrb[0].mxu0
    %2760 = vmatprep.mubr.f32.mxu0 0.0
    %2761 = vmatmul.mubr.f32.gmra.mrb[0].mxu0 %v2665
    %v2762 = vpop.f32.mrb[0].mxu0
    %v2763 = vadd.f32 0.0, %v2762
    %v2764 = vpop.f32.mrb[0].mxu0
    %2765 = vmatprep.mubr.f32.mxu0 0.0
    %2766 = vmatmul.mubr.f32.gmra.mrb[0].mxu0 %v2668
    %v2767 = vpop.f32.mrb[0].mxu0
    %v2768 = vadd.f32 0.0, %v2767
    %v2769 = vpop.f32.mrb[0].mxu0
    %2770 = vmatprep.mubr.f32.mxu0 0.0
    %2771 = vmatmul.mubr.f32.gmra.mrb[0].mxu0 %v2671
    %v2772 = vpop.f32.mrb[0].mxu0
    %v2773 = vadd.f32 0.0, %v2772
    %v2774 = vpop.f32.mrb[0].mxu0
    %2775 = vmatprep.mubr.f32.mxu0 0.0
    %2776 = vmatmul.mubr.f32.gmra.mrb[0].mxu0 %v2674
    %v2777 = vpop.f32.mrb[0].mxu0
    %v2778 = vadd.f32 0.0, %v2777
    %v2779 = vpop.f32.mrb[0].mxu0
    %2780 = vdwg.mxu0
    %2781 = vmatprep.subr.mxu0 0.0
    %2782 = vmatpush1.msra.mxu0 %v1390
    %2783 = vmatprep.subr.mxu0 0.0
    %2784 = vmatpush1.msra.mxu0 %v1391
    %2785 = vmatprep.subr.mxu0 0.0
    %2786 = vmatpush1.msra.mxu0 %v1392
    %2787 = vmatprep.subr.mxu0 0.0
    %2788 = vmatpush1.msra.mxu0 %v1393
    %2789 = vmatprep.subr.mxu0 0.0
    %2790 = vmatpush1.msra.mxu0 0.0
    %2791 = vmatprep.subr.mxu0 0.0
    %2792 = vmatpush1.msra.mxu0 0.0
    %2793 = vmatprep.subr.mxu0 0.0
    %2794 = vmatpush1.msra.mxu0 0.0
    %2795 = vmatprep.subr.mxu0 0.0
    %2796 = vmatpush1.msra.mxu0 0.0
    %2797 = vmatprep.subr.mxu0 0.0
    %2798 = vmatpush1.msra.mxu0 0.0
    %2799 = vmatprep.subr.mxu0 0.0
    %2800 = vmatpush1.msra.mxu0 0.0
    %2801 = vmatprep.subr.mxu0 0.0
    %2802 = vmatpush1.msra.mxu0 0.0
    %2803 = vmatprep.subr.mxu0 0.0
    %2804 = vmatpush1.msra.mxu0 0.0
    %2805 = vmatprep.subr.mxu0 0.0
    %2806 = vmatpush1.msra.mxu0 0.0
    %2807 = vmatprep.subr.mxu0 0.0
    %2808 = vmatpush1.msra.mxu0 0.0
    %2809 = vmatprep.subr.mxu0 0.0
    %2810 = vmatpush1.msra.mxu0 0.0
    %2811 = vmatprep.subr.mxu0 0.0
    %2812 = vmatpush1.msra.mxu0 0.0
    %2813 = vmatprep.subr.mxu0 0.0
    %2814 = vmatpush1.msra.mxu0 0.0
    %2815 = vmatprep.subr.mxu0 0.0
    %2816 = vmatpush1.msra.mxu0 0.0
    %2817 = vmatprep.subr.mxu0 0.0
    %2818 = vmatpush1.msra.mxu0 0.0
    %2819 = vmatprep.subr.mxu0 0.0
    %2820 = vmatpush1.msra.mxu0 0.0
    %2821 = vmatprep.subr.mxu0 0.0
    %2822 = vmatpush1.msra.mxu0 0.0
    %2823 = vmatprep.subr.mxu0 0.0
    %2824 = vmatpush1.msra.mxu0 0.0
    %2825 = vmatprep.subr.mxu0 0.0
    %2826 = vmatpush1.msra.mxu0 0.0
    %2827 = vmatprep.subr.mxu0 0.0
    %2828 = vmatpush1.msra.mxu0 0.0
    %2829 = vmatprep.subr.mxu0 0.0
    %2830 = vmatpush1.msra.mxu0 0.0
    %2831 = vmatprep.subr.mxu0 0.0
    %2832 = vmatpush1.msra.mxu0 0.0
    %2833 = vmatprep.subr.mxu0 0.0
    %2834 = vmatpush1.msra.mxu0 0.0
    %2835 = vmatprep.subr.mxu0 0.0
    %2836 = vmatpush1.msra.mxu0 0.0
    %2837 = vmatprep.subr.mxu0 0.0
    %2838 = vmatpush1.msra.mxu0 0.0
    %2839 = vmatprep.subr.mxu0 0.0
    %2840 = vmatpush1.msra.mxu0 0.0
    %2841 = vmatprep.subr.mxu0 0.0
    %2842 = vmatpush1.msra.mxu0 0.0
    %2843 = vmatprep.subr.mxu0 0.0
    %2844 = vmatpush1.msra.mxu0 0.0
    %2845 = vmatprep.mubr.f32.mxu0 0.0
    %2846 = vmatmul.mubr.f32.gmra.mrb[0].mxu0 %v2653
    %v2847 = vpop.f32.mrb[0].mxu0
    %v2848 = vadd.f32 0.0, %v2847
    %v2849 = vpop.f32.mrb[0].mxu0
    %2850 = vmatprep.mubr.f32.mxu0 0.0
    %2851 = vmatmul.mubr.f32.gmra.mrb[0].mxu0 %v2656
    %v2852 = vpop.f32.mrb[0].mxu0
    %v2853 = vadd.f32 0.0, %v2852
    %v2854 = vpop.f32.mrb[0].mxu0
    %2855 = vmatprep.mubr.f32.mxu0 0.0
    %2856 = vmatmul.mubr.f32.gmra.mrb[0].mxu0 %v2659
    %v2857 = vpop.f32.mrb[0].mxu0
    %v2858 = vadd.f32 0.0, %v2857
    %v2859 = vpop.f32.mrb[0].mxu0
    %2860 = vmatprep.mubr.f32.mxu0 0.0
    %2861 = vmatmul.mubr.f32.gmra.mrb[0].mxu0 %v2662
    %v2862 = vpop.f32.mrb[0].mxu0
    %v2863 = vadd.f32 0.0, %v2862
    %v2864 = vpop.f32.mrb[0].mxu0
    %2865 = vmatprep.mubr.f32.mxu0 0.0
    %2866 = vmatmul.mubr.f32.gmra.mrb[0].mxu0 %v2665
    %v2867 = vpop.f32.mrb[0].mxu0
    %v2868 = vadd.f32 0.0, %v2867
    %v2869 = vpop.f32.mrb[0].mxu0
    %2870 = vmatprep.mubr.f32.mxu0 0.0
    %2871 = vmatmul.mubr.f32.gmra.mrb[0].mxu0 %v2668
    %v2872 = vpop.f32.mrb[0].mxu0
    %v2873 = vadd.f32 0.0, %v2872
    %v2874 = vpop.f32.mrb[0].mxu0
    %2875 = vmatprep.mubr.f32.mxu0 0.0
    %2876 = vmatmul.mubr.f32.gmra.mrb[0].mxu0 %v2671
    %v2877 = vpop.f32.mrb[0].mxu0
    %v2878 = vadd.f32 0.0, %v2877
    %v2879 = vpop.f32.mrb[0].mxu0
    %2880 = vmatprep.mubr.f32.mxu0 0.0
    %2881 = vmatmul.mubr.f32.gmra.mrb[0].mxu0 %v2674
    %v2882 = vpop.f32.mrb[0].mxu0
    %v2883 = vadd.f32 0.0, %v2882
    %v2884 = vpop.f32.mrb[0].mxu0
    %2885 = vdwg.mxu0
    %v2886 = vmul.f32 %v2848, %v1370
    %v2887 = vmul.f32 %v2853, %v1371
    %v2888 = vmul.f32 %v2858, %v1372
    %v2889 = vmul.f32 %v2863, %v1373
    %v2890 = vmul.f32 %v2868, %v1374
    %v2891 = vmul.f32 %v2873, %v1375
    %v2892 = vmul.f32 %v2878, %v1376
    %v2893 = vmul.f32 %v2883, %v1377
    %2894 = vmatprep.subr.mxu0 0.0
    %2895 = vmatpush1.msra.mxu0 %v1394
    %2896 = vmatprep.subr.mxu0 0.0
    %2897 = vmatpush1.msra.mxu0 %v1395
    %2898 = vmatprep.subr.mxu0 0.0
    %2899 = vmatpush1.msra.mxu0 %v1396
    %2900 = vmatprep.subr.mxu0 0.0
    %2901 = vmatpush1.msra.mxu0 %v1397
    %2902 = vmatprep.subr.mxu0 0.0
    %2903 = vmatpush1.msra.mxu0 0.0
    %2904 = vmatprep.subr.mxu0 0.0
    %2905 = vmatpush1.msra.mxu0 0.0
    %2906 = vmatprep.subr.mxu0 0.0
    %2907 = vmatpush1.msra.mxu0 0.0
    %2908 = vmatprep.subr.mxu0 0.0
    %2909 = vmatpush1.msra.mxu0 0.0
    %2910 = vmatprep.subr.mxu0 0.0
    %2911 = vmatpush1.msra.mxu0 0.0
    %2912 = vmatprep.subr.mxu0 0.0
    %2913 = vmatpush1.msra.mxu0 0.0
    %2914 = vmatprep.subr.mxu0 0.0
    %2915 = vmatpush1.msra.mxu0 0.0
    %2916 = vmatprep.subr.mxu0 0.0
    %2917 = vmatpush1.msra.mxu0 0.0
    %2918 = vmatprep.subr.mxu0 0.0
    %2919 = vmatpush1.msra.mxu0 0.0
    %2920 = vmatprep.subr.mxu0 0.0
    %2921 = vmatpush1.msra.mxu0 0.0
    %2922 = vmatprep.subr.mxu0 0.0
    %2923 = vmatpush1.msra.mxu0 0.0
    %2924 = vmatprep.subr.mxu0 0.0
    %2925 = vmatpush1.msra.mxu0 0.0
    %2926 = vmatprep.subr.mxu0 0.0
    %2927 = vmatpush1.msra.mxu0 0.0
    %2928 = vmatprep.subr.mxu0 0.0
    %2929 = vmatpush1.msra.mxu0 0.0
    %2930 = vmatprep.subr.mxu0 0.0
    %2931 = vmatpush1.msra.mxu0 0.0
    %2932 = vmatprep.subr.mxu0 0.0
    %2933 = vmatpush1.msra.mxu0 0.0
    %2934 = vmatprep.subr.mxu0 0.0
    %2935 = vmatpush1.msra.mxu0 0.0
    %2936 = vmatprep.subr.mxu0 0.0
    %2937 = vmatpush1.msra.mxu0 0.0
    %2938 = vmatprep.subr.mxu0 0.0
    %2939 = vmatpush1.msra.mxu0 0.0
    %2940 = vmatprep.subr.mxu0 0.0
    %2941 = vmatpush1.msra.mxu0 0.0
    %2942 = vmatprep.subr.mxu0 0.0
    %2943 = vmatpush1.msra.mxu0 0.0
    %2944 = vmatprep.subr.mxu0 0.0
    %2945 = vmatpush1.msra.mxu0 0.0
    %2946 = vmatprep.subr.mxu0 0.0
    %2947 = vmatpush1.msra.mxu0 0.0
    %2948 = vmatprep.subr.mxu0 0.0
    %2949 = vmatpush1.msra.mxu0 0.0
    %2950 = vmatprep.subr.mxu0 0.0
    %2951 = vmatpush1.msra.mxu0 0.0
    %2952 = vmatprep.subr.mxu0 0.0
    %2953 = vmatpush1.msra.mxu0 0.0
    %2954 = vmatprep.subr.mxu0 0.0
    %2955 = vmatpush1.msra.mxu0 0.0
    %2956 = vmatprep.subr.mxu0 0.0
    %2957 = vmatpush1.msra.mxu0 0.0
    %2958 = vmatprep.mubr.f32.mxu0 0.0
    %2959 = vmatmul.mubr.f32.gmra.mrb[0].mxu0 %v2653
    %v2960 = vpop.f32.mrb[0].mxu0
    %v2961 = vadd.f32 0.0, %v2960
    %v2962 = vpop.f32.mrb[0].mxu0
    %2963 = vmatprep.mubr.f32.mxu0 0.0
    %2964 = vmatmul.mubr.f32.gmra.mrb[0].mxu0 %v2656
    %v2965 = vpop.f32.mrb[0].mxu0
    %v2966 = vadd.f32 0.0, %v2965
    %v2967 = vpop.f32.mrb[0].mxu0
    %2968 = vmatprep.mubr.f32.mxu0 0.0
    %2969 = vmatmul.mubr.f32.gmra.mrb[0].mxu0 %v2659
    %v2970 = vpop.f32.mrb[0].mxu0
    %v2971 = vadd.f32 0.0, %v2970
    %v2972 = vpop.f32.mrb[0].mxu0
    %2973 = vmatprep.mubr.f32.mxu0 0.0
    %2974 = vmatmul.mubr.f32.gmra.mrb[0].mxu0 %v2662
    %v2975 = vpop.f32.mrb[0].mxu0
    %v2976 = vadd.f32 0.0, %v2975
    %v2977 = vpop.f32.mrb[0].mxu0
    %2978 = vmatprep.mubr.f32.mxu0 0.0
    %2979 = vmatmul.mubr.f32.gmra.mrb[0].mxu0 %v2665
    %v2980 = vpop.f32.mrb[0].mxu0
    %v2981 = vadd.f32 0.0, %v2980
    %v2982 = vpop.f32.mrb[0].mxu0
    %2983 = vmatprep.mubr.f32.mxu0 0.0
    %2984 = vmatmul.mubr.f32.gmra.mrb[0].mxu0 %v2668
    %v2985 = vpop.f32.mrb[0].mxu0
    %v2986 = vadd.f32 0.0, %v2985
    %v2987 = vpop.f32.mrb[0].mxu0
    %2988 = vmatprep.mubr.f32.mxu0 0.0
    %2989 = vmatmul.mubr.f32.gmra.mrb[0].mxu0 %v2671
    %v2990 = vpop.f32.mrb[0].mxu0
    %v2991 = vadd.f32 0.0, %v2990
    %v2992 = vpop.f32.mrb[0].mxu0
    %2993 = vmatprep.mubr.f32.mxu0 0.0
    %2994 = vmatmul.mubr.f32.gmra.mrb[0].mxu0 %v2674
    %v2995 = vpop.f32.mrb[0].mxu0
    %v2996 = vadd.f32 0.0, %v2995
    %v2997 = vpop.f32.mrb[0].mxu0
    %2998 = vdwg.mxu0
    %v3000 = vsel %vm199, %v2743, 0
    %v3003 = vsel %vm199, %v2748, 0
    %v3006 = vsel %vm199, %v2753, 0
    %v3009 = vsel %vm199, %v2758, 0
    %v3012 = vsel %vm199, %v2763, 0
    %v3015 = vsel %vm199, %v2768, 0
    %v3018 = vsel %vm199, %v2773, 0
    %v3021 = vsel %vm199, %v2778, 0
    %v3024 = vsel %vm199, %v2886, 0
    %v3027 = vsel %vm199, %v2887, 0
    %v3030 = vsel %vm199, %v2888, 0
    %v3033 = vsel %vm199, %v2889, 0
    %v3036 = vsel %vm199, %v2890, 0
    %v3039 = vsel %vm199, %v2891, 0
    %v3042 = vsel %vm199, %v2892, 0
    %v3045 = vsel %vm199, %v2893, 0
    %3047 = vmatprep.subr.mxu0 0.0
    %3048 = vmatpush1.xpose.msra.mxu0 %v3024
    %3049 = vmatprep.subr.mxu0 0.0
    %3050 = vmatpush1.xpose.msra.mxu0 %v3027
    %3051 = vmatprep.subr.mxu0 0.0
    %3052 = vmatpush1.xpose.msra.mxu0 %v3030
    %3053 = vmatprep.subr.mxu0 0.0
    %3054 = vmatpush1.xpose.msra.mxu0 %v3033
    %3055 = vmatprep.subr.mxu0 0.0
    %3056 = vmatpush1.xpose.msra.mxu0 %v3036
    %3057 = vmatprep.subr.mxu0 0.0
    %3058 = vmatpush1.xpose.msra.mxu0 %v3039
    %3059 = vmatprep.subr.mxu0 0.0
    %3060 = vmatpush1.xpose.msra.mxu0 %v3042
    %3061 = vmatprep.subr.mxu0 0.0
    %3062 = vmatpush1.xpose.msra.mxu0 %v3045
    %3063 = vmatprep.subr.mxu0 0.0
    %3064 = vmatpush1.xpose.msra.mxu0 0.0
    %3065 = vmatprep.subr.mxu0 0.0
    %3066 = vmatpush1.xpose.msra.mxu0 0.0
    %3067 = vmatprep.subr.mxu0 0.0
    %3068 = vmatpush1.xpose.msra.mxu0 0.0
    %3069 = vmatprep.subr.mxu0 0.0
    %3070 = vmatpush1.xpose.msra.mxu0 0.0
    %3071 = vmatprep.subr.mxu0 0.0
    %3072 = vmatpush1.xpose.msra.mxu0 0.0
    %3073 = vmatprep.subr.mxu0 0.0
    %3074 = vmatpush1.xpose.msra.mxu0 0.0
    %3075 = vmatprep.subr.mxu0 0.0
    %3076 = vmatpush1.xpose.msra.mxu0 0.0
    %3077 = vmatprep.subr.mxu0 0.0
    %3078 = vmatpush1.xpose.msra.mxu0 0.0
    %3079 = vmatprep.subr.mxu0 0.0
    %3080 = vmatpush1.xpose.msra.mxu0 0.0
    %3081 = vmatprep.subr.mxu0 0.0
    %3082 = vmatpush1.xpose.msra.mxu0 0.0
    %3083 = vmatprep.subr.mxu0 0.0
    %3084 = vmatpush1.xpose.msra.mxu0 0.0
    %3085 = vmatprep.subr.mxu0 0.0
    %3086 = vmatpush1.xpose.msra.mxu0 0.0
    %3087 = vmatprep.subr.mxu0 0.0
    %3088 = vmatpush1.xpose.msra.mxu0 0.0
    %3089 = vmatprep.subr.mxu0 0.0
    %3090 = vmatpush1.xpose.msra.mxu0 0.0
    %3091 = vmatprep.subr.mxu0 0.0
    %3092 = vmatpush1.xpose.msra.mxu0 0.0
    %3093 = vmatprep.subr.mxu0 0.0
    %3094 = vmatpush1.xpose.msra.mxu0 0.0
    %3095 = vmatprep.subr.mxu0 0.0
    %3096 = vmatpush1.xpose.msra.mxu0 0.0
    %3097 = vmatprep.subr.mxu0 0.0
    %3098 = vmatpush1.xpose.msra.mxu0 0.0
    %3099 = vmatprep.subr.mxu0 0.0
    %3100 = vmatpush1.xpose.msra.mxu0 0.0
    %3101 = vmatprep.subr.mxu0 0.0
    %3102 = vmatpush1.xpose.msra.mxu0 0.0
    %3103 = vmatprep.subr.mxu0 0.0
    %3104 = vmatpush1.xpose.msra.mxu0 0.0
    %3105 = vmatprep.subr.mxu0 0.0
    %3106 = vmatpush1.xpose.msra.mxu0 0.0
    %3107 = vmatprep.subr.mxu0 0.0
    %3108 = vmatpush1.xpose.msra.mxu0 0.0
    %3109 = vmatprep.subr.mxu0 0.0
    %3110 = vmatpush1.xpose.msra.mxu0 0.0
    %3111 = vmatprep.mubr.f32.mxu0 0.0
    %3112 = vmatmul.mubr.f32.gmra.mrb[0].mxu0 %v3000
    %v3113 = vpop.f32.mrb[0].mxu0
    %v3114 = vadd.f32 0.0, %v3113
    %v3115 = vpop.f32.mrb[0].mxu0
    %3116 = vmatprep.mubr.f32.mxu0 0.0
    %3117 = vmatmul.mubr.f32.gmra.mrb[0].mxu0 %v3003
    %v3118 = vpop.f32.mrb[0].mxu0
    %v3119 = vadd.f32 0.0, %v3118
    %v3120 = vpop.f32.mrb[0].mxu0
    %3121 = vmatprep.mubr.f32.mxu0 0.0
    %3122 = vmatmul.mubr.f32.gmra.mrb[0].mxu0 %v3006
    %v3123 = vpop.f32.mrb[0].mxu0
    %v3124 = vadd.f32 0.0, %v3123
    %v3125 = vpop.f32.mrb[0].mxu0
    %3126 = vmatprep.mubr.f32.mxu0 0.0
    %3127 = vmatmul.mubr.f32.gmra.mrb[0].mxu0 %v3009
    %v3128 = vpop.f32.mrb[0].mxu0
    %v3129 = vadd.f32 0.0, %v3128
    %v3130 = vpop.f32.mrb[0].mxu0
    %3131 = vmatprep.mubr.f32.mxu0 0.0
    %3132 = vmatmul.mubr.f32.gmra.mrb[0].mxu0 %v3012
    %v3133 = vpop.f32.mrb[0].mxu0
    %v3134 = vadd.f32 0.0, %v3133
    %v3135 = vpop.f32.mrb[0].mxu0
    %3136 = vmatprep.mubr.f32.mxu0 0.0
    %3137 = vmatmul.mubr.f32.gmra.mrb[0].mxu0 %v3015
    %v3138 = vpop.f32.mrb[0].mxu0
    %v3139 = vadd.f32 0.0, %v3138
    %v3140 = vpop.f32.mrb[0].mxu0
    %3141 = vmatprep.mubr.f32.mxu0 0.0
    %3142 = vmatmul.mubr.f32.gmra.mrb[0].mxu0 %v3018
    %v3143 = vpop.f32.mrb[0].mxu0
    %v3144 = vadd.f32 0.0, %v3143
    %v3145 = vpop.f32.mrb[0].mxu0
    %3146 = vmatprep.mubr.f32.mxu0 0.0
    %3147 = vmatmul.mubr.f32.gmra.mrb[0].mxu0 %v3021
    %v3148 = vpop.f32.mrb[0].mxu0
    %v3149 = vadd.f32 0.0, %v3148
    %v3150 = vpop.f32.mrb[0].mxu0
    %3151 = vdwg.mxu0
    %v3152 = vmul.f32 %v3114, 0.35355338
    %v3153 = vmul.f32 %v3119, 0.35355338
    %v3154 = vmul.f32 %v3124, 0.35355338
    %v3155 = vmul.f32 %v3129, 0.35355338
    %v3156 = vmul.f32 %v3134, 0.35355338
    %v3157 = vmul.f32 %v3139, 0.35355338
    %v3158 = vmul.f32 %v3144, 0.35355338
    %v3159 = vmul.f32 %v3149, 0.35355338
    %v3160 = vadd.f32 %v3152, %v1378
    %v3161 = vadd.f32 %v3153, %v1379
    %v3162 = vadd.f32 %v3154, %v1380
    %v3163 = vadd.f32 %v3155, %v1381
    %v3164 = vadd.f32 %v3156, %v1382
    %v3165 = vadd.f32 %v3157, %v1383
    %v3166 = vadd.f32 %v3158, %v1384
    %v3167 = vadd.f32 %v3159, %v1385
    %v3168 = vsel %vm1040, %v3160, -inf
    %3169 = vmax.xlane.f32.xlu0 %v3168
    %v3170 = vpop.xlane.xlu0 %3169
    %v3171 = vsel %vm1040, %v3161, -inf
    %3172 = vmax.xlane.f32.xlu0 %v3171
    %v3173 = vpop.xlane.xlu0 %3172
    %v3174 = vsel %vm1040, %v3162, -inf
    %3175 = vmax.xlane.f32.xlu0 %v3174
    %v3176 = vpop.xlane.xlu0 %3175
    %v3177 = vsel %vm1040, %v3163, -inf
    %3178 = vmax.xlane.f32.xlu0 %v3177
    %v3179 = vpop.xlane.xlu0 %3178
    %v3180 = vsel %vm1040, %v3164, -inf
    %3181 = vmax.xlane.f32.xlu0 %v3180
    %v3182 = vpop.xlane.xlu0 %3181
    %v3183 = vsel %vm1040, %v3165, -inf
    %3184 = vmax.xlane.f32.xlu0 %v3183
    %v3185 = vpop.xlane.xlu0 %3184
    %v3186 = vsel %vm1040, %v3166, -inf
    %3187 = vmax.xlane.f32.xlu0 %v3186
    %v3188 = vpop.xlane.xlu0 %3187
    %v3189 = vsel %vm1040, %v3167, -inf
    %3190 = vmax.xlane.f32.xlu0 %v3189
    %v3191 = vpop.xlane.xlu0 %3190
    %v3192 = vsub.f32 %v3160, %v3170
    %v3193 = vsub.f32 %v3161, %v3173
    %v3194 = vsub.f32 %v3162, %v3176
    %v3195 = vsub.f32 %v3163, %v3179
    %v3196 = vsub.f32 %v3164, %v3182
    %v3197 = vsub.f32 %v3165, %v3185
    %v3198 = vsub.f32 %v3166, %v3188
    %v3199 = vsub.f32 %v3167, %v3191
    %v3200 = vmul.f32 %v3192, 1.442695
    %v3201 = vpow.pop %v3200
    %v3202 = vmul.f32 %v3193, 1.442695
    %v3203 = vpow.pop %v3202
    %v3204 = vmul.f32 %v3194, 1.442695
    %v3205 = vpow.pop %v3204
    %v3206 = vmul.f32 %v3195, 1.442695
    %v3207 = vpow.pop %v3206
    %v3208 = vmul.f32 %v3196, 1.442695
    %v3209 = vpow.pop %v3208
    %v3210 = vmul.f32 %v3197, 1.442695
    %v3211 = vpow.pop %v3210
    %v3212 = vmul.f32 %v3198, 1.442695
    %v3213 = vpow.pop %v3212
    %v3214 = vmul.f32 %v3199, 1.442695
    %v3215 = vpow.pop %v3214
    %v3216 = vsel %vm1040, %v3201, 0.0
    %3217 = vadd.xlane.f32.xlu0 %v3216
    %v3218 = vpop.xlane.xlu0 %3217
    %v3219 = vsel %vm1040, %v3203, 0.0
    %3220 = vadd.xlane.f32.xlu0 %v3219
    %v3221 = vpop.xlane.xlu0 %3220
    %v3222 = vsel %vm1040, %v3205, 0.0
    %3223 = vadd.xlane.f32.xlu0 %v3222
    %v3224 = vpop.xlane.xlu0 %3223
    %v3225 = vsel %vm1040, %v3207, 0.0
    %3226 = vadd.xlane.f32.xlu0 %v3225
    %v3227 = vpop.xlane.xlu0 %3226
    %v3228 = vsel %vm1040, %v3209, 0.0
    %3229 = vadd.xlane.f32.xlu0 %v3228
    %v3230 = vpop.xlane.xlu0 %3229
    %v3231 = vsel %vm1040, %v3211, 0.0
    %3232 = vadd.xlane.f32.xlu0 %v3231
    %v3233 = vpop.xlane.xlu0 %3232
    %v3234 = vsel %vm1040, %v3213, 0.0
    %3235 = vadd.xlane.f32.xlu0 %v3234
    %v3236 = vpop.xlane.xlu0 %3235
    %v3237 = vsel %vm1040, %v3215, 0.0
    %3238 = vadd.xlane.f32.xlu0 %v3237
    %v3239 = vpop.xlane.xlu0 %3238
    %v3240 = vrcp.pop %v3218
    %v3241 = vrcp.pop %v3221
    %v3242 = vrcp.pop %v3224
    %v3243 = vrcp.pop %v3227
    %v3244 = vrcp.pop %v3230
    %v3245 = vrcp.pop %v3233
    %v3246 = vrcp.pop %v3236
    %v3247 = vrcp.pop %v3239
    %v3248 = vmul.f32 %v3201, %v3240
    %v3249 = vmul.f32 %v3203, %v3241
    %v3250 = vmul.f32 %v3205, %v3242
    %v3251 = vmul.f32 %v3207, %v3243
    %v3252 = vmul.f32 %v3209, %v3244
    %v3253 = vmul.f32 %v3211, %v3245
    %v3254 = vmul.f32 %v3213, %v3246
    %v3255 = vmul.f32 %v3215, %v3247
    %v3257 = vsel %vm1040, %v3248, 0
    %v3260 = vsel %vm1040, %v3249, 0
    %v3263 = vsel %vm1040, %v3250, 0
    %v3266 = vsel %vm1040, %v3251, 0
    %v3269 = vsel %vm1040, %v3252, 0
    %v3272 = vsel %vm1040, %v3253, 0
    %v3275 = vsel %vm1040, %v3254, 0
    %v3278 = vsel %vm1040, %v3255, 0
    %3280 = vmatprep.subr.mxu0 0.0
    %3281 = vmatpush1.msra.mxu0 %v2961
    %3282 = vmatprep.subr.mxu0 0.0
    %3283 = vmatpush1.msra.mxu0 %v2966
    %3284 = vmatprep.subr.mxu0 0.0
    %3285 = vmatpush1.msra.mxu0 %v2971
    %3286 = vmatprep.subr.mxu0 0.0
    %3287 = vmatpush1.msra.mxu0 %v2976
    %3288 = vmatprep.subr.mxu0 0.0
    %3289 = vmatpush1.msra.mxu0 %v2981
    %3290 = vmatprep.subr.mxu0 0.0
    %3291 = vmatpush1.msra.mxu0 %v2986
    %3292 = vmatprep.subr.mxu0 0.0
    %3293 = vmatpush1.msra.mxu0 %v2991
    %3294 = vmatprep.subr.mxu0 0.0
    %3295 = vmatpush1.msra.mxu0 %v2996
    %3296 = vmatprep.subr.mxu0 0.0
    %3297 = vmatpush1.msra.mxu0 0.0
    %3298 = vmatprep.subr.mxu0 0.0
    %3299 = vmatpush1.msra.mxu0 0.0
    %3300 = vmatprep.subr.mxu0 0.0
    %3301 = vmatpush1.msra.mxu0 0.0
    %3302 = vmatprep.subr.mxu0 0.0
    %3303 = vmatpush1.msra.mxu0 0.0
    %3304 = vmatprep.subr.mxu0 0.0
    %3305 = vmatpush1.msra.mxu0 0.0
    %3306 = vmatprep.subr.mxu0 0.0
    %3307 = vmatpush1.msra.mxu0 0.0
    %3308 = vmatprep.subr.mxu0 0.0
    %3309 = vmatpush1.msra.mxu0 0.0
    %3310 = vmatprep.subr.mxu0 0.0
    %3311 = vmatpush1.msra.mxu0 0.0
    %3312 = vmatprep.subr.mxu0 0.0
    %3313 = vmatpush1.msra.mxu0 0.0
    %3314 = vmatprep.subr.mxu0 0.0
    %3315 = vmatpush1.msra.mxu0 0.0
    %3316 = vmatprep.subr.mxu0 0.0
    %3317 = vmatpush1.msra.mxu0 0.0
    %3318 = vmatprep.subr.mxu0 0.0
    %3319 = vmatpush1.msra.mxu0 0.0
    %3320 = vmatprep.subr.mxu0 0.0
    %3321 = vmatpush1.msra.mxu0 0.0
    %3322 = vmatprep.subr.mxu0 0.0
    %3323 = vmatpush1.msra.mxu0 0.0
    %3324 = vmatprep.subr.mxu0 0.0
    %3325 = vmatpush1.msra.mxu0 0.0
    %3326 = vmatprep.subr.mxu0 0.0
    %3327 = vmatpush1.msra.mxu0 0.0
    %3328 = vmatprep.subr.mxu0 0.0
    %3329 = vmatpush1.msra.mxu0 0.0
    %3330 = vmatprep.subr.mxu0 0.0
    %3331 = vmatpush1.msra.mxu0 0.0
    %3332 = vmatprep.subr.mxu0 0.0
    %3333 = vmatpush1.msra.mxu0 0.0
    %3334 = vmatprep.subr.mxu0 0.0
    %3335 = vmatpush1.msra.mxu0 0.0
    %3336 = vmatprep.subr.mxu0 0.0
    %3337 = vmatpush1.msra.mxu0 0.0
    %3338 = vmatprep.subr.mxu0 0.0
    %3339 = vmatpush1.msra.mxu0 0.0
    %3340 = vmatprep.subr.mxu0 0.0
    %3341 = vmatpush1.msra.mxu0 0.0
    %3342 = vmatprep.subr.mxu0 0.0
    %3343 = vmatpush1.msra.mxu0 0.0
    %3344 = vmatprep.mubr.f32.mxu0 0.0
    %3345 = vmatmul.mubr.f32.gmra.mrb[0].mxu0 %v3257
    %v3346 = vpop.f32.mrb[0].mxu0
    %v3347 = vadd.f32 0.0, %v3346
    %v3348 = vpop.f32.mrb[0].mxu0
    %3349 = vmatprep.mubr.f32.mxu0 0.0
    %3350 = vmatmul.mubr.f32.gmra.mrb[0].mxu0 %v3260
    %v3351 = vpop.f32.mrb[0].mxu0
    %v3352 = vadd.f32 0.0, %v3351
    %v3353 = vpop.f32.mrb[0].mxu0
    %3354 = vmatprep.mubr.f32.mxu0 0.0
    %3355 = vmatmul.mubr.f32.gmra.mrb[0].mxu0 %v3263
    %v3356 = vpop.f32.mrb[0].mxu0
    %v3357 = vadd.f32 0.0, %v3356
    %v3358 = vpop.f32.mrb[0].mxu0
    %3359 = vmatprep.mubr.f32.mxu0 0.0
    %3360 = vmatmul.mubr.f32.gmra.mrb[0].mxu0 %v3266
    %v3361 = vpop.f32.mrb[0].mxu0
    %v3362 = vadd.f32 0.0, %v3361
    %v3363 = vpop.f32.mrb[0].mxu0
    %3364 = vmatprep.mubr.f32.mxu0 0.0
    %3365 = vmatmul.mubr.f32.gmra.mrb[0].mxu0 %v3269
    %v3366 = vpop.f32.mrb[0].mxu0
    %v3367 = vadd.f32 0.0, %v3366
    %v3368 = vpop.f32.mrb[0].mxu0
    %3369 = vmatprep.mubr.f32.mxu0 0.0
    %3370 = vmatmul.mubr.f32.gmra.mrb[0].mxu0 %v3272
    %v3371 = vpop.f32.mrb[0].mxu0
    %v3372 = vadd.f32 0.0, %v3371
    %v3373 = vpop.f32.mrb[0].mxu0
    %3374 = vmatprep.mubr.f32.mxu0 0.0
    %3375 = vmatmul.mubr.f32.gmra.mrb[0].mxu0 %v3275
    %v3376 = vpop.f32.mrb[0].mxu0
    %v3377 = vadd.f32 0.0, %v3376
    %v3378 = vpop.f32.mrb[0].mxu0
    %3379 = vmatprep.mubr.f32.mxu0 0.0
    %3380 = vmatmul.mubr.f32.gmra.mrb[0].mxu0 %v3278
    %v3381 = vpop.f32.mrb[0].mxu0
    %v3382 = vadd.f32 0.0, %v3381
    %v3383 = vpop.f32.mrb[0].mxu0
    %3384 = vdwg.mxu0
    %v3385 = vmul.f32 %v3347, %v1370
    %v3386 = vmul.f32 %v3352, %v1371
    %v3387 = vmul.f32 %v3357, %v1372
    %v3388 = vmul.f32 %v3362, %v1373
    %v3389 = vmul.f32 %v3367, %v1374
    %v3390 = vmul.f32 %v3372, %v1375
    %v3391 = vmul.f32 %v3377, %v1376
    %v3392 = vmul.f32 %v3382, %v1377
    %v3394 = vsel %vm1040, %v1362, 0
    %v3397 = vsel %vm1040, %v1363, 0
    %v3400 = vsel %vm1040, %v1364, 0
    %v3403 = vsel %vm1040, %v1365, 0
    %v3406 = vsel %vm1040, %v1366, 0
    %v3409 = vsel %vm1040, %v1367, 0
    %v3412 = vsel %vm1040, %v1368, 0
    %v3415 = vsel %vm1040, %v1369, 0
    %3417 = vmatprep.subr.mxu0 0.0
    %3418 = vmatpush1.msra.mxu0 %v3385
    %3419 = vmatprep.subr.mxu0 0.0
    %3420 = vmatpush1.msra.mxu0 %v3386
    %3421 = vmatprep.subr.mxu0 0.0
    %3422 = vmatpush1.msra.mxu0 %v3387
    %3423 = vmatprep.subr.mxu0 0.0
    %3424 = vmatpush1.msra.mxu0 %v3388
    %3425 = vmatprep.subr.mxu0 0.0
    %3426 = vmatpush1.msra.mxu0 %v3389
    %3427 = vmatprep.subr.mxu0 0.0
    %3428 = vmatpush1.msra.mxu0 %v3390
    %3429 = vmatprep.subr.mxu0 0.0
    %3430 = vmatpush1.msra.mxu0 %v3391
    %3431 = vmatprep.subr.mxu0 0.0
    %3432 = vmatpush1.msra.mxu0 %v3392
    %3433 = vmatprep.subr.mxu0 0.0
    %3434 = vmatpush1.msra.mxu0 0.0
    %3435 = vmatprep.subr.mxu0 0.0
    %3436 = vmatpush1.msra.mxu0 0.0
    %3437 = vmatprep.subr.mxu0 0.0
    %3438 = vmatpush1.msra.mxu0 0.0
    %3439 = vmatprep.subr.mxu0 0.0
    %3440 = vmatpush1.msra.mxu0 0.0
    %3441 = vmatprep.subr.mxu0 0.0
    %3442 = vmatpush1.msra.mxu0 0.0
    %3443 = vmatprep.subr.mxu0 0.0
    %3444 = vmatpush1.msra.mxu0 0.0
    %3445 = vmatprep.subr.mxu0 0.0
    %3446 = vmatpush1.msra.mxu0 0.0
    %3447 = vmatprep.subr.mxu0 0.0
    %3448 = vmatpush1.msra.mxu0 0.0
    %3449 = vmatprep.subr.mxu0 0.0
    %3450 = vmatpush1.msra.mxu0 0.0
    %3451 = vmatprep.subr.mxu0 0.0
    %3452 = vmatpush1.msra.mxu0 0.0
    %3453 = vmatprep.subr.mxu0 0.0
    %3454 = vmatpush1.msra.mxu0 0.0
    %3455 = vmatprep.subr.mxu0 0.0
    %3456 = vmatpush1.msra.mxu0 0.0
    %3457 = vmatprep.subr.mxu0 0.0
    %3458 = vmatpush1.msra.mxu0 0.0
    %3459 = vmatprep.subr.mxu0 0.0
    %3460 = vmatpush1.msra.mxu0 0.0
    %3461 = vmatprep.subr.mxu0 0.0
    %3462 = vmatpush1.msra.mxu0 0.0
    %3463 = vmatprep.subr.mxu0 0.0
    %3464 = vmatpush1.msra.mxu0 0.0
    %3465 = vmatprep.subr.mxu0 0.0
    %3466 = vmatpush1.msra.mxu0 0.0
    %3467 = vmatprep.subr.mxu0 0.0
    %3468 = vmatpush1.msra.mxu0 0.0
    %3469 = vmatprep.subr.mxu0 0.0
    %3470 = vmatpush1.msra.mxu0 0.0
    %3471 = vmatprep.subr.mxu0 0.0
    %3472 = vmatpush1.msra.mxu0 0.0
    %3473 = vmatprep.subr.mxu0 0.0
    %3474 = vmatpush1.msra.mxu0 0.0
    %3475 = vmatprep.subr.mxu0 0.0
    %3476 = vmatpush1.msra.mxu0 0.0
    %3477 = vmatprep.subr.mxu0 0.0
    %3478 = vmatpush1.msra.mxu0 0.0
    %3479 = vmatprep.subr.mxu0 0.0
    %3480 = vmatpush1.msra.mxu0 0.0
    %3481 = vmatprep.mubr.f32.mxu0 0.0
    %3482 = vmatmul.mubr.f32.gmra.mrb[0].mxu0 %v3394
    %v3483 = vpop.f32.mrb[0].mxu0
    %v3484 = vadd.f32 0.0, %v3483
    %v3485 = vpop.f32.mrb[0].mxu0
    %3486 = vmatprep.mubr.f32.mxu0 0.0
    %3487 = vmatmul.mubr.f32.gmra.mrb[0].mxu0 %v3397
    %v3488 = vpop.f32.mrb[0].mxu0
    %v3489 = vadd.f32 0.0, %v3488
    %v3490 = vpop.f32.mrb[0].mxu0
    %3491 = vmatprep.mubr.f32.mxu0 0.0
    %3492 = vmatmul.mubr.f32.gmra.mrb[0].mxu0 %v3400
    %v3493 = vpop.f32.mrb[0].mxu0
    %v3494 = vadd.f32 0.0, %v3493
    %v3495 = vpop.f32.mrb[0].mxu0
    %3496 = vmatprep.mubr.f32.mxu0 0.0
    %3497 = vmatmul.mubr.f32.gmra.mrb[0].mxu0 %v3403
    %v3498 = vpop.f32.mrb[0].mxu0
    %v3499 = vadd.f32 0.0, %v3498
    %v3500 = vpop.f32.mrb[0].mxu0
    %3501 = vmatprep.mubr.f32.mxu0 0.0
    %3502 = vmatmul.mubr.f32.gmra.mrb[0].mxu0 %v3406
    %v3503 = vpop.f32.mrb[0].mxu0
    %v3504 = vadd.f32 0.0, %v3503
    %v3505 = vpop.f32.mrb[0].mxu0
    %3506 = vmatprep.mubr.f32.mxu0 0.0
    %3507 = vmatmul.mubr.f32.gmra.mrb[0].mxu0 %v3409
    %v3508 = vpop.f32.mrb[0].mxu0
    %v3509 = vadd.f32 0.0, %v3508
    %v3510 = vpop.f32.mrb[0].mxu0
    %3511 = vmatprep.mubr.f32.mxu0 0.0
    %3512 = vmatmul.mubr.f32.gmra.mrb[0].mxu0 %v3412
    %v3513 = vpop.f32.mrb[0].mxu0
    %v3514 = vadd.f32 0.0, %v3513
    %v3515 = vpop.f32.mrb[0].mxu0
    %3516 = vmatprep.mubr.f32.mxu0 0.0
    %3517 = vmatmul.mubr.f32.gmra.mrb[0].mxu0 %v3415
    %v3518 = vpop.f32.mrb[0].mxu0
    %v3519 = vadd.f32 0.0, %v3518
    %v3520 = vpop.f32.mrb[0].mxu0
    %3521 = vdwg.mxu0
    %v3522 = vld [vmem:[%s13] sm:$0xff]
    %v3523 = vld [vmem:[%s13 + $0x8] sm:$0xff]
    %v3524 = vld [vmem:[%s13 + $0x10] sm:$0xff]
    %v3525 = vld [vmem:[%s13 + $0x18] sm:$0xff]
    %v3526 = vld [vmem:[#allocation12] sm:$0x1]
    %v3528 = vlaneseq
    %v3529 = vshrl.u32 %v3528, 7
    %v3530 = vsub.s32 0, %v3529
    %v3531 = vrot.slane %v3526, %v3530
    %v3534 = vsel %vm199, %v2422, 0
    %v3537 = vsel %vm199, %v2427, 0
    %v3540 = vsel %vm199, %v2432, 0
    %v3543 = vsel %vm199, %v2437, 0
    %v3546 = vsel %vm199, %v2442, 0
    %v3549 = vsel %vm199, %v2447, 0
    %v3552 = vsel %vm199, %v2452, 0
    %v3555 = vsel %vm199, %v2457, 0
    %v3558 = vsel %vm199, %v3484, 0
    %v3561 = vsel %vm199, %v3489, 0
    %v3564 = vsel %vm199, %v3494, 0
    %v3567 = vsel %vm199, %v3499, 0
    %v3570 = vsel %vm199, %v3504, 0
    %v3573 = vsel %vm199, %v3509, 0
    %v3576 = vsel %vm199, %v3514, 0
    %v3579 = vsel %vm199, %v3519, 0
    %3581 = vmatprep.subr.mxu0 0.0
    %3582 = vmatpush1.msra.mxu0 %v3522
    %3583 = vmatprep.subr.mxu0 0.0
    %3584 = vmatpush1.msra.mxu0 %v3523
    %3585 = vmatprep.subr.mxu0 0.0
    %3586 = vmatpush1.msra.mxu0 %v3524
    %3587 = vmatprep.subr.mxu0 0.0
    %3588 = vmatpush1.msra.mxu0 %v3525
    %3589 = vmatprep.subr.mxu0 0.0
    %3590 = vmatpush1.msra.mxu0 0.0
    %3591 = vmatprep.subr.mxu0 0.0
    %3592 = vmatpush1.msra.mxu0 0.0
    %3593 = vmatprep.subr.mxu0 0.0
    %3594 = vmatpush1.msra.mxu0 0.0
    %3595 = vmatprep.subr.mxu0 0.0
    %3596 = vmatpush1.msra.mxu0 0.0
    %3597 = vmatprep.subr.mxu0 0.0
    %3598 = vmatpush1.msra.mxu0 0.0
    %3599 = vmatprep.subr.mxu0 0.0
    %3600 = vmatpush1.msra.mxu0 0.0
    %3601 = vmatprep.subr.mxu0 0.0
    %3602 = vmatpush1.msra.mxu0 0.0
    %3603 = vmatprep.subr.mxu0 0.0
    %3604 = vmatpush1.msra.mxu0 0.0
    %3605 = vmatprep.subr.mxu0 0.0
    %3606 = vmatpush1.msra.mxu0 0.0
    %3607 = vmatprep.subr.mxu0 0.0
    %3608 = vmatpush1.msra.mxu0 0.0
    %3609 = vmatprep.subr.mxu0 0.0
    %3610 = vmatpush1.msra.mxu0 0.0
    %3611 = vmatprep.subr.mxu0 0.0
    %3612 = vmatpush1.msra.mxu0 0.0
    %3613 = vmatprep.subr.mxu0 0.0
    %3614 = vmatpush1.msra.mxu0 0.0
    %3615 = vmatprep.subr.mxu0 0.0
    %3616 = vmatpush1.msra.mxu0 0.0
    %3617 = vmatprep.subr.mxu0 0.0
    %3618 = vmatpush1.msra.mxu0 0.0
    %3619 = vmatprep.subr.mxu0 0.0
    %3620 = vmatpush1.msra.mxu0 0.0
    %3621 = vmatprep.subr.mxu0 0.0
    %3622 = vmatpush1.msra.mxu0 0.0
    %3623 = vmatprep.subr.mxu0 0.0
    %3624 = vmatpush1.msra.mxu0 0.0
    %3625 = vmatprep.subr.mxu0 0.0
    %3626 = vmatpush1.msra.mxu0 0.0
    %3627 = vmatprep.subr.mxu0 0.0
    %3628 = vmatpush1.msra.mxu0 0.0
    %3629 = vmatprep.subr.mxu0 0.0
    %3630 = vmatpush1.msra.mxu0 0.0
    %3631 = vmatprep.subr.mxu0 0.0
    %3632 = vmatpush1.msra.mxu0 0.0
    %3633 = vmatprep.subr.mxu0 0.0
    %3634 = vmatpush1.msra.mxu0 0.0
    %3635 = vmatprep.subr.mxu0 0.0
    %3636 = vmatpush1.msra.mxu0 0.0
    %3637 = vmatprep.subr.mxu0 0.0
    %3638 = vmatpush1.msra.mxu0 0.0
    %3639 = vmatprep.subr.mxu0 0.0
    %3640 = vmatpush1.msra.mxu0 0.0
    %3641 = vmatprep.subr.mxu0 0.0
    %3642 = vmatpush1.msra.mxu0 0.0
    %3643 = vmatprep.subr.mxu0 0.0
    %3644 = vmatpush1.msra.mxu0 0.0
    %3645 = vmatprep.mubr.f32.mxu0 0.0
    %3646 = vmatmul.mubr.f32.gmra.mrb[0].mxu0 %v3534
    %v3647 = vpop.f32.mrb[0].mxu0
    %v3648 = vadd.f32 %v3531, %v3647
    %v3649 = vpop.f32.mrb[0].mxu0
    %3650 = vmatprep.mubr.f32.mxu0 0.0
    %3651 = vmatmul.mubr.f32.gmra.mrb[0].mxu0 %v3537
    %v3652 = vpop.f32.mrb[0].mxu0
    %v3653 = vadd.f32 %v3531, %v3652
    %v3654 = vpop.f32.mrb[0].mxu0
    %3655 = vmatprep.mubr.f32.mxu0 0.0
    %3656 = vmatmul.mubr.f32.gmra.mrb[0].mxu0 %v3540
    %v3657 = vpop.f32.mrb[0].mxu0
    %v3658 = vadd.f32 %v3531, %v3657
    %v3659 = vpop.f32.mrb[0].mxu0
    %3660 = vmatprep.mubr.f32.mxu0 0.0
    %3661 = vmatmul.mubr.f32.gmra.mrb[0].mxu0 %v3543
    %v3662 = vpop.f32.mrb[0].mxu0
    %v3663 = vadd.f32 %v3531, %v3662
    %v3664 = vpop.f32.mrb[0].mxu0
    %3665 = vmatprep.mubr.f32.mxu0 0.0
    %3666 = vmatmul.mubr.f32.gmra.mrb[0].mxu0 %v3546
    %v3667 = vpop.f32.mrb[0].mxu0
    %v3668 = vadd.f32 %v3531, %v3667
    %v3669 = vpop.f32.mrb[0].mxu0
    %3670 = vmatprep.mubr.f32.mxu0 0.0
    %3671 = vmatmul.mubr.f32.gmra.mrb[0].mxu0 %v3549
    %v3672 = vpop.f32.mrb[0].mxu0
    %v3673 = vadd.f32 %v3531, %v3672
    %v3674 = vpop.f32.mrb[0].mxu0
    %3675 = vmatprep.mubr.f32.mxu0 0.0
    %3676 = vmatmul.mubr.f32.gmra.mrb[0].mxu0 %v3552
    %v3677 = vpop.f32.mrb[0].mxu0
    %v3678 = vadd.f32 %v3531, %v3677
    %v3679 = vpop.f32.mrb[0].mxu0
    %3680 = vmatprep.mubr.f32.mxu0 0.0
    %3681 = vmatmul.mubr.f32.gmra.mrb[0].mxu0 %v3555
    %v3682 = vpop.f32.mrb[0].mxu0
    %v3683 = vadd.f32 %v3531, %v3682
    %v3684 = vpop.f32.mrb[0].mxu0
    %3685 = vmatprep.mubr.f32.mxu0 0.0
    %3686 = vmatmul.mubr.f32.gmra.mrb[0].mxu0 %v3558
    %v3687 = vpop.f32.mrb[0].mxu0
    %v3688 = vadd.f32 %v3531, %v3687
    %v3689 = vpop.f32.mrb[0].mxu0
    %3690 = vmatprep.mubr.f32.mxu0 0.0
    %3691 = vmatmul.mubr.f32.gmra.mrb[0].mxu0 %v3561
    %v3692 = vpop.f32.mrb[0].mxu0
    %v3693 = vadd.f32 %v3531, %v3692
    %v3694 = vpop.f32.mrb[0].mxu0
    %3695 = vmatprep.mubr.f32.mxu0 0.0
    %3696 = vmatmul.mubr.f32.gmra.mrb[0].mxu0 %v3564
    %v3697 = vpop.f32.mrb[0].mxu0
    %v3698 = vadd.f32 %v3531, %v3697
    %v3699 = vpop.f32.mrb[0].mxu0
    %3700 = vmatprep.mubr.f32.mxu0 0.0
    %3701 = vmatmul.mubr.f32.gmra.mrb[0].mxu0 %v3567
    %v3702 = vpop.f32.mrb[0].mxu0
    %v3703 = vadd.f32 %v3531, %v3702
    %v3704 = vpop.f32.mrb[0].mxu0
    %3705 = vmatprep.mubr.f32.mxu0 0.0
    %3706 = vmatmul.mubr.f32.gmra.mrb[0].mxu0 %v3570
    %v3707 = vpop.f32.mrb[0].mxu0
    %v3708 = vadd.f32 %v3531, %v3707
    %v3709 = vpop.f32.mrb[0].mxu0
    %3710 = vmatprep.mubr.f32.mxu0 0.0
    %3711 = vmatmul.mubr.f32.gmra.mrb[0].mxu0 %v3573
    %v3712 = vpop.f32.mrb[0].mxu0
    %v3713 = vadd.f32 %v3531, %v3712
    %v3714 = vpop.f32.mrb[0].mxu0
    %3715 = vmatprep.mubr.f32.mxu0 0.0
    %3716 = vmatmul.mubr.f32.gmra.mrb[0].mxu0 %v3576
    %v3717 = vpop.f32.mrb[0].mxu0
    %v3718 = vadd.f32 %v3531, %v3717
    %v3719 = vpop.f32.mrb[0].mxu0
    %3720 = vmatprep.mubr.f32.mxu0 0.0
    %3721 = vmatmul.mubr.f32.gmra.mrb[0].mxu0 %v3579
    %v3722 = vpop.f32.mrb[0].mxu0
    %v3723 = vadd.f32 %v3531, %v3722
    %v3724 = vpop.f32.mrb[0].mxu0
    %3725 = vdwg.mxu0
    %v3726 = vadd.f32 %v181, %v3648
    %v3727 = vadd.f32 %v182, %v3653
    %v3728 = vadd.f32 %v183, %v3658
    %v3729 = vadd.f32 %v184, %v3663
    %v3730 = vadd.f32 %v185, %v3668
    %v3731 = vadd.f32 %v186, %v3673
    %v3732 = vadd.f32 %v187, %v3678
    %v3733 = vadd.f32 %v188, %v3683
    %v3734 = vadd.f32 %v189, %v3688
    %v3735 = vadd.f32 %v190, %v3693
    %v3736 = vadd.f32 %v191, %v3698
    %v3737 = vadd.f32 %v192, %v3703
    %v3738 = vadd.f32 %v193, %v3708
    %v3739 = vadd.f32 %v194, %v3713
    %v3740 = vadd.f32 %v195, %v3718
    %v3741 = vadd.f32 %v196, %v3723
    %v3742 = vld [vmem:[#allocation13] sm:$0x1]
    %v3743 = vld [vmem:[#allocation15] sm:$0x1]
    %v3744 = vsel %vm199, %v3726, 0.0
    %3745 = vadd.xlane.f32.xlu0 %v3744
    %v3746 = vpop.xlane.xlu0 %3745
    %v3747 = vsel %vm199, %v3727, 0.0
    %3748 = vadd.xlane.f32.xlu0 %v3747
    %v3749 = vpop.xlane.xlu0 %3748
    %v3750 = vsel %vm199, %v3728, 0.0
    %3751 = vadd.xlane.f32.xlu0 %v3750
    %v3752 = vpop.xlane.xlu0 %3751
    %v3753 = vsel %vm199, %v3729, 0.0
    %3754 = vadd.xlane.f32.xlu0 %v3753
    %v3755 = vpop.xlane.xlu0 %3754
    %v3756 = vsel %vm199, %v3730, 0.0
    %3757 = vadd.xlane.f32.xlu0 %v3756
    %v3758 = vpop.xlane.xlu0 %3757
    %v3759 = vsel %vm199, %v3731, 0.0
    %3760 = vadd.xlane.f32.xlu0 %v3759
    %v3761 = vpop.xlane.xlu0 %3760
    %v3762 = vsel %vm199, %v3732, 0.0
    %3763 = vadd.xlane.f32.xlu0 %v3762
    %v3764 = vpop.xlane.xlu0 %3763
    %v3765 = vsel %vm199, %v3733, 0.0
    %3766 = vadd.xlane.f32.xlu0 %v3765
    %v3767 = vpop.xlane.xlu0 %3766
    %v3768 = vsel %vm199, %v3734, 0.0
    %3769 = vadd.xlane.f32.xlu0 %v3768
    %v3770 = vpop.xlane.xlu0 %3769
    %v3771 = vsel %vm199, %v3735, 0.0
    %3772 = vadd.xlane.f32.xlu0 %v3771
    %v3773 = vpop.xlane.xlu0 %3772
    %v3774 = vsel %vm199, %v3736, 0.0
    %3775 = vadd.xlane.f32.xlu0 %v3774
    %v3776 = vpop.xlane.xlu0 %3775
    %v3777 = vsel %vm199, %v3737, 0.0
    %3778 = vadd.xlane.f32.xlu0 %v3777
    %v3779 = vpop.xlane.xlu0 %3778
    %v3780 = vsel %vm199, %v3738, 0.0
    %3781 = vadd.xlane.f32.xlu0 %v3780
    %v3782 = vpop.xlane.xlu0 %3781
    %v3783 = vsel %vm199, %v3739, 0.0
    %3784 = vadd.xlane.f32.xlu0 %v3783
    %v3785 = vpop.xlane.xlu0 %3784
    %v3786 = vsel %vm199, %v3740, 0.0
    %3787 = vadd.xlane.f32.xlu0 %v3786
    %v3788 = vpop.xlane.xlu0 %3787
    %v3789 = vsel %vm199, %v3741, 0.0
    %3790 = vadd.xlane.f32.xlu0 %v3789
    %v3791 = vpop.xlane.xlu0 %3790
    %v3792 = vmul.f32 %v3746, %v248
    %v3793 = vmul.f32 %v3749, %v248
    %v3794 = vmul.f32 %v3752, %v248
    %v3795 = vmul.f32 %v3755, %v248
    %v3796 = vmul.f32 %v3758, %v248
    %v3797 = vmul.f32 %v3761, %v248
    %v3798 = vmul.f32 %v3764, %v248
    %v3799 = vmul.f32 %v3767, %v248
    %v3800 = vmul.f32 %v3770, %v248
    %v3801 = vmul.f32 %v3773, %v248
    %v3802 = vmul.f32 %v3776, %v248
    %v3803 = vmul.f32 %v3779, %v248
    %v3804 = vmul.f32 %v3782, %v248
    %v3805 = vmul.f32 %v3785, %v248
    %v3806 = vmul.f32 %v3788, %v248
    %v3807 = vmul.f32 %v3791, %v248
    %v3808 = vsub.f32 %v3726, %v3792
    %v3809 = vsub.f32 %v3727, %v3793
    %v3810 = vsub.f32 %v3728, %v3794
    %v3811 = vsub.f32 %v3729, %v3795
    %v3812 = vsub.f32 %v3730, %v3796
    %v3813 = vsub.f32 %v3731, %v3797
    %v3814 = vsub.f32 %v3732, %v3798
    %v3815 = vsub.f32 %v3733, %v3799
    %v3816 = vsub.f32 %v3734, %v3800
    %v3817 = vsub.f32 %v3735, %v3801
    %v3818 = vsub.f32 %v3736, %v3802
    %v3819 = vsub.f32 %v3737, %v3803
    %v3820 = vsub.f32 %v3738, %v3804
    %v3821 = vsub.f32 %v3739, %v3805
    %v3822 = vsub.f32 %v3740, %v3806
    %v3823 = vsub.f32 %v3741, %v3807
    %v3824 = vmul.f32 %v3808, %v3808
    %v3825 = vmul.f32 %v3809, %v3809
    %v3826 = vmul.f32 %v3810, %v3810
    %v3827 = vmul.f32 %v3811, %v3811
    %v3828 = vmul.f32 %v3812, %v3812
    %v3829 = vmul.f32 %v3813, %v3813
    %v3830 = vmul.f32 %v3814, %v3814
    %v3831 = vmul.f32 %v3815, %v3815
    %v3832 = vmul.f32 %v3816, %v3816
    %v3833 = vmul.f32 %v3817, %v3817
    %v3834 = vmul.f32 %v3818, %v3818
    %v3835 = vmul.f32 %v3819, %v3819
    %v3836 = vmul.f32 %v3820, %v3820
    %v3837 = vmul.f32 %v3821, %v3821
    %v3838 = vmul.f32 %v3822, %v3822
    %v3839 = vmul.f32 %v3823, %v3823
    %v3840 = vsel %vm199, %v3824, 0.0
    %3841 = vadd.xlane.f32.xlu0 %v3840
    %v3842 = vpop.xlane.xlu0 %3841
    %v3843 = vsel %vm199, %v3825, 0.0
    %3844 = vadd.xlane.f32.xlu0 %v3843
    %v3845 = vpop.xlane.xlu0 %3844
    %v3846 = vsel %vm199, %v3826, 0.0
    %3847 = vadd.xlane.f32.xlu0 %v3846
    %v3848 = vpop.xlane.xlu0 %3847
    %v3849 = vsel %vm199, %v3827, 0.0
    %3850 = vadd.xlane.f32.xlu0 %v3849
    %v3851 = vpop.xlane.xlu0 %3850
    %v3852 = vsel %vm199, %v3828, 0.0
    %3853 = vadd.xlane.f32.xlu0 %v3852
    %v3854 = vpop.xlane.xlu0 %3853
    %v3855 = vsel %vm199, %v3829, 0.0
    %3856 = vadd.xlane.f32.xlu0 %v3855
    %v3857 = vpop.xlane.xlu0 %3856
    %v3858 = vsel %vm199, %v3830, 0.0
    %3859 = vadd.xlane.f32.xlu0 %v3858
    %v3860 = vpop.xlane.xlu0 %3859
    %v3861 = vsel %vm199, %v3831, 0.0
    %3862 = vadd.xlane.f32.xlu0 %v3861
    %v3863 = vpop.xlane.xlu0 %3862
    %v3864 = vsel %vm199, %v3832, 0.0
    %3865 = vadd.xlane.f32.xlu0 %v3864
    %v3866 = vpop.xlane.xlu0 %3865
    %v3867 = vsel %vm199, %v3833, 0.0
    %3868 = vadd.xlane.f32.xlu0 %v3867
    %v3869 = vpop.xlane.xlu0 %3868
    %v3870 = vsel %vm199, %v3834, 0.0
    %3871 = vadd.xlane.f32.xlu0 %v3870
    %v3872 = vpop.xlane.xlu0 %3871
    %v3873 = vsel %vm199, %v3835, 0.0
    %3874 = vadd.xlane.f32.xlu0 %v3873
    %v3875 = vpop.xlane.xlu0 %3874
    %v3876 = vsel %vm199, %v3836, 0.0
    %3877 = vadd.xlane.f32.xlu0 %v3876
    %v3878 = vpop.xlane.xlu0 %3877
    %v3879 = vsel %vm199, %v3837, 0.0
    %3880 = vadd.xlane.f32.xlu0 %v3879
    %v3881 = vpop.xlane.xlu0 %3880
    %v3882 = vsel %vm199, %v3838, 0.0
    %3883 = vadd.xlane.f32.xlu0 %v3882
    %v3884 = vpop.xlane.xlu0 %3883
    %v3885 = vsel %vm199, %v3839, 0.0
    %3886 = vadd.xlane.f32.xlu0 %v3885
    %v3887 = vpop.xlane.xlu0 %3886
    %v3888 = vmul.f32 %v3842, %v248
    %v3889 = vmul.f32 %v3845, %v248
    %v3890 = vmul.f32 %v3848, %v248
    %v3891 = vmul.f32 %v3851, %v248
    %v3892 = vmul.f32 %v3854, %v248
    %v3893 = vmul.f32 %v3857, %v248
    %v3894 = vmul.f32 %v3860, %v248
    %v3895 = vmul.f32 %v3863, %v248
    %v3896 = vmul.f32 %v3866, %v248
    %v3897 = vmul.f32 %v3869, %v248
    %v3898 = vmul.f32 %v3872, %v248
    %v3899 = vmul.f32 %v3875, %v248
    %v3900 = vmul.f32 %v3878, %v248
    %v3901 = vmul.f32 %v3881, %v248
    %v3902 = vmul.f32 %v3884, %v248
    %v3903 = vmul.f32 %v3887, %v248
    %v3904 = vadd.f32 %v3888, 1e-05
    %v3905 = vadd.f32 %v3889, 1e-05
    %v3906 = vadd.f32 %v3890, 1e-05
    %v3907 = vadd.f32 %v3891, 1e-05
    %v3908 = vadd.f32 %v3892, 1e-05
    %v3909 = vadd.f32 %v3893, 1e-05
    %v3910 = vadd.f32 %v3894, 1e-05
    %v3911 = vadd.f32 %v3895, 1e-05
    %v3912 = vadd.f32 %v3896, 1e-05
    %v3913 = vadd.f32 %v3897, 1e-05
    %v3914 = vadd.f32 %v3898, 1e-05
    %v3915 = vadd.f32 %v3899, 1e-05
    %v3916 = vadd.f32 %v3900, 1e-05
    %v3917 = vadd.f32 %v3901, 1e-05
    %v3918 = vadd.f32 %v3902, 1e-05
    %v3919 = vadd.f32 %v3903, 1e-05
    %v3920 = vrsqrt.pop %v3904
    %v3921 = vrsqrt.pop %v3905
    %v3922 = vrsqrt.pop %v3906
    %v3923 = vrsqrt.pop %v3907
    %v3924 = vrsqrt.pop %v3908
    %v3925 = vrsqrt.pop %v3909
    %v3926 = vrsqrt.pop %v3910
    %v3927 = vrsqrt.pop %v3911
    %v3928 = vrsqrt.pop %v3912
    %v3929 = vrsqrt.pop %v3913
    %v3930 = vrsqrt.pop %v3914
    %v3931 = vrsqrt.pop %v3915
    %v3932 = vrsqrt.pop %v3916
    %v3933 = vrsqrt.pop %v3917
    %v3934 = vrsqrt.pop %v3918
    %v3935 = vrsqrt.pop %v3919
    %v3936 = vmul.f32 %v3808, %v3920
    %v3937 = vmul.f32 %v3809, %v3921
    %v3938 = vmul.f32 %v3810, %v3922
    %v3939 = vmul.f32 %v3811, %v3923
    %v3940 = vmul.f32 %v3812, %v3924
    %v3941 = vmul.f32 %v3813, %v3925
    %v3942 = vmul.f32 %v3814, %v3926
    %v3943 = vmul.f32 %v3815, %v3927
    %v3944 = vmul.f32 %v3816, %v3928
    %v3945 = vmul.f32 %v3817, %v3929
    %v3946 = vmul.f32 %v3818, %v3930
    %v3947 = vmul.f32 %v3819, %v3931
    %v3948 = vmul.f32 %v3820, %v3932
    %v3949 = vmul.f32 %v3821, %v3933
    %v3950 = vmul.f32 %v3822, %v3934
    %v3951 = vmul.f32 %v3823, %v3935
    %v3953 = vlaneseq
    %v3954 = vshrl.u32 %v3953, 7
    %v3955 = vsub.s32 0, %v3954
    %v3956 = vrot.slane %v3742, %v3955
    %v3958 = vmul.f32 %v3936, %v3956
    %v3959 = vmul.f32 %v3937, %v3956
    %v3960 = vmul.f32 %v3938, %v3956
    %v3961 = vmul.f32 %v3939, %v3956
    %v3962 = vmul.f32 %v3940, %v3956
    %v3963 = vmul.f32 %v3941, %v3956
    %v3964 = vmul.f32 %v3942, %v3956
    %v3965 = vmul.f32 %v3943, %v3956
    %v3966 = vmul.f32 %v3944, %v3956
    %v3967 = vmul.f32 %v3945, %v3956
    %v3968 = vmul.f32 %v3946, %v3956
    %v3969 = vmul.f32 %v3947, %v3956
    %v3970 = vmul.f32 %v3948, %v3956
    %v3971 = vmul.f32 %v3949, %v3956
    %v3972 = vmul.f32 %v3950, %v3956
    %v3973 = vmul.f32 %v3951, %v3956
    %v3975 = vlaneseq
    %v3976 = vshrl.u32 %v3975, 7
    %v3977 = vsub.s32 0, %v3976
    %v3978 = vrot.slane %v3743, %v3977
    %v3980 = vadd.f32 %v3958, %v3978
    %v3981 = vadd.f32 %v3959, %v3978
    %v3982 = vadd.f32 %v3960, %v3978
    %v3983 = vadd.f32 %v3961, %v3978
    %v3984 = vadd.f32 %v3962, %v3978
    %v3985 = vadd.f32 %v3963, %v3978
    %v3986 = vadd.f32 %v3964, %v3978
    %v3987 = vadd.f32 %v3965, %v3978
    %v3988 = vadd.f32 %v3966, %v3978
    %v3989 = vadd.f32 %v3967, %v3978
    %v3990 = vadd.f32 %v3968, %v3978
    %v3991 = vadd.f32 %v3969, %v3978
    %v3992 = vadd.f32 %v3970, %v3978
    %v3993 = vadd.f32 %v3971, %v3978
    %v3994 = vadd.f32 %v3972, %v3978
    %v3995 = vadd.f32 %v3973, %v3978
    %v3996 = vld [vmem:[%s17] sm:$0xff]
    %v3997 = vld [vmem:[%s17 + $0x8] sm:$0xff]
    %v3998 = vld [vmem:[%s17 + $0x10] sm:$0xff]
    %v3999 = vld [vmem:[%s17 + $0x18] sm:$0xff]
    %v4000 = vld [vmem:[%s18] sm:$0x1]
    %v4002 = vlaneseq
    %v4003 = vshrl.u32 %v4002, 7
    %v4004 = vsub.s32 0, %v4003
    %v4005 = vrot.slane %v4000, %v4004
    %v4008 = vsel %vm199, %v3980, 0
    %v4011 = vsel %vm199, %v3981, 0
    %v4014 = vsel %vm199, %v3982, 0
    %v4017 = vsel %vm199, %v3983, 0
    %v4020 = vsel %vm199, %v3984, 0
    %v4023 = vsel %vm199, %v3985, 0
    %v4026 = vsel %vm199, %v3986, 0
    %v4029 = vsel %vm199, %v3987, 0
    %v4032 = vsel %vm199, %v3988, 0
    %v4035 = vsel %vm199, %v3989, 0
    %v4038 = vsel %vm199, %v3990, 0
    %v4041 = vsel %vm199, %v3991, 0
    %v4044 = vsel %vm199, %v3992, 0
    %v4047 = vsel %vm199, %v3993, 0
    %v4050 = vsel %vm199, %v3994, 0
    %v4053 = vsel %vm199, %v3995, 0
    %4055 = vmatprep.subr.mxu0 0.0
    %4056 = vmatpush1.msra.mxu0 %v3996
    %4057 = vmatprep.subr.mxu0 0.0
    %4058 = vmatpush1.msra.mxu0 %v3997
    %4059 = vmatprep.subr.mxu0 0.0
    %4060 = vmatpush1.msra.mxu0 %v3998
    %4061 = vmatprep.subr.mxu0 0.0
    %4062 = vmatpush1.msra.mxu0 %v3999
    %4063 = vmatprep.subr.mxu0 0.0
    %4064 = vmatpush1.msra.mxu0 0.0
    %4065 = vmatprep.subr.mxu0 0.0
    %4066 = vmatpush1.msra.mxu0 0.0
    %4067 = vmatprep.subr.mxu0 0.0
    %4068 = vmatpush1.msra.mxu0 0.0
    %4069 = vmatprep.subr.mxu0 0.0
    %4070 = vmatpush1.msra.mxu0 0.0
    %4071 = vmatprep.subr.mxu0 0.0
    %4072 = vmatpush1.msra.mxu0 0.0
    %4073 = vmatprep.subr.mxu0 0.0
    %4074 = vmatpush1.msra.mxu0 0.0
    %4075 = vmatprep.subr.mxu0 0.0
    %4076 = vmatpush1.msra.mxu0 0.0
    %4077 = vmatprep.subr.mxu0 0.0
    %4078 = vmatpush1.msra.mxu0 0.0
    %4079 = vmatprep.subr.mxu0 0.0
    %4080 = vmatpush1.msra.mxu0 0.0
    %4081 = vmatprep.subr.mxu0 0.0
    %4082 = vmatpush1.msra.mxu0 0.0
    %4083 = vmatprep.subr.mxu0 0.0
    %4084 = vmatpush1.msra.mxu0 0.0
    %4085 = vmatprep.subr.mxu0 0.0
    %4086 = vmatpush1.msra.mxu0 0.0
    %4087 = vmatprep.subr.mxu0 0.0
    %4088 = vmatpush1.msra.mxu0 0.0
    %4089 = vmatprep.subr.mxu0 0.0
    %4090 = vmatpush1.msra.mxu0 0.0
    %4091 = vmatprep.subr.mxu0 0.0
    %4092 = vmatpush1.msra.mxu0 0.0
    %4093 = vmatprep.subr.mxu0 0.0
    %4094 = vmatpush1.msra.mxu0 0.0
    %4095 = vmatprep.subr.mxu0 0.0
    %4096 = vmatpush1.msra.mxu0 0.0
    %4097 = vmatprep.subr.mxu0 0.0
    %4098 = vmatpush1.msra.mxu0 0.0
    %4099 = vmatprep.subr.mxu0 0.0
    %4100 = vmatpush1.msra.mxu0 0.0
    %4101 = vmatprep.subr.mxu0 0.0
    %4102 = vmatpush1.msra.mxu0 0.0
    %4103 = vmatprep.subr.mxu0 0.0
    %4104 = vmatpush1.msra.mxu0 0.0
    %4105 = vmatprep.subr.mxu0 0.0
    %4106 = vmatpush1.msra.mxu0 0.0
    %4107 = vmatprep.subr.mxu0 0.0
    %4108 = vmatpush1.msra.mxu0 0.0
    %4109 = vmatprep.subr.mxu0 0.0
    %4110 = vmatpush1.msra.mxu0 0.0
    %4111 = vmatprep.subr.mxu0 0.0
    %4112 = vmatpush1.msra.mxu0 0.0
    %4113 = vmatprep.subr.mxu0 0.0
    %4114 = vmatpush1.msra.mxu0 0.0
    %4115 = vmatprep.subr.mxu0 0.0
    %4116 = vmatpush1.msra.mxu0 0.0
    %4117 = vmatprep.subr.mxu0 0.0
    %4118 = vmatpush1.msra.mxu0 0.0
    %4119 = vmatprep.mubr.f32.mxu0 0.0
    %4120 = vmatmul.mubr.f32.gmra.mrb[0].mxu0 %v4008
    %v4121 = vpop.f32.mrb[0].mxu0
    %v4122 = vadd.f32 %v4005, %v4121
    %v4123 = vpop.f32.mrb[0].mxu0
    %4124 = vmatprep.mubr.f32.mxu0 0.0
    %4125 = vmatmul.mubr.f32.gmra.mrb[0].mxu0 %v4011
    %v4126 = vpop.f32.mrb[0].mxu0
    %v4127 = vadd.f32 %v4005, %v4126
    %v4128 = vpop.f32.mrb[0].mxu0
    %4129 = vmatprep.mubr.f32.mxu0 0.0
    %4130 = vmatmul.mubr.f32.gmra.mrb[0].mxu0 %v4014
    %v4131 = vpop.f32.mrb[0].mxu0
    %v4132 = vadd.f32 %v4005, %v4131
    %v4133 = vpop.f32.mrb[0].mxu0
    %4134 = vmatprep.mubr.f32.mxu0 0.0
    %4135 = vmatmul.mubr.f32.gmra.mrb[0].mxu0 %v4017
    %v4136 = vpop.f32.mrb[0].mxu0
    %v4137 = vadd.f32 %v4005, %v4136
    %v4138 = vpop.f32.mrb[0].mxu0
    %4139 = vmatprep.mubr.f32.mxu0 0.0
    %4140 = vmatmul.mubr.f32.gmra.mrb[0].mxu0 %v4020
    %v4141 = vpop.f32.mrb[0].mxu0
    %v4142 = vadd.f32 %v4005, %v4141
    %v4143 = vpop.f32.mrb[0].mxu0
    %4144 = vmatprep.mubr.f32.mxu0 0.0
    %4145 = vmatmul.mubr.f32.gmra.mrb[0].mxu0 %v4023
    %v4146 = vpop.f32.mrb[0].mxu0
    %v4147 = vadd.f32 %v4005, %v4146
    %v4148 = vpop.f32.mrb[0].mxu0
    %4149 = vmatprep.mubr.f32.mxu0 0.0
    %4150 = vmatmul.mubr.f32.gmra.mrb[0].mxu0 %v4026
    %v4151 = vpop.f32.mrb[0].mxu0
    %v4152 = vadd.f32 %v4005, %v4151
    %v4153 = vpop.f32.mrb[0].mxu0
    %4154 = vmatprep.mubr.f32.mxu0 0.0
    %4155 = vmatmul.mubr.f32.gmra.mrb[0].mxu0 %v4029
    %v4156 = vpop.f32.mrb[0].mxu0
    %v4157 = vadd.f32 %v4005, %v4156
    %v4158 = vpop.f32.mrb[0].mxu0
    %4159 = vmatprep.mubr.f32.mxu0 0.0
    %4160 = vmatmul.mubr.f32.gmra.mrb[0].mxu0 %v4032
    %v4161 = vpop.f32.mrb[0].mxu0
    %v4162 = vadd.f32 %v4005, %v4161
    %v4163 = vpop.f32.mrb[0].mxu0
    %4164 = vmatprep.mubr.f32.mxu0 0.0
    %4165 = vmatmul.mubr.f32.gmra.mrb[0].mxu0 %v4035
    %v4166 = vpop.f32.mrb[0].mxu0
    %v4167 = vadd.f32 %v4005, %v4166
    %v4168 = vpop.f32.mrb[0].mxu0
    %4169 = vmatprep.mubr.f32.mxu0 0.0
    %4170 = vmatmul.mubr.f32.gmra.mrb[0].mxu0 %v4038
    %v4171 = vpop.f32.mrb[0].mxu0
    %v4172 = vadd.f32 %v4005, %v4171
    %v4173 = vpop.f32.mrb[0].mxu0
    %4174 = vmatprep.mubr.f32.mxu0 0.0
    %4175 = vmatmul.mubr.f32.gmra.mrb[0].mxu0 %v4041
    %v4176 = vpop.f32.mrb[0].mxu0
    %v4177 = vadd.f32 %v4005, %v4176
    %v4178 = vpop.f32.mrb[0].mxu0
    %4179 = vmatprep.mubr.f32.mxu0 0.0
    %4180 = vmatmul.mubr.f32.gmra.mrb[0].mxu0 %v4044
    %v4181 = vpop.f32.mrb[0].mxu0
    %v4182 = vadd.f32 %v4005, %v4181
    %v4183 = vpop.f32.mrb[0].mxu0
    %4184 = vmatprep.mubr.f32.mxu0 0.0
    %4185 = vmatmul.mubr.f32.gmra.mrb[0].mxu0 %v4047
    %v4186 = vpop.f32.mrb[0].mxu0
    %v4187 = vadd.f32 %v4005, %v4186
    %v4188 = vpop.f32.mrb[0].mxu0
    %4189 = vmatprep.mubr.f32.mxu0 0.0
    %4190 = vmatmul.mubr.f32.gmra.mrb[0].mxu0 %v4050
    %v4191 = vpop.f32.mrb[0].mxu0
    %v4192 = vadd.f32 %v4005, %v4191
    %v4193 = vpop.f32.mrb[0].mxu0
    %4194 = vmatprep.mubr.f32.mxu0 0.0
    %4195 = vmatmul.mubr.f32.gmra.mrb[0].mxu0 %v4053
    %v4196 = vpop.f32.mrb[0].mxu0
    %v4197 = vadd.f32 %v4005, %v4196
    %v4198 = vpop.f32.mrb[0].mxu0
    %4199 = vdwg.mxu0
    %v4200 = vmul.f32 %v4122, 0.5
    %v4201 = vmul.f32 %v4127, 0.5
    %v4202 = vmul.f32 %v4132, 0.5
    %v4203 = vmul.f32 %v4137, 0.5
    %v4204 = vmul.f32 %v4142, 0.5
    %v4205 = vmul.f32 %v4147, 0.5
    %v4206 = vmul.f32 %v4152, 0.5
    %v4207 = vmul.f32 %v4157, 0.5
    %v4208 = vmul.f32 %v4162, 0.5
    %v4209 = vmul.f32 %v4167, 0.5
    %v4210 = vmul.f32 %v4172, 0.5
    %v4211 = vmul.f32 %v4177, 0.5
    %v4212 = vmul.f32 %v4182, 0.5
    %v4213 = vmul.f32 %v4187, 0.5
    %v4214 = vmul.f32 %v4192, 0.5
    %v4215 = vmul.f32 %v4197, 0.5
    %v4216 = vmul.f32 %v4122, 0.044715
    %v4217 = vmul.f32 %v4127, 0.044715
    %v4218 = vmul.f32 %v4132, 0.044715
    %v4219 = vmul.f32 %v4137, 0.044715
    %v4220 = vmul.f32 %v4142, 0.044715
    %v4221 = vmul.f32 %v4147, 0.044715
    %v4222 = vmul.f32 %v4152, 0.044715
    %v4223 = vmul.f32 %v4157, 0.044715
    %v4224 = vmul.f32 %v4162, 0.044715
    %v4225 = vmul.f32 %v4167, 0.044715
    %v4226 = vmul.f32 %v4172, 0.044715
    %v4227 = vmul.f32 %v4177, 0.044715
    %v4228 = vmul.f32 %v4182, 0.044715
    %v4229 = vmul.f32 %v4187, 0.044715
    %v4230 = vmul.f32 %v4192, 0.044715
    %v4231 = vmul.f32 %v4197, 0.044715
    %v4232 = vmul.f32 %v4216, %v4122
    %v4233 = vmul.f32 %v4217, %v4127
    %v4234 = vmul.f32 %v4218, %v4132
    %v4235 = vmul.f32 %v4219, %v4137
    %v4236 = vmul.f32 %v4220, %v4142
    %v4237 = vmul.f32 %v4221, %v4147
    %v4238 = vmul.f32 %v4222, %v4152
    %v4239 = vmul.f32 %v4223, %v4157
    %v4240 = vmul.f32 %v4224, %v4162
    %v4241 = vmul.f32 %v4225, %v4167
    %v4242 = vmul.f32 %v4226, %v4172
    %v4243 = vmul.f32 %v4227, %v4177
    %v4244 = vmul.f32 %v4228, %v4182
    %v4245 = vmul.f32 %v4229, %v4187
    %v4246 = vmul.f32 %v4230, %v4192
    %v4247 = vmul.f32 %v4231, %v4197
    %v4248 = vmul.f32 %v4232, %v4122
    %v4249 = vmul.f32 %v4233, %v4127
    %v4250 = vmul.f32 %v4234, %v4132
    %v4251 = vmul.f32 %v4235, %v4137
    %v4252 = vmul.f32 %v4236, %v4142
    %v4253 = vmul.f32 %v4237, %v4147
    %v4254 = vmul.f32 %v4238, %v4152
    %v4255 = vmul.f32 %v4239, %v4157
    %v4256 = vmul.f32 %v4240, %v4162
    %v4257 = vmul.f32 %v4241, %v4167
    %v4258 = vmul.f32 %v4242, %v4172
    %v4259 = vmul.f32 %v4243, %v4177
    %v4260 = vmul.f32 %v4244, %v4182
    %v4261 = vmul.f32 %v4245, %v4187
    %v4262 = vmul.f32 %v4246, %v4192
    %v4263 = vmul.f32 %v4247, %v4197
    %v4264 = vadd.f32 %v4122, %v4248
    %v4265 = vadd.f32 %v4127, %v4249
    %v4266 = vadd.f32 %v4132, %v4250
    %v4267 = vadd.f32 %v4137, %v4251
    %v4268 = vadd.f32 %v4142, %v4252
    %v4269 = vadd.f32 %v4147, %v4253
    %v4270 = vadd.f32 %v4152, %v4254
    %v4271 = vadd.f32 %v4157, %v4255
    %v4272 = vadd.f32 %v4162, %v4256
    %v4273 = vadd.f32 %v4167, %v4257
    %v4274 = vadd.f32 %v4172, %v4258
    %v4275 = vadd.f32 %v4177, %v4259
    %v4276 = vadd.f32 %v4182, %v4260
    %v4277 = vadd.f32 %v4187, %v4261
    %v4278 = vadd.f32 %v4192, %v4262
    %v4279 = vadd.f32 %v4197, %v4263
    %v4280 = vmul.f32 %v4264, 0.7978846
    %v4281 = vmul.f32 %v4265, 0.7978846
    %v4282 = vmul.f32 %v4266, 0.7978846
    %v4283 = vmul.f32 %v4267, 0.7978846
    %v4284 = vmul.f32 %v4268, 0.7978846
    %v4285 = vmul.f32 %v4269, 0.7978846
    %v4286 = vmul.f32 %v4270, 0.7978846
    %v4287 = vmul.f32 %v4271, 0.7978846
    %v4288 = vmul.f32 %v4272, 0.7978846
    %v4289 = vmul.f32 %v4273, 0.7978846
    %v4290 = vmul.f32 %v4274, 0.7978846
    %v4291 = vmul.f32 %v4275, 0.7978846
    %v4292 = vmul.f32 %v4276, 0.7978846
    %v4293 = vmul.f32 %v4277, 0.7978846
    %v4294 = vmul.f32 %v4278, 0.7978846
    %v4295 = vmul.f32 %v4279, 0.7978846
    %v4296 = vtanh.pop %v4280
    %v4297 = vtanh.pop %v4281
    %v4298 = vtanh.pop %v4282
    %v4299 = vtanh.pop %v4283
    %v4300 = vtanh.pop %v4284
    %v4301 = vtanh.pop %v4285
    %v4302 = vtanh.pop %v4286
    %v4303 = vtanh.pop %v4287
    %v4304 = vtanh.pop %v4288
    %v4305 = vtanh.pop %v4289
    %v4306 = vtanh.pop %v4290
    %v4307 = vtanh.pop %v4291
    %v4308 = vtanh.pop %v4292
    %v4309 = vtanh.pop %v4293
    %v4310 = vtanh.pop %v4294
    %v4311 = vtanh.pop %v4295
    %v4312 = vadd.f32 %v4296, 1.0
    %v4313 = vadd.f32 %v4297, 1.0
    %v4314 = vadd.f32 %v4298, 1.0
    %v4315 = vadd.f32 %v4299, 1.0
    %v4316 = vadd.f32 %v4300, 1.0
    %v4317 = vadd.f32 %v4301, 1.0
    %v4318 = vadd.f32 %v4302, 1.0
    %v4319 = vadd.f32 %v4303, 1.0
    %v4320 = vadd.f32 %v4304, 1.0
    %v4321 = vadd.f32 %v4305, 1.0
    %v4322 = vadd.f32 %v4306, 1.0
    %v4323 = vadd.f32 %v4307, 1.0
    %v4324 = vadd.f32 %v4308, 1.0
    %v4325 = vadd.f32 %v4309, 1.0
    %v4326 = vadd.f32 %v4310, 1.0
    %v4327 = vadd.f32 %v4311, 1.0
    %v4328 = vmul.f32 %v4200, %v4312
    %v4329 = vmul.f32 %v4201, %v4313
    %v4330 = vmul.f32 %v4202, %v4314
    %v4331 = vmul.f32 %v4203, %v4315
    %v4332 = vmul.f32 %v4204, %v4316
    %v4333 = vmul.f32 %v4205, %v4317
    %v4334 = vmul.f32 %v4206, %v4318
    %v4335 = vmul.f32 %v4207, %v4319
    %v4336 = vmul.f32 %v4208, %v4320
    %v4337 = vmul.f32 %v4209, %v4321
    %v4338 = vmul.f32 %v4210, %v4322
    %v4339 = vmul.f32 %v4211, %v4323
    %v4340 = vmul.f32 %v4212, %v4324
    %v4341 = vmul.f32 %v4213, %v4325
    %v4342 = vmul.f32 %v4214, %v4326
    %v4343 = vmul.f32 %v4215, %v4327
    %v4344 = vld [vmem:[%s19] sm:$0xff]
    %v4345 = vld [vmem:[%s19 + $0x8] sm:$0xff]
    %v4346 = vld [vmem:[%s19 + $0x10] sm:$0xff]
    %v4347 = vld [vmem:[%s19 + $0x18] sm:$0xff]
    %v4348 = vld [vmem:[%s19 + $0x20] sm:$0xff]
    %v4349 = vld [vmem:[%s19 + $0x28] sm:$0xff]
    %v4350 = vld [vmem:[%s19 + $0x30] sm:$0xff]
    %v4351 = vld [vmem:[%s19 + $0x38] sm:$0xff]
    %v4352 = vld [vmem:[%s19 + $0x40] sm:$0xff]
    %v4353 = vld [vmem:[%s19 + $0x48] sm:$0xff]
    %v4354 = vld [vmem:[%s19 + $0x50] sm:$0xff]
    %v4355 = vld [vmem:[%s19 + $0x58] sm:$0xff]
    %v4356 = vld [vmem:[%s19 + $0x60] sm:$0xff]
    %v4357 = vld [vmem:[%s19 + $0x68] sm:$0xff]
    %v4358 = vld [vmem:[%s19 + $0x70] sm:$0xff]
    %v4359 = vld [vmem:[%s19 + $0x78] sm:$0xff]
    %v4360 = vld [vmem:[%s20] sm:$0x1]
    %v4362 = vlaneseq
    %v4363 = vshrl.u32 %v4362, 7
    %v4364 = vsub.s32 0, %v4363
    %v4365 = vrot.slane %v4360, %v4364
    %4367 = vmatprep.subr.mxu0 0.0
    %4368 = vmatpush1.msra.mxu0 %v4344
    %4369 = vmatprep.subr.mxu0 0.0
    %4370 = vmatpush1.msra.mxu0 %v4345
    %4371 = vmatprep.subr.mxu0 0.0
    %4372 = vmatpush1.msra.mxu0 %v4346
    %4373 = vmatprep.subr.mxu0 0.0
    %4374 = vmatpush1.msra.mxu0 %v4347
    %4375 = vmatprep.subr.mxu0 0.0
    %4376 = vmatpush1.msra.mxu0 %v4348
    %4377 = vmatprep.subr.mxu0 0.0
    %4378 = vmatpush1.msra.mxu0 %v4349
    %4379 = vmatprep.subr.mxu0 0.0
    %4380 = vmatpush1.msra.mxu0 %v4350
    %4381 = vmatprep.subr.mxu0 0.0
    %4382 = vmatpush1.msra.mxu0 %v4351
    %4383 = vmatprep.subr.mxu0 0.0
    %4384 = vmatpush1.msra.mxu0 %v4352
    %4385 = vmatprep.subr.mxu0 0.0
    %4386 = vmatpush1.msra.mxu0 %v4353
    %4387 = vmatprep.subr.mxu0 0.0
    %4388 = vmatpush1.msra.mxu0 %v4354
    %4389 = vmatprep.subr.mxu0 0.0
    %4390 = vmatpush1.msra.mxu0 %v4355
    %4391 = vmatprep.subr.mxu0 0.0
    %4392 = vmatpush1.msra.mxu0 %v4356
    %4393 = vmatprep.subr.mxu0 0.0
    %4394 = vmatpush1.msra.mxu0 %v4357
    %4395 = vmatprep.subr.mxu0 0.0
    %4396 = vmatpush1.msra.mxu0 %v4358
    %4397 = vmatprep.subr.mxu0 0.0
    %4398 = vmatpush1.msra.mxu0 %v4359
    %4399 = vmatprep.subr.mxu0 0.0
    %4400 = vmatpush1.msra.mxu0 0.0
    %4401 = vmatprep.subr.mxu0 0.0
    %4402 = vmatpush1.msra.mxu0 0.0
    %4403 = vmatprep.subr.mxu0 0.0
    %4404 = vmatpush1.msra.mxu0 0.0
    %4405 = vmatprep.subr.mxu0 0.0
    %4406 = vmatpush1.msra.mxu0 0.0
    %4407 = vmatprep.subr.mxu0 0.0
    %4408 = vmatpush1.msra.mxu0 0.0
    %4409 = vmatprep.subr.mxu0 0.0
    %4410 = vmatpush1.msra.mxu0 0.0
    %4411 = vmatprep.subr.mxu0 0.0
    %4412 = vmatpush1.msra.mxu0 0.0
    %4413 = vmatprep.subr.mxu0 0.0
    %4414 = vmatpush1.msra.mxu0 0.0
    %4415 = vmatprep.subr.mxu0 0.0
    %4416 = vmatpush1.msra.mxu0 0.0
    %4417 = vmatprep.subr.mxu0 0.0
    %4418 = vmatpush1.msra.mxu0 0.0
    %4419 = vmatprep.subr.mxu0 0.0
    %4420 = vmatpush1.msra.mxu0 0.0
    %4421 = vmatprep.subr.mxu0 0.0
    %4422 = vmatpush1.msra.mxu0 0.0
    %4423 = vmatprep.subr.mxu0 0.0
    %4424 = vmatpush1.msra.mxu0 0.0
    %4425 = vmatprep.subr.mxu0 0.0
    %4426 = vmatpush1.msra.mxu0 0.0
    %4427 = vmatprep.subr.mxu0 0.0
    %4428 = vmatpush1.msra.mxu0 0.0
    %4429 = vmatprep.subr.mxu0 0.0
    %4430 = vmatpush1.msra.mxu0 0.0
    %4431 = vmatprep.mubr.f32.mxu0 0.0
    %4432 = vmatmul.mubr.f32.gmra.mrb[0].mxu0 %v4328
    %v4433 = vpop.f32.mrb[0].mxu0
    %v4434 = vadd.f32 %v4365, %v4433
    %v4435 = vpop.f32.mrb[0].mxu0
    %4436 = vmatprep.mubr.f32.mxu0 0.0
    %4437 = vmatmul.mubr.f32.gmra.mrb[0].mxu0 %v4329
    %v4438 = vpop.f32.mrb[0].mxu0
    %v4439 = vadd.f32 %v4365, %v4438
    %v4440 = vpop.f32.mrb[0].mxu0
    %4441 = vmatprep.mubr.f32.mxu0 0.0
    %4442 = vmatmul.mubr.f32.gmra.mrb[0].mxu0 %v4330
    %v4443 = vpop.f32.mrb[0].mxu0
    %v4444 = vadd.f32 %v4365, %v4443
    %v4445 = vpop.f32.mrb[0].mxu0
    %4446 = vmatprep.mubr.f32.mxu0 0.0
    %4447 = vmatmul.mubr.f32.gmra.mrb[0].mxu0 %v4331
    %v4448 = vpop.f32.mrb[0].mxu0
    %v4449 = vadd.f32 %v4365, %v4448
    %v4450 = vpop.f32.mrb[0].mxu0
    %4451 = vmatprep.mubr.f32.mxu0 0.0
    %4452 = vmatmul.mubr.f32.gmra.mrb[0].mxu0 %v4332
    %v4453 = vpop.f32.mrb[0].mxu0
    %v4454 = vadd.f32 %v4365, %v4453
    %v4455 = vpop.f32.mrb[0].mxu0
    %4456 = vmatprep.mubr.f32.mxu0 0.0
    %4457 = vmatmul.mubr.f32.gmra.mrb[0].mxu0 %v4333
    %v4458 = vpop.f32.mrb[0].mxu0
    %v4459 = vadd.f32 %v4365, %v4458
    %v4460 = vpop.f32.mrb[0].mxu0
    %4461 = vmatprep.mubr.f32.mxu0 0.0
    %4462 = vmatmul.mubr.f32.gmra.mrb[0].mxu0 %v4334
    %v4463 = vpop.f32.mrb[0].mxu0
    %v4464 = vadd.f32 %v4365, %v4463
    %v4465 = vpop.f32.mrb[0].mxu0
    %4466 = vmatprep.mubr.f32.mxu0 0.0
    %4467 = vmatmul.mubr.f32.gmra.mrb[0].mxu0 %v4335
    %v4468 = vpop.f32.mrb[0].mxu0
    %v4469 = vadd.f32 %v4365, %v4468
    %v4470 = vpop.f32.mrb[0].mxu0
    %4471 = vmatprep.mubr.f32.mxu0 0.0
    %4472 = vmatmul.mubr.f32.gmra.mrb[0].mxu0 %v4336
    %v4473 = vpop.f32.mrb[0].mxu0
    %v4474 = vadd.f32 %v4365, %v4473
    %v4475 = vpop.f32.mrb[0].mxu0
    %4476 = vmatprep.mubr.f32.mxu0 0.0
    %4477 = vmatmul.mubr.f32.gmra.mrb[0].mxu0 %v4337
    %v4478 = vpop.f32.mrb[0].mxu0
    %v4479 = vadd.f32 %v4365, %v4478
    %v4480 = vpop.f32.mrb[0].mxu0
    %4481 = vmatprep.mubr.f32.mxu0 0.0
    %4482 = vmatmul.mubr.f32.gmra.mrb[0].mxu0 %v4338
    %v4483 = vpop.f32.mrb[0].mxu0
    %v4484 = vadd.f32 %v4365, %v4483
    %v4485 = vpop.f32.mrb[0].mxu0
    %4486 = vmatprep.mubr.f32.mxu0 0.0
    %4487 = vmatmul.mubr.f32.gmra.mrb[0].mxu0 %v4339
    %v4488 = vpop.f32.mrb[0].mxu0
    %v4489 = vadd.f32 %v4365, %v4488
    %v4490 = vpop.f32.mrb[0].mxu0
    %4491 = vmatprep.mubr.f32.mxu0 0.0
    %4492 = vmatmul.mubr.f32.gmra.mrb[0].mxu0 %v4340
    %v4493 = vpop.f32.mrb[0].mxu0
    %v4494 = vadd.f32 %v4365, %v4493
    %v4495 = vpop.f32.mrb[0].mxu0
    %4496 = vmatprep.mubr.f32.mxu0 0.0
    %4497 = vmatmul.mubr.f32.gmra.mrb[0].mxu0 %v4341
    %v4498 = vpop.f32.mrb[0].mxu0
    %v4499 = vadd.f32 %v4365, %v4498
    %v4500 = vpop.f32.mrb[0].mxu0
    %4501 = vmatprep.mubr.f32.mxu0 0.0
    %4502 = vmatmul.mubr.f32.gmra.mrb[0].mxu0 %v4342
    %v4503 = vpop.f32.mrb[0].mxu0
    %v4504 = vadd.f32 %v4365, %v4503
    %v4505 = vpop.f32.mrb[0].mxu0
    %4506 = vmatprep.mubr.f32.mxu0 0.0
    %4507 = vmatmul.mubr.f32.gmra.mrb[0].mxu0 %v4343
    %v4508 = vpop.f32.mrb[0].mxu0
    %v4509 = vadd.f32 %v4365, %v4508
    %v4510 = vpop.f32.mrb[0].mxu0
    %4511 = vdwg.mxu0
    %v4512 = vadd.f32 %v3726, %v4434
    %v4513 = vadd.f32 %v3727, %v4439
    %v4514 = vadd.f32 %v3728, %v4444
    %v4515 = vadd.f32 %v3729, %v4449
    %v4516 = vadd.f32 %v3730, %v4454
    %v4517 = vadd.f32 %v3731, %v4459
    %v4518 = vadd.f32 %v3732, %v4464
    %v4519 = vadd.f32 %v3733, %v4469
    %v4520 = vadd.f32 %v3734, %v4474
    %v4521 = vadd.f32 %v3735, %v4479
    %v4522 = vadd.f32 %v3736, %v4484
    %v4523 = vadd.f32 %v3737, %v4489
    %v4524 = vadd.f32 %v3738, %v4494
    %v4525 = vadd.f32 %v3739, %v4499
    %v4526 = vadd.f32 %v3740, %v4504
    %v4527 = vadd.f32 %v3741, %v4509
    %4528 = vst.msk [vmem:[%s24] sm:$0xff] %vm199, %v4512
    %4529 = vst.msk [vmem:[%s24 + $0x8] sm:$0xff] %vm199, %v4513
    %4530 = vst.msk [vmem:[%s24 + $0x10] sm:$0xff] %vm199, %v4514
    %4531 = vst.msk [vmem:[%s24 + $0x18] sm:$0xff] %vm199, %v4515
    %4532 = vst.msk [vmem:[%s24 + $0x20] sm:$0xff] %vm199, %v4516
    %4533 = vst.msk [vmem:[%s24 + $0x28] sm:$0xff] %vm199, %v4517
    %4534 = vst.msk [vmem:[%s24 + $0x30] sm:$0xff] %vm199, %v4518
    %4535 = vst.msk [vmem:[%s24 + $0x38] sm:$0xff] %vm199, %v4519
    %4536 = vst.msk [vmem:[%s24 + $0x40] sm:$0xff] %vm199, %v4520
    %4537 = vst.msk [vmem:[%s24 + $0x48] sm:$0xff] %vm199, %v4521
    %4538 = vst.msk [vmem:[%s24 + $0x50] sm:$0xff] %vm199, %v4522
    %4539 = vst.msk [vmem:[%s24 + $0x58] sm:$0xff] %vm199, %v4523
    %4540 = vst.msk [vmem:[%s24 + $0x60] sm:$0xff] %vm199, %v4524
    %4541 = vst.msk [vmem:[%s24 + $0x68] sm:$0xff] %vm199, %v4525
    %4542 = vst.msk [vmem:[%s24 + $0x70] sm:$0xff] %vm199, %v4526
    %4543 = vst.msk [vmem:[%s24 + $0x78] sm:$0xff] %vm199, %v4527
    // Predicated region
    $region134: #{tpu_custom_call.1} parent=1 // pred_check
      _
    $region135: #{tpu_custom_call.1} parent=1 // pred_check_branch
      %4545 = sbr.rel (0) target = $region137
    $region136: #{tpu_custom_call.1} parent=1 // pred_region
      _
    $region137: #{tpu_custom_call.1} parent=1 // pred_fallthru
      _
    // Predicated region
    $region138: #{tpu_custom_call.1} parent=1 // pred_check
      _
    $region139: #{tpu_custom_call.1} parent=1 // pred_check_branch
      %4547 = sbr.rel (0) target = $region141
    $region140: #{tpu_custom_call.1} parent=1 // pred_region
      _
    $region141: #{tpu_custom_call.1} parent=1 // pred_fallthru
      _
    %4548 = vsyncpa [#allocation3], 1
    %4549 = vsyncpa [#allocation5], 1
    %4550 = vsyncpa [#allocation8], 1
    %4551 = vsyncpa [#allocation11], 1
    %4552 = vsyncpa [#allocation14], 1

</llo_original>
